<compile_context>
chip_gen: v6e
topology: v6e:2x2x1
jax: 0.10.0
libtpu: 0.0.40
codegen_flags: <defaults>
</compile_context>

<pallas_src>
import jax
import jax.numpy as jnp
from jax.experimental import pallas as pl
from jax.experimental.pallas import tpu as pltpu

HP = 128   # padded hidden width (lane-aligned gate tiles)
OP = 128   # padded FC output width (lane-dense output store)


def _sigmoid(x):
    # sigmoid(x) = 0.5 * (tanh(x/2) + 1): one EUP transcendental per gate.
    return 0.5 * jnp.tanh(0.5 * x) + 0.5


# ------------------------------ Fused kernel -------------------------------- #

def _fused_lstm_fc_kernel(x_ref,
                          w1_ref, u1_ref, b1_ref,
                          w2_ref, u2_ref, b2_ref,
                          w3_ref, u3_ref, b3_ref,
                          fcw_ref, fcb_ref,
                          out_ref,
                          act_ref, gx_ref):
    """Everything resident in VMEM / vregs.

    x_ref  : (T*BP, D)  f32   time-major, row = t*BP + b
    wX_ref : (DinP, 4*HP) bf16  input->gate weights (gate blocks lane-aligned)
    uX_ref : (HP,   4*HP) bf16  recurrent weights
    bX_ref : (1,    4*HP) f32   b_ih + b_hh
    fcw_ref: (HP, OP) bf16,  fcb_ref: (1, OP) f32
    out_ref: (BP, OP) f32
    act_ref: (T*BP, HP)   f32  layer output h_t for all t (reused across layers)
    gx_ref : (T*BP, 4*HP) f32  hoisted input-gate pre-activations (reused)
    """
    rows, hp = act_ref.shape
    bp = out_ref.shape[0]
    T = rows // bp

    def run_layer(x_in_f32, w_ref, u_ref, b_ref, write_act):
        # ---- hoisted input projection: ONE batched bf16 matmul, off the
        #      sequential critical path ----
        gx_ref[...] = (jnp.dot(x_in_f32.astype(jnp.bfloat16), w_ref[...],
                               preferred_element_type=jnp.float32)
                       + b_ref[...])

        u = u_ref[...]                                    # bf16, VMEM-resident

        # ---- recurrence: (BP,HP)@(HP,4HP) bf16 matmul + f32 gate math per step;
        #      h, c live in vregs via the fori_loop carry ----
        def step(t, carry):
            h, c = carry
            row = pl.multiple_of(t * bp, bp)
            gates = (gx_ref[pl.ds(row, bp), :]
                     + jnp.dot(h.astype(jnp.bfloat16), u,
                               preferred_element_type=jnp.float32))
            i_g = _sigmoid(gates[:, 0 * hp:1 * hp])
            f_g = _sigmoid(gates[:, 1 * hp:2 * hp])
            g_g = jnp.tanh(gates[:, 2 * hp:3 * hp])
            o_g = _sigmoid(gates[:, 3 * hp:4 * hp])
            c_new = f_g * c + i_g * g_g
            h_new = o_g * jnp.tanh(c_new)
            if write_act:
                act_ref[pl.ds(row, bp), :] = h_new
            return (h_new, c_new)

        zero = jnp.zeros((bp, hp), jnp.float32)
        h_fin, _ = jax.lax.fori_loop(0, T, step, (zero, zero), unroll=True)
        return h_fin

    run_layer(x_ref[...], w1_ref, u1_ref, b1_ref, True)          # layer 1 (dropout1: identity)
    run_layer(act_ref[...], w2_ref, u2_ref, b2_ref, True)        # layer 2 (dropout2: identity)
    h_last = run_layer(act_ref[...], w3_ref, u3_ref, b3_ref, False)  # layer 3: only final h

    # Fused FC head on the final hidden state (lane-dense (BP, 128) store).
    out_ref[...] = (jnp.dot(h_last.astype(jnp.bfloat16), fcw_ref[...],
                            preferred_element_type=jnp.float32) + fcb_ref[...])


# ------------------------------ Model forward -------------------------------- #

def _round_up(x, m):
    return ((x + m - 1) // m) * m


def lstm_model_forward(x, packed):
    """x: (B, T, D) batch-first float32.  Returns (B, output_size)."""
    B, T, D = x.shape
    BP = max(8, _round_up(B, 8))                       # sublane-aligned batch
    x_p = jnp.zeros((BP, T, D), jnp.float32).at[:B].set(x)
    x_flat = jnp.transpose(x_p, (1, 0, 2)).reshape(T * BP, D)   # row = t*BP + b

    (w1, u1, b1), (w2, u2, b2), (w3, u3, b3) = packed["layers"]
    out_p = pl.pallas_call(
        _fused_lstm_fc_kernel,
        out_shape=jax.ShapeDtypeStruct((BP, OP), jnp.float32),
        scratch_shapes=[
            pltpu.VMEM((T * BP, HP), jnp.float32),       # inter-layer activations
            pltpu.VMEM((T * BP, 4 * HP), jnp.float32),   # hoisted gate pre-activations
        ],
    )(x_flat, w1, u1, b1, w2, u2, b2, w3, u3, b3,
      packed["fc_w"], packed["fc_b"])

    return out_p[:B, :packed["output_size"]]


# ---------------------------- Parameter handling ----------------------------- #

def init_params(key, input_size, hidden_sizes, output_size):
    """Raw PyTorch-layout parameters (W_ih (4H,Din), W_hh (4H,H), b_ih, b_hh)."""
    params = {"lstm": []}
    d_in = input_size
    for h in hidden_sizes:
        key, k1, k2, k3, k4 = jax.random.split(key, 5)
        bound = h ** -0.5
        w_ih = jax.random.uniform(k1, (4 * h, d_in), jnp.float32, -bound, bound)
        w_hh = jax.random.uniform(k2, (4 * h, h), jnp.float32, -bound, bound)
        b_ih = jax.random.uniform(k3, (4 * h,), jnp.float32, -bound, bound)
        b_hh = jax.random.uniform(k4, (4 * h,), jnp.float32, -bound, bound)
        params["lstm"].append((w_ih, w_hh, b_ih, b_hh))
        d_in = h
    key, k1, k2 = jax.random.split(key, 3)
    bound = hidden_sizes[-1] ** -0.5
    params["fc_w"] = jax.random.uniform(
        k1, (output_size, hidden_sizes[-1]), jnp.float32, -bound, bound)
    params["fc_b"] = jax.random.uniform(
        k2, (output_size,), jnp.float32, -bound, bound)
    return params


def _pad_gate_matrix(w, d_in_p):
    """(4H, Din) PyTorch gate-stacked weight -> bf16 (d_in_p, 4*HP), gates at k*HP."""
    four_h, d_in = w.shape
    h = four_h // 4
    out = jnp.zeros((d_in_p, 4 * HP), jnp.float32)
    for k in range(4):
        out = out.at[:d_in, k * HP:k * HP + h].set(w[k * h:(k + 1) * h, :].T)
    return out.astype(jnp.bfloat16)          # zero padding stays exactly zero


def _pad_gate_bias(b):
    h = b.shape[0] // 4
    out = jnp.zeros((1, 4 * HP), jnp.float32)
    for k in range(4):
        out = out.at[0, k * HP:k * HP + h].set(b[k * h:(k + 1) * h])
    return out                               # biases stay f32


def pack_params(raw, input_size, hidden_sizes, output_size):
    """Zero-pad hidden widths to HP=128 (exact: padded units stay 0 forever).

    Matmul operands (W_ih, W_hh, fc_w) stored bf16; biases f32.
    """
    layers = []
    d_in_p = input_size
    for (w_ih, w_hh, b_ih, b_hh) in raw["lstm"]:
        layers.append((_pad_gate_matrix(w_ih, d_in_p),
                       _pad_gate_matrix(w_hh, HP),
                       _pad_gate_bias(b_ih + b_hh)))
        d_in_p = HP
    h_last = hidden_sizes[-1]
    fc_w = (jnp.zeros((HP, OP), jnp.float32)
            .at[:h_last, :output_size].set(raw["fc_w"].T)).astype(jnp.bfloat16)
    fc_b = jnp.zeros((1, OP), jnp.float32).at[0, :output_size].set(raw["fc_b"])
    return {"layers": layers, "fc_w": fc_w, "fc_b": fc_b,
            "output_size": output_size}


# ----------------------------- Pure-JAX reference ---------------------------- #

def _lstm_layer_ref(x_tm, w_ih, w_hh, b):
    H = w_hh.shape[1]

    def step(carry, x_t):
        h, c = carry
        gates = x_t @ w_ih.T + h @ w_hh.T + b
        i = jax.nn.sigmoid(gates[:, :H])
        f = jax.nn.sigmoid(gates[:, H:2 * H])
        g = jnp.tanh(gates[:, 2 * H:3 * H])
        o = jax.nn.sigmoid(gates[:, 3 * H:])
        c = f * c + i * g
        h = o * jnp.tanh(c)
        return (h, c), h

    B = x_tm.shape[1]
    init = (jnp.zeros((B, H), jnp.float32), jnp.zeros((B, H), jnp.float32))
    _, hs = jax.lax.scan(step, init, x_tm)
    return hs


def _model_ref(x, raw):
    x_tm = jnp.transpose(x, (1, 0, 2))
    for (w_ih, w_hh, b_ih, b_hh) in raw["lstm"]:
        x_tm = _lstm_layer_ref(x_tm, w_ih, w_hh, b_ih + b_hh)
    return x_tm[-1] @ raw["fc_w"].T + raw["fc_b"]


# ---------------------------------- main ------------------------------------ #

if __name__ == "__main__":
    key = jax.random.PRNGKey(0)
    B, T, D = 2, 8, 16                      # batch, seq len, input_size
    hidden_sizes = [128, 64, 32]
    output_size = 14

    key, kx, kp = jax.random.split(key, 3)
    x = jax.random.normal(kx, (B, T, D), jnp.float32)
    raw = init_params(kp, D, hidden_sizes, output_size)
    packed = pack_params(raw, D, hidden_sizes, output_size)

    out = jax.block_until_ready(lstm_model_forward(x, packed))
    ref = jax.block_until_ready(_model_ref(x, raw))

    assert out.shape == (B, output_size), out.shape
    # bf16 matmul operands (f32 accumulation) -> loosened tolerance vs f32 reference.
    max_err = float(jnp.max(jnp.abs(out - ref)))
    assert jnp.allclose(out, ref, atol=3e-2, rtol=3e-2), \
        f"mismatch: max abs err {max_err}"

    print("KERNEL_OK")
</pallas_src>

<mosaic_0001>
module attributes {stable_mosaic.version = 11 : i64} {
  func.func @_fused_lstm_fc_kernel(%arg0: memref<64x16xf32, #tpu.memory_space<vmem>>, %arg1: memref<16x512xbf16, #tpu.memory_space<vmem>>, %arg2: memref<128x512xbf16, #tpu.memory_space<vmem>>, %arg3: memref<1x512xf32, #tpu.memory_space<vmem>>, %arg4: memref<128x512xbf16, #tpu.memory_space<vmem>>, %arg5: memref<128x512xbf16, #tpu.memory_space<vmem>>, %arg6: memref<1x512xf32, #tpu.memory_space<vmem>>, %arg7: memref<128x512xbf16, #tpu.memory_space<vmem>>, %arg8: memref<128x512xbf16, #tpu.memory_space<vmem>>, %arg9: memref<1x512xf32, #tpu.memory_space<vmem>>, %arg10: memref<128x128xbf16, #tpu.memory_space<vmem>>, %arg11: memref<1x128xf32, #tpu.memory_space<vmem>>, %arg12: memref<8x128xf32, #tpu.memory_space<vmem>>, %arg13: memref<64x128xf32, #tpu.memory_space<vmem>>, %arg14: memref<64x512xf32, #tpu.memory_space<vmem>>) attributes {dimension_semantics = [], scalar_prefetch = 0 : i64, scratch_operands = 2 : i64, tpu.core_type = #tpu.core_type<tc>} {
    %c0 = arith.constant 0 : index
    %c0_0 = arith.constant 0 : index
    %0 = vector.load %arg0[%c0, %c0_0] : memref<64x16xf32, #tpu.memory_space<vmem>>, vector<64x16xf32>
    %1 = arith.truncf %0 : vector<64x16xf32> to vector<64x16xbf16>
    %c0_1 = arith.constant 0 : index
    %c0_2 = arith.constant 0 : index
    %2 = vector.load %arg1[%c0_1, %c0_2] : memref<16x512xbf16, #tpu.memory_space<vmem>>, vector<16x512xbf16>
    %cst = arith.constant dense<0.000000e+00> : vector<64x512xf32>
    %3 = tpu.matmul %1, %2, %cst {dimension_numbers = #tpu.dot_dimension_numbers<[1], [0], [0], [1], [0, 0, 1, 1], [], []>} : vector<64x16xbf16>, vector<16x512xbf16>, vector<64x512xf32> -> vector<64x512xf32>
    %c0_3 = arith.constant 0 : index
    %c0_4 = arith.constant 0 : index
    %4 = vector.load %arg3[%c0_3, %c0_4] : memref<1x512xf32, #tpu.memory_space<vmem>>, vector<1x512xf32>
    %5 = vector.broadcast %4 : vector<1x512xf32> to vector<64x512xf32>
    %6 = arith.addf %3, %5 : vector<64x512xf32>
    %c0_5 = arith.constant 0 : index
    %c0_6 = arith.constant 0 : index
    %7 = vector.load %arg14[%c0_5, %c0_6] : memref<64x512xf32, #tpu.memory_space<vmem>>, vector<64x512xf32>
    tpu.vector_store %arg14[%c0_5, %c0_6], %6 {strides = array<i32>} : memref<64x512xf32, #tpu.memory_space<vmem>>, vector<64x512xf32>,
    %c0_7 = arith.constant 0 : index
    %c0_8 = arith.constant 0 : index
    %8 = vector.load %arg2[%c0_7, %c0_8] : memref<128x512xbf16, #tpu.memory_space<vmem>>, vector<128x512xbf16>
    %cst_9 = arith.constant 0.000000e+00 : f32
    %9 = vector.broadcast %cst_9 : f32 to vector<8x128xf32>
    %c0_i32 = arith.constant 0 : i32
    %c8_i32 = arith.constant 8 : i32
    %10 = arith.muli %c0_i32, %c8_i32 : i32
    %11 = tpu.assume_multiple %10, 8 : i32
    %12 = arith.index_cast %11 : i32 to index
    %c0_10 = arith.constant 0 : index
    %13 = vector.load %arg14[%12, %c0_10] : memref<64x512xf32, #tpu.memory_space<vmem>>, vector<8x512xf32>
    %14 = arith.truncf %9 : vector<8x128xf32> to vector<8x128xbf16>
    %cst_11 = arith.constant dense<0.000000e+00> : vector<8x512xf32>
    %15 = tpu.matmul %14, %8, %cst_11 {dimension_numbers = #tpu.dot_dimension_numbers<[1], [0], [0], [1], [0, 0, 1, 1], [], []>} : vector<8x128xbf16>, vector<128x512xbf16>, vector<8x512xf32> -> vector<8x512xf32>
    %16 = arith.addf %13, %15 : vector<8x512xf32>
    %17 = vector.extract_strided_slice %16 {offsets = [0, 0], sizes = [8, 128], strides = [1, 1]} : vector<8x512xf32> to vector<8x128xf32>
    %cst_12 = arith.constant 5.000000e-01 : f32
    %18 = vector.broadcast %cst_12 : f32 to vector<8x128xf32>
    %19 = arith.mulf %18, %17 : vector<8x128xf32>
    %20 = math.tanh %19 : vector<8x128xf32>
    %cst_13 = arith.constant 5.000000e-01 : f32
    %21 = vector.broadcast %cst_13 : f32 to vector<8x128xf32>
    %22 = arith.mulf %21, %20 : vector<8x128xf32>
    %cst_14 = arith.constant 5.000000e-01 : f32
    %23 = vector.broadcast %cst_14 : f32 to vector<8x128xf32>
    %24 = arith.addf %22, %23 : vector<8x128xf32>
    %25 = vector.extract_strided_slice %16 {offsets = [0, 128], sizes = [8, 128], strides = [1, 1]} : vector<8x512xf32> to vector<8x128xf32>
    %cst_15 = arith.constant 5.000000e-01 : f32
    %26 = vector.broadcast %cst_15 : f32 to vector<8x128xf32>
    %27 = arith.mulf %26, %25 : vector<8x128xf32>
    %28 = math.tanh %27 : vector<8x128xf32>
    %cst_16 = arith.constant 5.000000e-01 : f32
    %29 = vector.broadcast %cst_16 : f32 to vector<8x128xf32>
    %30 = arith.mulf %29, %28 : vector<8x128xf32>
    %cst_17 = arith.constant 5.000000e-01 : f32
    %31 = vector.broadcast %cst_17 : f32 to vector<8x128xf32>
    %32 = arith.addf %30, %31 : vector<8x128xf32>
    %33 = vector.extract_strided_slice %16 {offsets = [0, 256], sizes = [8, 128], strides = [1, 1]} : vector<8x512xf32> to vector<8x128xf32>
    %34 = math.tanh %33 : vector<8x128xf32>
    %35 = vector.extract_strided_slice %16 {offsets = [0, 384], sizes = [8, 128], strides = [1, 1]} : vector<8x512xf32> to vector<8x128xf32>
    %cst_18 = arith.constant 5.000000e-01 : f32
    %36 = vector.broadcast %cst_18 : f32 to vector<8x128xf32>
    %37 = arith.mulf %36, %35 : vector<8x128xf32>
    %38 = math.tanh %37 : vector<8x128xf32>
    %cst_19 = arith.constant 5.000000e-01 : f32
    %39 = vector.broadcast %cst_19 : f32 to vector<8x128xf32>
    %40 = arith.mulf %39, %38 : vector<8x128xf32>
    %cst_20 = arith.constant 5.000000e-01 : f32
    %41 = vector.broadcast %cst_20 : f32 to vector<8x128xf32>
    %42 = arith.addf %40, %41 : vector<8x128xf32>
    %43 = arith.mulf %32, %9 : vector<8x128xf32>
    %44 = arith.mulf %24, %34 : vector<8x128xf32>
    %45 = arith.addf %43, %44 : vector<8x128xf32>
    %46 = math.tanh %45 : vector<8x128xf32>
    %47 = arith.mulf %42, %46 : vector<8x128xf32>
    %48 = arith.index_cast %11 : i32 to index
    %c0_21 = arith.constant 0 : index
    %49 = vector.load %arg13[%48, %c0_21] : memref<64x128xf32, #tpu.memory_space<vmem>>, vector<8x128xf32>
    tpu.vector_store %arg13[%48, %c0_21], %47 {strides = array<i32>} : memref<64x128xf32, #tpu.memory_space<vmem>>, vector<8x128xf32>,
    %c1_i32 = arith.constant 1 : i32
    %c8_i32_22 = arith.constant 8 : i32
    %50 = arith.muli %c1_i32, %c8_i32_22 : i32
    %51 = tpu.assume_multiple %50, 8 : i32
    %52 = arith.index_cast %51 : i32 to index
    %c0_23 = arith.constant 0 : index
    %53 = vector.load %arg14[%52, %c0_23] : memref<64x512xf32, #tpu.memory_space<vmem>>, vector<8x512xf32>
    %54 = arith.truncf %47 : vector<8x128xf32> to vector<8x128xbf16>
    %cst_24 = arith.constant dense<0.000000e+00> : vector<8x512xf32>
    %55 = tpu.matmul %54, %8, %cst_24 {dimension_numbers = #tpu.dot_dimension_numbers<[1], [0], [0], [1], [0, 0, 1, 1], [], []>} : vector<8x128xbf16>, vector<128x512xbf16>, vector<8x512xf32> -> vector<8x512xf32>
    %56 = arith.addf %53, %55 : vector<8x512xf32>
    %57 = vector.extract_strided_slice %56 {offsets = [0, 0], sizes = [8, 128], strides = [1, 1]} : vector<8x512xf32> to vector<8x128xf32>
    %cst_25 = arith.constant 5.000000e-01 : f32
    %58 = vector.broadcast %cst_25 : f32 to vector<8x128xf32>
    %59 = arith.mulf %58, %57 : vector<8x128xf32>
    %60 = math.tanh %59 : vector<8x128xf32>
    %cst_26 = arith.constant 5.000000e-01 : f32
    %61 = vector.broadcast %cst_26 : f32 to vector<8x128xf32>
    %62 = arith.mulf %61, %60 : vector<8x128xf32>
    %cst_27 = arith.constant 5.000000e-01 : f32
    %63 = vector.broadcast %cst_27 : f32 to vector<8x128xf32>
    %64 = arith.addf %62, %63 : vector<8x128xf32>
    %65 = vector.extract_strided_slice %56 {offsets = [0, 128], sizes = [8, 128], strides = [1, 1]} : vector<8x512xf32> to vector<8x128xf32>
    %cst_28 = arith.constant 5.000000e-01 : f32
    %66 = vector.broadcast %cst_28 : f32 to vector<8x128xf32>
    %67 = arith.mulf %66, %65 : vector<8x128xf32>
    %68 = math.tanh %67 : vector<8x128xf32>
    %cst_29 = arith.constant 5.000000e-01 : f32
    %69 = vector.broadcast %cst_29 : f32 to vector<8x128xf32>
    %70 = arith.mulf %69, %68 : vector<8x128xf32>
    %cst_30 = arith.constant 5.000000e-01 : f32
    %71 = vector.broadcast %cst_30 : f32 to vector<8x128xf32>
    %72 = arith.addf %70, %71 : vector<8x128xf32>
    %73 = vector.extract_strided_slice %56 {offsets = [0, 256], sizes = [8, 128], strides = [1, 1]} : vector<8x512xf32> to vector<8x128xf32>
    %74 = math.tanh %73 : vector<8x128xf32>
    %75 = vector.extract_strided_slice %56 {offsets = [0, 384], sizes = [8, 128], strides = [1, 1]} : vector<8x512xf32> to vector<8x128xf32>
    %cst_31 = arith.constant 5.000000e-01 : f32
    %76 = vector.broadcast %cst_31 : f32 to vector<8x128xf32>
    %77 = arith.mulf %76, %75 : vector<8x128xf32>
    %78 = math.tanh %77 : vector<8x128xf32>
    %cst_32 = arith.constant 5.000000e-01 : f32
    %79 = vector.broadcast %cst_32 : f32 to vector<8x128xf32>
    %80 = arith.mulf %79, %78 : vector<8x128xf32>
    %cst_33 = arith.constant 5.000000e-01 : f32
    %81 = vector.broadcast %cst_33 : f32 to vector<8x128xf32>
    %82 = arith.addf %80, %81 : vector<8x128xf32>
    %83 = arith.mulf %72, %45 : vector<8x128xf32>
    %84 = arith.mulf %64, %74 : vector<8x128xf32>
    %85 = arith.addf %83, %84 : vector<8x128xf32>
    %86 = math.tanh %85 : vector<8x128xf32>
    %87 = arith.mulf %82, %86 : vector<8x128xf32>
    %88 = arith.index_cast %51 : i32 to index
    %c0_34 = arith.constant 0 : index
    %89 = vector.load %arg13[%88, %c0_34] : memref<64x128xf32, #tpu.memory_space<vmem>>, vector<8x128xf32>
    tpu.vector_store %arg13[%88, %c0_34], %87 {strides = array<i32>} : memref<64x128xf32, #tpu.memory_space<vmem>>, vector<8x128xf32>,
    %c2_i32 = arith.constant 2 : i32
    %c8_i32_35 = arith.constant 8 : i32
    %90 = arith.muli %c2_i32, %c8_i32_35 : i32
    %91 = tpu.assume_multiple %90, 8 : i32
    %92 = arith.index_cast %91 : i32 to index
    %c0_36 = arith.constant 0 : index
    %93 = vector.load %arg14[%92, %c0_36] : memref<64x512xf32, #tpu.memory_space<vmem>>, vector<8x512xf32>
    %94 = arith.truncf %87 : vector<8x128xf32> to vector<8x128xbf16>
    %cst_37 = arith.constant dense<0.000000e+00> : vector<8x512xf32>
    %95 = tpu.matmul %94, %8, %cst_37 {dimension_numbers = #tpu.dot_dimension_numbers<[1], [0], [0], [1], [0, 0, 1, 1], [], []>} : vector<8x128xbf16>, vector<128x512xbf16>, vector<8x512xf32> -> vector<8x512xf32>
    %96 = arith.addf %93, %95 : vector<8x512xf32>
    %97 = vector.extract_strided_slice %96 {offsets = [0, 0], sizes = [8, 128], strides = [1, 1]} : vector<8x512xf32> to vector<8x128xf32>
    %cst_38 = arith.constant 5.000000e-01 : f32
    %98 = vector.broadcast %cst_38 : f32 to vector<8x128xf32>
    %99 = arith.mulf %98, %97 : vector<8x128xf32>
    %100 = math.tanh %99 : vector<8x128xf32>
    %cst_39 = arith.constant 5.000000e-01 : f32
    %101 = vector.broadcast %cst_39 : f32 to vector<8x128xf32>
    %102 = arith.mulf %101, %100 : vector<8x128xf32>
    %cst_40 = arith.constant 5.000000e-01 : f32
    %103 = vector.broadcast %cst_40 : f32 to vector<8x128xf32>
    %104 = arith.addf %102, %103 : vector<8x128xf32>
    %105 = vector.extract_strided_slice %96 {offsets = [0, 128], sizes = [8, 128], strides = [1, 1]} : vector<8x512xf32> to vector<8x128xf32>
    %cst_41 = arith.constant 5.000000e-01 : f32
    %106 = vector.broadcast %cst_41 : f32 to vector<8x128xf32>
    %107 = arith.mulf %106, %105 : vector<8x128xf32>
    %108 = math.tanh %107 : vector<8x128xf32>
    %cst_42 = arith.constant 5.000000e-01 : f32
    %109 = vector.broadcast %cst_42 : f32 to vector<8x128xf32>
    %110 = arith.mulf %109, %108 : vector<8x128xf32>
    %cst_43 = arith.constant 5.000000e-01 : f32
    %111 = vector.broadcast %cst_43 : f32 to vector<8x128xf32>
    %112 = arith.addf %110, %111 : vector<8x128xf32>
    %113 = vector.extract_strided_slice %96 {offsets = [0, 256], sizes = [8, 128], strides = [1, 1]} : vector<8x512xf32> to vector<8x128xf32>
    %114 = math.tanh %113 : vector<8x128xf32>
    %115 = vector.extract_strided_slice %96 {offsets = [0, 384], sizes = [8, 128], strides = [1, 1]} : vector<8x512xf32> to vector<8x128xf32>
    %cst_44 = arith.constant 5.000000e-01 : f32
    %116 = vector.broadcast %cst_44 : f32 to vector<8x128xf32>
    %117 = arith.mulf %116, %115 : vector<8x128xf32>
    %118 = math.tanh %117 : vector<8x128xf32>
    %cst_45 = arith.constant 5.000000e-01 : f32
    %119 = vector.broadcast %cst_45 : f32 to vector<8x128xf32>
    %120 = arith.mulf %119, %118 : vector<8x128xf32>
    %cst_46 = arith.constant 5.000000e-01 : f32
    %121 = vector.broadcast %cst_46 : f32 to vector<8x128xf32>
    %122 = arith.addf %120, %121 : vector<8x128xf32>
    %123 = arith.mulf %112, %85 : vector<8x128xf32>
    %124 = arith.mulf %104, %114 : vector<8x128xf32>
    %125 = arith.addf %123, %124 : vector<8x128xf32>
    %126 = math.tanh %125 : vector<8x128xf32>
    %127 = arith.mulf %122, %126 : vector<8x128xf32>
    %128 = arith.index_cast %91 : i32 to index
    %c0_47 = arith.constant 0 : index
    %129 = vector.load %arg13[%128, %c0_47] : memref<64x128xf32, #tpu.memory_space<vmem>>, vector<8x128xf32>
    tpu.vector_store %arg13[%128, %c0_47], %127 {strides = array<i32>} : memref<64x128xf32, #tpu.memory_space<vmem>>, vector<8x128xf32>,
    %c3_i32 = arith.constant 3 : i32
    %c8_i32_48 = arith.constant 8 : i32
    %130 = arith.muli %c3_i32, %c8_i32_48 : i32
    %131 = tpu.assume_multiple %130, 8 : i32
    %132 = arith.index_cast %131 : i32 to index
    %c0_49 = arith.constant 0 : index
    %133 = vector.load %arg14[%132, %c0_49] : memref<64x512xf32, #tpu.memory_space<vmem>>, vector<8x512xf32>
    %134 = arith.truncf %127 : vector<8x128xf32> to vector<8x128xbf16>
    %cst_50 = arith.constant dense<0.000000e+00> : vector<8x512xf32>
    %135 = tpu.matmul %134, %8, %cst_50 {dimension_numbers = #tpu.dot_dimension_numbers<[1], [0], [0], [1], [0, 0, 1, 1], [], []>} : vector<8x128xbf16>, vector<128x512xbf16>, vector<8x512xf32> -> vector<8x512xf32>
    %136 = arith.addf %133, %135 : vector<8x512xf32>
    %137 = vector.extract_strided_slice %136 {offsets = [0, 0], sizes = [8, 128], strides = [1, 1]} : vector<8x512xf32> to vector<8x128xf32>
    %cst_51 = arith.constant 5.000000e-01 : f32
    %138 = vector.broadcast %cst_51 : f32 to vector<8x128xf32>
    %139 = arith.mulf %138, %137 : vector<8x128xf32>
    %140 = math.tanh %139 : vector<8x128xf32>
    %cst_52 = arith.constant 5.000000e-01 : f32
    %141 = vector.broadcast %cst_52 : f32 to vector<8x128xf32>
    %142 = arith.mulf %141, %140 : vector<8x128xf32>
    %cst_53 = arith.constant 5.000000e-01 : f32
    %143 = vector.broadcast %cst_53 : f32 to vector<8x128xf32>
    %144 = arith.addf %142, %143 : vector<8x128xf32>
    %145 = vector.extract_strided_slice %136 {offsets = [0, 128], sizes = [8, 128], strides = [1, 1]} : vector<8x512xf32> to vector<8x128xf32>
    %cst_54 = arith.constant 5.000000e-01 : f32
    %146 = vector.broadcast %cst_54 : f32 to vector<8x128xf32>
    %147 = arith.mulf %146, %145 : vector<8x128xf32>
    %148 = math.tanh %147 : vector<8x128xf32>
    %cst_55 = arith.constant 5.000000e-01 : f32
    %149 = vector.broadcast %cst_55 : f32 to vector<8x128xf32>
    %150 = arith.mulf %149, %148 : vector<8x128xf32>
    %cst_56 = arith.constant 5.000000e-01 : f32
    %151 = vector.broadcast %cst_56 : f32 to vector<8x128xf32>
    %152 = arith.addf %150, %151 : vector<8x128xf32>
    %153 = vector.extract_strided_slice %136 {offsets = [0, 256], sizes = [8, 128], strides = [1, 1]} : vector<8x512xf32> to vector<8x128xf32>
    %154 = math.tanh %153 : vector<8x128xf32>
    %155 = vector.extract_strided_slice %136 {offsets = [0, 384], sizes = [8, 128], strides = [1, 1]} : vector<8x512xf32> to vector<8x128xf32>
    %cst_57 = arith.constant 5.000000e-01 : f32
    %156 = vector.broadcast %cst_57 : f32 to vector<8x128xf32>
    %157 = arith.mulf %156, %155 : vector<8x128xf32>
    %158 = math.tanh %157 : vector<8x128xf32>
    %cst_58 = arith.constant 5.000000e-01 : f32
    %159 = vector.broadcast %cst_58 : f32 to vector<8x128xf32>
    %160 = arith.mulf %159, %158 : vector<8x128xf32>
    %cst_59 = arith.constant 5.000000e-01 : f32
    %161 = vector.broadcast %cst_59 : f32 to vector<8x128xf32>
    %162 = arith.addf %160, %161 : vector<8x128xf32>
    %163 = arith.mulf %152, %125 : vector<8x128xf32>
    %164 = arith.mulf %144, %154 : vector<8x128xf32>
    %165 = arith.addf %163, %164 : vector<8x128xf32>
    %166 = math.tanh %165 : vector<8x128xf32>
    %167 = arith.mulf %162, %166 : vector<8x128xf32>
    %168 = arith.index_cast %131 : i32 to index
    %c0_60 = arith.constant 0 : index
    %169 = vector.load %arg13[%168, %c0_60] : memref<64x128xf32, #tpu.memory_space<vmem>>, vector<8x128xf32>
    tpu.vector_store %arg13[%168, %c0_60], %167 {strides = array<i32>} : memref<64x128xf32, #tpu.memory_space<vmem>>, vector<8x128xf32>,
    %c4_i32 = arith.constant 4 : i32
    %c8_i32_61 = arith.constant 8 : i32
    %170 = arith.muli %c4_i32, %c8_i32_61 : i32
    %171 = tpu.assume_multiple %170, 8 : i32
    %172 = arith.index_cast %171 : i32 to index
    %c0_62 = arith.constant 0 : index
    %173 = vector.load %arg14[%172, %c0_62] : memref<64x512xf32, #tpu.memory_space<vmem>>, vector<8x512xf32>
    %174 = arith.truncf %167 : vector<8x128xf32> to vector<8x128xbf16>
    %cst_63 = arith.constant dense<0.000000e+00> : vector<8x512xf32>
    %175 = tpu.matmul %174, %8, %cst_63 {dimension_numbers = #tpu.dot_dimension_numbers<[1], [0], [0], [1], [0, 0, 1, 1], [], []>} : vector<8x128xbf16>, vector<128x512xbf16>, vector<8x512xf32> -> vector<8x512xf32>
    %176 = arith.addf %173, %175 : vector<8x512xf32>
    %177 = vector.extract_strided_slice %176 {offsets = [0, 0], sizes = [8, 128], strides = [1, 1]} : vector<8x512xf32> to vector<8x128xf32>
    %cst_64 = arith.constant 5.000000e-01 : f32
    %178 = vector.broadcast %cst_64 : f32 to vector<8x128xf32>
    %179 = arith.mulf %178, %177 : vector<8x128xf32>
    %180 = math.tanh %179 : vector<8x128xf32>
    %cst_65 = arith.constant 5.000000e-01 : f32
    %181 = vector.broadcast %cst_65 : f32 to vector<8x128xf32>
    %182 = arith.mulf %181, %180 : vector<8x128xf32>
    %cst_66 = arith.constant 5.000000e-01 : f32
    %183 = vector.broadcast %cst_66 : f32 to vector<8x128xf32>
    %184 = arith.addf %182, %183 : vector<8x128xf32>
    %185 = vector.extract_strided_slice %176 {offsets = [0, 128], sizes = [8, 128], strides = [1, 1]} : vector<8x512xf32> to vector<8x128xf32>
    %cst_67 = arith.constant 5.000000e-01 : f32
    %186 = vector.broadcast %cst_67 : f32 to vector<8x128xf32>
    %187 = arith.mulf %186, %185 : vector<8x128xf32>
    %188 = math.tanh %187 : vector<8x128xf32>
    %cst_68 = arith.constant 5.000000e-01 : f32
    %189 = vector.broadcast %cst_68 : f32 to vector<8x128xf32>
    %190 = arith.mulf %189, %188 : vector<8x128xf32>
    %cst_69 = arith.constant 5.000000e-01 : f32
    %191 = vector.broadcast %cst_69 : f32 to vector<8x128xf32>
    %192 = arith.addf %190, %191 : vector<8x128xf32>
    %193 = vector.extract_strided_slice %176 {offsets = [0, 256], sizes = [8, 128], strides = [1, 1]} : vector<8x512xf32> to vector<8x128xf32>
    %194 = math.tanh %193 : vector<8x128xf32>
    %195 = vector.extract_strided_slice %176 {offsets = [0, 384], sizes = [8, 128], strides = [1, 1]} : vector<8x512xf32> to vector<8x128xf32>
    %cst_70 = arith.constant 5.000000e-01 : f32
    %196 = vector.broadcast %cst_70 : f32 to vector<8x128xf32>
    %197 = arith.mulf %196, %195 : vector<8x128xf32>
    %198 = math.tanh %197 : vector<8x128xf32>
    %cst_71 = arith.constant 5.000000e-01 : f32
    %199 = vector.broadcast %cst_71 : f32 to vector<8x128xf32>
    %200 = arith.mulf %199, %198 : vector<8x128xf32>
    %cst_72 = arith.constant 5.000000e-01 : f32
    %201 = vector.broadcast %cst_72 : f32 to vector<8x128xf32>
    %202 = arith.addf %200, %201 : vector<8x128xf32>
    %203 = arith.mulf %192, %165 : vector<8x128xf32>
    %204 = arith.mulf %184, %194 : vector<8x128xf32>
    %205 = arith.addf %203, %204 : vector<8x128xf32>
    %206 = math.tanh %205 : vector<8x128xf32>
    %207 = arith.mulf %202, %206 : vector<8x128xf32>
    %208 = arith.index_cast %171 : i32 to index
    %c0_73 = arith.constant 0 : index
    %209 = vector.load %arg13[%208, %c0_73] : memref<64x128xf32, #tpu.memory_space<vmem>>, vector<8x128xf32>
    tpu.vector_store %arg13[%208, %c0_73], %207 {strides = array<i32>} : memref<64x128xf32, #tpu.memory_space<vmem>>, vector<8x128xf32>,
    %c5_i32 = arith.constant 5 : i32
    %c8_i32_74 = arith.constant 8 : i32
    %210 = arith.muli %c5_i32, %c8_i32_74 : i32
    %211 = tpu.assume_multiple %210, 8 : i32
    %212 = arith.index_cast %211 : i32 to index
    %c0_75 = arith.constant 0 : index
    %213 = vector.load %arg14[%212, %c0_75] : memref<64x512xf32, #tpu.memory_space<vmem>>, vector<8x512xf32>
    %214 = arith.truncf %207 : vector<8x128xf32> to vector<8x128xbf16>
    %cst_76 = arith.constant dense<0.000000e+00> : vector<8x512xf32>
    %215 = tpu.matmul %214, %8, %cst_76 {dimension_numbers = #tpu.dot_dimension_numbers<[1], [0], [0], [1], [0, 0, 1, 1], [], []>} : vector<8x128xbf16>, vector<128x512xbf16>, vector<8x512xf32> -> vector<8x512xf32>
    %216 = arith.addf %213, %215 : vector<8x512xf32>
    %217 = vector.extract_strided_slice %216 {offsets = [0, 0], sizes = [8, 128], strides = [1, 1]} : vector<8x512xf32> to vector<8x128xf32>
    %cst_77 = arith.constant 5.000000e-01 : f32
    %218 = vector.broadcast %cst_77 : f32 to vector<8x128xf32>
    %219 = arith.mulf %218, %217 : vector<8x128xf32>
    %220 = math.tanh %219 : vector<8x128xf32>
    %cst_78 = arith.constant 5.000000e-01 : f32
    %221 = vector.broadcast %cst_78 : f32 to vector<8x128xf32>
    %222 = arith.mulf %221, %220 : vector<8x128xf32>
    %cst_79 = arith.constant 5.000000e-01 : f32
    %223 = vector.broadcast %cst_79 : f32 to vector<8x128xf32>
    %224 = arith.addf %222, %223 : vector<8x128xf32>
    %225 = vector.extract_strided_slice %216 {offsets = [0, 128], sizes = [8, 128], strides = [1, 1]} : vector<8x512xf32> to vector<8x128xf32>
    %cst_80 = arith.constant 5.000000e-01 : f32
    %226 = vector.broadcast %cst_80 : f32 to vector<8x128xf32>
    %227 = arith.mulf %226, %225 : vector<8x128xf32>
    %228 = math.tanh %227 : vector<8x128xf32>
    %cst_81 = arith.constant 5.000000e-01 : f32
    %229 = vector.broadcast %cst_81 : f32 to vector<8x128xf32>
    %230 = arith.mulf %229, %228 : vector<8x128xf32>
    %cst_82 = arith.constant 5.000000e-01 : f32
    %231 = vector.broadcast %cst_82 : f32 to vector<8x128xf32>
    %232 = arith.addf %230, %231 : vector<8x128xf32>
    %233 = vector.extract_strided_slice %216 {offsets = [0, 256], sizes = [8, 128], strides = [1, 1]} : vector<8x512xf32> to vector<8x128xf32>
    %234 = math.tanh %233 : vector<8x128xf32>
    %235 = vector.extract_strided_slice %216 {offsets = [0, 384], sizes = [8, 128], strides = [1, 1]} : vector<8x512xf32> to vector<8x128xf32>
    %cst_83 = arith.constant 5.000000e-01 : f32
    %236 = vector.broadcast %cst_83 : f32 to vector<8x128xf32>
    %237 = arith.mulf %236, %235 : vector<8x128xf32>
    %238 = math.tanh %237 : vector<8x128xf32>
    %cst_84 = arith.constant 5.000000e-01 : f32
    %239 = vector.broadcast %cst_84 : f32 to vector<8x128xf32>
    %240 = arith.mulf %239, %238 : vector<8x128xf32>
    %cst_85 = arith.constant 5.000000e-01 : f32
    %241 = vector.broadcast %cst_85 : f32 to vector<8x128xf32>
    %242 = arith.addf %240, %241 : vector<8x128xf32>
    %243 = arith.mulf %232, %205 : vector<8x128xf32>
    %244 = arith.mulf %224, %234 : vector<8x128xf32>
    %245 = arith.addf %243, %244 : vector<8x128xf32>
    %246 = math.tanh %245 : vector<8x128xf32>
    %247 = arith.mulf %242, %246 : vector<8x128xf32>
    %248 = arith.index_cast %211 : i32 to index
    %c0_86 = arith.constant 0 : index
    %249 = vector.load %arg13[%248, %c0_86] : memref<64x128xf32, #tpu.memory_space<vmem>>, vector<8x128xf32>
    tpu.vector_store %arg13[%248, %c0_86], %247 {strides = array<i32>} : memref<64x128xf32, #tpu.memory_space<vmem>>, vector<8x128xf32>,
    %c6_i32 = arith.constant 6 : i32
    %c8_i32_87 = arith.constant 8 : i32
    %250 = arith.muli %c6_i32, %c8_i32_87 : i32
    %251 = tpu.assume_multiple %250, 8 : i32
    %252 = arith.index_cast %251 : i32 to index
    %c0_88 = arith.constant 0 : index
    %253 = vector.load %arg14[%252, %c0_88] : memref<64x512xf32, #tpu.memory_space<vmem>>, vector<8x512xf32>
    %254 = arith.truncf %247 : vector<8x128xf32> to vector<8x128xbf16>
    %cst_89 = arith.constant dense<0.000000e+00> : vector<8x512xf32>
    %255 = tpu.matmul %254, %8, %cst_89 {dimension_numbers = #tpu.dot_dimension_numbers<[1], [0], [0], [1], [0, 0, 1, 1], [], []>} : vector<8x128xbf16>, vector<128x512xbf16>, vector<8x512xf32> -> vector<8x512xf32>
    %256 = arith.addf %253, %255 : vector<8x512xf32>
    %257 = vector.extract_strided_slice %256 {offsets = [0, 0], sizes = [8, 128], strides = [1, 1]} : vector<8x512xf32> to vector<8x128xf32>
    %cst_90 = arith.constant 5.000000e-01 : f32
    %258 = vector.broadcast %cst_90 : f32 to vector<8x128xf32>
    %259 = arith.mulf %258, %257 : vector<8x128xf32>
    %260 = math.tanh %259 : vector<8x128xf32>
    %cst_91 = arith.constant 5.000000e-01 : f32
    %261 = vector.broadcast %cst_91 : f32 to vector<8x128xf32>
    %262 = arith.mulf %261, %260 : vector<8x128xf32>
    %cst_92 = arith.constant 5.000000e-01 : f32
    %263 = vector.broadcast %cst_92 : f32 to vector<8x128xf32>
    %264 = arith.addf %262, %263 : vector<8x128xf32>
    %265 = vector.extract_strided_slice %256 {offsets = [0, 128], sizes = [8, 128], strides = [1, 1]} : vector<8x512xf32> to vector<8x128xf32>
    %cst_93 = arith.constant 5.000000e-01 : f32
    %266 = vector.broadcast %cst_93 : f32 to vector<8x128xf32>
    %267 = arith.mulf %266, %265 : vector<8x128xf32>
    %268 = math.tanh %267 : vector<8x128xf32>
    %cst_94 = arith.constant 5.000000e-01 : f32
    %269 = vector.broadcast %cst_94 : f32 to vector<8x128xf32>
    %270 = arith.mulf %269, %268 : vector<8x128xf32>
    %cst_95 = arith.constant 5.000000e-01 : f32
    %271 = vector.broadcast %cst_95 : f32 to vector<8x128xf32>
    %272 = arith.addf %270, %271 : vector<8x128xf32>
    %273 = vector.extract_strided_slice %256 {offsets = [0, 256], sizes = [8, 128], strides = [1, 1]} : vector<8x512xf32> to vector<8x128xf32>
    %274 = math.tanh %273 : vector<8x128xf32>
    %275 = vector.extract_strided_slice %256 {offsets = [0, 384], sizes = [8, 128], strides = [1, 1]} : vector<8x512xf32> to vector<8x128xf32>
    %cst_96 = arith.constant 5.000000e-01 : f32
    %276 = vector.broadcast %cst_96 : f32 to vector<8x128xf32>
    %277 = arith.mulf %276, %275 : vector<8x128xf32>
    %278 = math.tanh %277 : vector<8x128xf32>
    %cst_97 = arith.constant 5.000000e-01 : f32
    %279 = vector.broadcast %cst_97 : f32 to vector<8x128xf32>
    %280 = arith.mulf %279, %278 : vector<8x128xf32>
    %cst_98 = arith.constant 5.000000e-01 : f32
    %281 = vector.broadcast %cst_98 : f32 to vector<8x128xf32>
    %282 = arith.addf %280, %281 : vector<8x128xf32>
    %283 = arith.mulf %272, %245 : vector<8x128xf32>
    %284 = arith.mulf %264, %274 : vector<8x128xf32>
    %285 = arith.addf %283, %284 : vector<8x128xf32>
    %286 = math.tanh %285 : vector<8x128xf32>
    %287 = arith.mulf %282, %286 : vector<8x128xf32>
    %288 = arith.index_cast %251 : i32 to index
    %c0_99 = arith.constant 0 : index
    %289 = vector.load %arg13[%288, %c0_99] : memref<64x128xf32, #tpu.memory_space<vmem>>, vector<8x128xf32>
    tpu.vector_store %arg13[%288, %c0_99], %287 {strides = array<i32>} : memref<64x128xf32, #tpu.memory_space<vmem>>, vector<8x128xf32>,
    %c7_i32 = arith.constant 7 : i32
    %c8_i32_100 = arith.constant 8 : i32
    %290 = arith.muli %c7_i32, %c8_i32_100 : i32
    %291 = tpu.assume_multiple %290, 8 : i32
    %292 = arith.index_cast %291 : i32 to index
    %c0_101 = arith.constant 0 : index
    %293 = vector.load %arg14[%292, %c0_101] : memref<64x512xf32, #tpu.memory_space<vmem>>, vector<8x512xf32>
    %294 = arith.truncf %287 : vector<8x128xf32> to vector<8x128xbf16>
    %cst_102 = arith.constant dense<0.000000e+00> : vector<8x512xf32>
    %295 = tpu.matmul %294, %8, %cst_102 {dimension_numbers = #tpu.dot_dimension_numbers<[1], [0], [0], [1], [0, 0, 1, 1], [], []>} : vector<8x128xbf16>, vector<128x512xbf16>, vector<8x512xf32> -> vector<8x512xf32>
    %296 = arith.addf %293, %295 : vector<8x512xf32>
    %297 = vector.extract_strided_slice %296 {offsets = [0, 0], sizes = [8, 128], strides = [1, 1]} : vector<8x512xf32> to vector<8x128xf32>
    %cst_103 = arith.constant 5.000000e-01 : f32
    %298 = vector.broadcast %cst_103 : f32 to vector<8x128xf32>
    %299 = arith.mulf %298, %297 : vector<8x128xf32>
    %300 = math.tanh %299 : vector<8x128xf32>
    %cst_104 = arith.constant 5.000000e-01 : f32
    %301 = vector.broadcast %cst_104 : f32 to vector<8x128xf32>
    %302 = arith.mulf %301, %300 : vector<8x128xf32>
    %cst_105 = arith.constant 5.000000e-01 : f32
    %303 = vector.broadcast %cst_105 : f32 to vector<8x128xf32>
    %304 = arith.addf %302, %303 : vector<8x128xf32>
    %305 = vector.extract_strided_slice %296 {offsets = [0, 128], sizes = [8, 128], strides = [1, 1]} : vector<8x512xf32> to vector<8x128xf32>
    %cst_106 = arith.constant 5.000000e-01 : f32
    %306 = vector.broadcast %cst_106 : f32 to vector<8x128xf32>
    %307 = arith.mulf %306, %305 : vector<8x128xf32>
    %308 = math.tanh %307 : vector<8x128xf32>
    %cst_107 = arith.constant 5.000000e-01 : f32
    %309 = vector.broadcast %cst_107 : f32 to vector<8x128xf32>
    %310 = arith.mulf %309, %308 : vector<8x128xf32>
    %cst_108 = arith.constant 5.000000e-01 : f32
    %311 = vector.broadcast %cst_108 : f32 to vector<8x128xf32>
    %312 = arith.addf %310, %311 : vector<8x128xf32>
    %313 = vector.extract_strided_slice %296 {offsets = [0, 256], sizes = [8, 128], strides = [1, 1]} : vector<8x512xf32> to vector<8x128xf32>
    %314 = math.tanh %313 : vector<8x128xf32>
    %315 = vector.extract_strided_slice %296 {offsets = [0, 384], sizes = [8, 128], strides = [1, 1]} : vector<8x512xf32> to vector<8x128xf32>
    %cst_109 = arith.constant 5.000000e-01 : f32
    %316 = vector.broadcast %cst_109 : f32 to vector<8x128xf32>
    %317 = arith.mulf %316, %315 : vector<8x128xf32>
    %318 = math.tanh %317 : vector<8x128xf32>
    %cst_110 = arith.constant 5.000000e-01 : f32
    %319 = vector.broadcast %cst_110 : f32 to vector<8x128xf32>
    %320 = arith.mulf %319, %318 : vector<8x128xf32>
    %cst_111 = arith.constant 5.000000e-01 : f32
    %321 = vector.broadcast %cst_111 : f32 to vector<8x128xf32>
    %322 = arith.addf %320, %321 : vector<8x128xf32>
    %323 = arith.mulf %312, %285 : vector<8x128xf32>
    %324 = arith.mulf %304, %314 : vector<8x128xf32>
    %325 = arith.addf %323, %324 : vector<8x128xf32>
    %326 = math.tanh %325 : vector<8x128xf32>
    %327 = arith.mulf %322, %326 : vector<8x128xf32>
    %328 = arith.index_cast %291 : i32 to index
    %c0_112 = arith.constant 0 : index
    %329 = vector.load %arg13[%328, %c0_112] : memref<64x128xf32, #tpu.memory_space<vmem>>, vector<8x128xf32>
    tpu.vector_store %arg13[%328, %c0_112], %327 {strides = array<i32>} : memref<64x128xf32, #tpu.memory_space<vmem>>, vector<8x128xf32>,
    %c8_i32_113 = arith.constant 8 : i32
    %c0_114 = arith.constant 0 : index
    %c0_115 = arith.constant 0 : index
    %330 = vector.load %arg13[%c0_114, %c0_115] : memref<64x128xf32, #tpu.memory_space<vmem>>, vector<64x128xf32>
    %331 = arith.truncf %330 : vector<64x128xf32> to vector<64x128xbf16>
    %c0_116 = arith.constant 0 : index
    %c0_117 = arith.constant 0 : index
    %332 = vector.load %arg4[%c0_116, %c0_117] : memref<128x512xbf16, #tpu.memory_space<vmem>>, vector<128x512xbf16>
    %cst_118 = arith.constant dense<0.000000e+00> : vector<64x512xf32>
    %333 = tpu.matmul %331, %332, %cst_118 {dimension_numbers = #tpu.dot_dimension_numbers<[1], [0], [0], [1], [0, 0, 1, 1], [], []>} : vector<64x128xbf16>, vector<128x512xbf16>, vector<64x512xf32> -> vector<64x512xf32>
    %c0_119 = arith.constant 0 : index
    %c0_120 = arith.constant 0 : index
    %334 = vector.load %arg6[%c0_119, %c0_120] : memref<1x512xf32, #tpu.memory_space<vmem>>, vector<1x512xf32>
    %335 = vector.broadcast %334 : vector<1x512xf32> to vector<64x512xf32>
    %336 = arith.addf %333, %335 : vector<64x512xf32>
    %c0_121 = arith.constant 0 : index
    %c0_122 = arith.constant 0 : index
    %337 = vector.load %arg14[%c0_121, %c0_122] : memref<64x512xf32, #tpu.memory_space<vmem>>, vector<64x512xf32>
    tpu.vector_store %arg14[%c0_121, %c0_122], %336 {strides = array<i32>} : memref<64x512xf32, #tpu.memory_space<vmem>>, vector<64x512xf32>,
    %c0_123 = arith.constant 0 : index
    %c0_124 = arith.constant 0 : index
    %338 = vector.load %arg5[%c0_123, %c0_124] : memref<128x512xbf16, #tpu.memory_space<vmem>>, vector<128x512xbf16>
    %cst_125 = arith.constant 0.000000e+00 : f32
    %339 = vector.broadcast %cst_125 : f32 to vector<8x128xf32>
    %c0_i32_126 = arith.constant 0 : i32
    %c8_i32_127 = arith.constant 8 : i32
    %340 = arith.muli %c0_i32_126, %c8_i32_127 : i32
    %341 = tpu.assume_multiple %340, 8 : i32
    %342 = arith.index_cast %341 : i32 to index
    %c0_128 = arith.constant 0 : index
    %343 = vector.load %arg14[%342, %c0_128] : memref<64x512xf32, #tpu.memory_space<vmem>>, vector<8x512xf32>
    %344 = arith.truncf %339 : vector<8x128xf32> to vector<8x128xbf16>
    %cst_129 = arith.constant dense<0.000000e+00> : vector<8x512xf32>
    %345 = tpu.matmul %344, %338, %cst_129 {dimension_numbers = #tpu.dot_dimension_numbers<[1], [0], [0], [1], [0, 0, 1, 1], [], []>} : vector<8x128xbf16>, vector<128x512xbf16>, vector<8x512xf32> -> vector<8x512xf32>
    %346 = arith.addf %343, %345 : vector<8x512xf32>
    %347 = vector.extract_strided_slice %346 {offsets = [0, 0], sizes = [8, 128], strides = [1, 1]} : vector<8x512xf32> to vector<8x128xf32>
    %cst_130 = arith.constant 5.000000e-01 : f32
    %348 = vector.broadcast %cst_130 : f32 to vector<8x128xf32>
    %349 = arith.mulf %348, %347 : vector<8x128xf32>
    %350 = math.tanh %349 : vector<8x128xf32>
    %cst_131 = arith.constant 5.000000e-01 : f32
    %351 = vector.broadcast %cst_131 : f32 to vector<8x128xf32>
    %352 = arith.mulf %351, %350 : vector<8x128xf32>
    %cst_132 = arith.constant 5.000000e-01 : f32
    %353 = vector.broadcast %cst_132 : f32 to vector<8x128xf32>
    %354 = arith.addf %352, %353 : vector<8x128xf32>
    %355 = vector.extract_strided_slice %346 {offsets = [0, 128], sizes = [8, 128], strides = [1, 1]} : vector<8x512xf32> to vector<8x128xf32>
    %cst_133 = arith.constant 5.000000e-01 : f32
    %356 = vector.broadcast %cst_133 : f32 to vector<8x128xf32>
    %357 = arith.mulf %356, %355 : vector<8x128xf32>
    %358 = math.tanh %357 : vector<8x128xf32>
    %cst_134 = arith.constant 5.000000e-01 : f32
    %359 = vector.broadcast %cst_134 : f32 to vector<8x128xf32>
    %360 = arith.mulf %359, %358 : vector<8x128xf32>
    %cst_135 = arith.constant 5.000000e-01 : f32
    %361 = vector.broadcast %cst_135 : f32 to vector<8x128xf32>
    %362 = arith.addf %360, %361 : vector<8x128xf32>
    %363 = vector.extract_strided_slice %346 {offsets = [0, 256], sizes = [8, 128], strides = [1, 1]} : vector<8x512xf32> to vector<8x128xf32>
    %364 = math.tanh %363 : vector<8x128xf32>
    %365 = vector.extract_strided_slice %346 {offsets = [0, 384], sizes = [8, 128], strides = [1, 1]} : vector<8x512xf32> to vector<8x128xf32>
    %cst_136 = arith.constant 5.000000e-01 : f32
    %366 = vector.broadcast %cst_136 : f32 to vector<8x128xf32>
    %367 = arith.mulf %366, %365 : vector<8x128xf32>
    %368 = math.tanh %367 : vector<8x128xf32>
    %cst_137 = arith.constant 5.000000e-01 : f32
    %369 = vector.broadcast %cst_137 : f32 to vector<8x128xf32>
    %370 = arith.mulf %369, %368 : vector<8x128xf32>
    %cst_138 = arith.constant 5.000000e-01 : f32
    %371 = vector.broadcast %cst_138 : f32 to vector<8x128xf32>
    %372 = arith.addf %370, %371 : vector<8x128xf32>
    %373 = arith.mulf %362, %339 : vector<8x128xf32>
    %374 = arith.mulf %354, %364 : vector<8x128xf32>
    %375 = arith.addf %373, %374 : vector<8x128xf32>
    %376 = math.tanh %375 : vector<8x128xf32>
    %377 = arith.mulf %372, %376 : vector<8x128xf32>
    %378 = arith.index_cast %341 : i32 to index
    %c0_139 = arith.constant 0 : index
    %379 = vector.load %arg13[%378, %c0_139] : memref<64x128xf32, #tpu.memory_space<vmem>>, vector<8x128xf32>
    tpu.vector_store %arg13[%378, %c0_139], %377 {strides = array<i32>} : memref<64x128xf32, #tpu.memory_space<vmem>>, vector<8x128xf32>,
    %c1_i32_140 = arith.constant 1 : i32
    %c8_i32_141 = arith.constant 8 : i32
    %380 = arith.muli %c1_i32_140, %c8_i32_141 : i32
    %381 = tpu.assume_multiple %380, 8 : i32
    %382 = arith.index_cast %381 : i32 to index
    %c0_142 = arith.constant 0 : index
    %383 = vector.load %arg14[%382, %c0_142] : memref<64x512xf32, #tpu.memory_space<vmem>>, vector<8x512xf32>
    %384 = arith.truncf %377 : vector<8x128xf32> to vector<8x128xbf16>
    %cst_143 = arith.constant dense<0.000000e+00> : vector<8x512xf32>
    %385 = tpu.matmul %384, %338, %cst_143 {dimension_numbers = #tpu.dot_dimension_numbers<[1], [0], [0], [1], [0, 0, 1, 1], [], []>} : vector<8x128xbf16>, vector<128x512xbf16>, vector<8x512xf32> -> vector<8x512xf32>
    %386 = arith.addf %383, %385 : vector<8x512xf32>
    %387 = vector.extract_strided_slice %386 {offsets = [0, 0], sizes = [8, 128], strides = [1, 1]} : vector<8x512xf32> to vector<8x128xf32>
    %cst_144 = arith.constant 5.000000e-01 : f32
    %388 = vector.broadcast %cst_144 : f32 to vector<8x128xf32>
    %389 = arith.mulf %388, %387 : vector<8x128xf32>
    %390 = math.tanh %389 : vector<8x128xf32>
    %cst_145 = arith.constant 5.000000e-01 : f32
    %391 = vector.broadcast %cst_145 : f32 to vector<8x128xf32>
    %392 = arith.mulf %391, %390 : vector<8x128xf32>
    %cst_146 = arith.constant 5.000000e-01 : f32
    %393 = vector.broadcast %cst_146 : f32 to vector<8x128xf32>
    %394 = arith.addf %392, %393 : vector<8x128xf32>
    %395 = vector.extract_strided_slice %386 {offsets = [0, 128], sizes = [8, 128], strides = [1, 1]} : vector<8x512xf32> to vector<8x128xf32>
    %cst_147 = arith.constant 5.000000e-01 : f32
    %396 = vector.broadcast %cst_147 : f32 to vector<8x128xf32>
    %397 = arith.mulf %396, %395 : vector<8x128xf32>
    %398 = math.tanh %397 : vector<8x128xf32>
    %cst_148 = arith.constant 5.000000e-01 : f32
    %399 = vector.broadcast %cst_148 : f32 to vector<8x128xf32>
    %400 = arith.mulf %399, %398 : vector<8x128xf32>
    %cst_149 = arith.constant 5.000000e-01 : f32
    %401 = vector.broadcast %cst_149 : f32 to vector<8x128xf32>
    %402 = arith.addf %400, %401 : vector<8x128xf32>
    %403 = vector.extract_strided_slice %386 {offsets = [0, 256], sizes = [8, 128], strides = [1, 1]} : vector<8x512xf32> to vector<8x128xf32>
    %404 = math.tanh %403 : vector<8x128xf32>
    %405 = vector.extract_strided_slice %386 {offsets = [0, 384], sizes = [8, 128], strides = [1, 1]} : vector<8x512xf32> to vector<8x128xf32>
    %cst_150 = arith.constant 5.000000e-01 : f32
    %406 = vector.broadcast %cst_150 : f32 to vector<8x128xf32>
    %407 = arith.mulf %406, %405 : vector<8x128xf32>
    %408 = math.tanh %407 : vector<8x128xf32>
    %cst_151 = arith.constant 5.000000e-01 : f32
    %409 = vector.broadcast %cst_151 : f32 to vector<8x128xf32>
    %410 = arith.mulf %409, %408 : vector<8x128xf32>
    %cst_152 = arith.constant 5.000000e-01 : f32
    %411 = vector.broadcast %cst_152 : f32 to vector<8x128xf32>
    %412 = arith.addf %410, %411 : vector<8x128xf32>
    %413 = arith.mulf %402, %375 : vector<8x128xf32>
    %414 = arith.mulf %394, %404 : vector<8x128xf32>
    %415 = arith.addf %413, %414 : vector<8x128xf32>
    %416 = math.tanh %415 : vector<8x128xf32>
    %417 = arith.mulf %412, %416 : vector<8x128xf32>
    %418 = arith.index_cast %381 : i32 to index
    %c0_153 = arith.constant 0 : index
    %419 = vector.load %arg13[%418, %c0_153] : memref<64x128xf32, #tpu.memory_space<vmem>>, vector<8x128xf32>
    tpu.vector_store %arg13[%418, %c0_153], %417 {strides = array<i32>} : memref<64x128xf32, #tpu.memory_space<vmem>>, vector<8x128xf32>,
    %c2_i32_154 = arith.constant 2 : i32
    %c8_i32_155 = arith.constant 8 : i32
    %420 = arith.muli %c2_i32_154, %c8_i32_155 : i32
    %421 = tpu.assume_multiple %420, 8 : i32
    %422 = arith.index_cast %421 : i32 to index
    %c0_156 = arith.constant 0 : index
    %423 = vector.load %arg14[%422, %c0_156] : memref<64x512xf32, #tpu.memory_space<vmem>>, vector<8x512xf32>
    %424 = arith.truncf %417 : vector<8x128xf32> to vector<8x128xbf16>
    %cst_157 = arith.constant dense<0.000000e+00> : vector<8x512xf32>
    %425 = tpu.matmul %424, %338, %cst_157 {dimension_numbers = #tpu.dot_dimension_numbers<[1], [0], [0], [1], [0, 0, 1, 1], [], []>} : vector<8x128xbf16>, vector<128x512xbf16>, vector<8x512xf32> -> vector<8x512xf32>
    %426 = arith.addf %423, %425 : vector<8x512xf32>
    %427 = vector.extract_strided_slice %426 {offsets = [0, 0], sizes = [8, 128], strides = [1, 1]} : vector<8x512xf32> to vector<8x128xf32>
    %cst_158 = arith.constant 5.000000e-01 : f32
    %428 = vector.broadcast %cst_158 : f32 to vector<8x128xf32>
    %429 = arith.mulf %428, %427 : vector<8x128xf32>
    %430 = math.tanh %429 : vector<8x128xf32>
    %cst_159 = arith.constant 5.000000e-01 : f32
    %431 = vector.broadcast %cst_159 : f32 to vector<8x128xf32>
    %432 = arith.mulf %431, %430 : vector<8x128xf32>
    %cst_160 = arith.constant 5.000000e-01 : f32
    %433 = vector.broadcast %cst_160 : f32 to vector<8x128xf32>
    %434 = arith.addf %432, %433 : vector<8x128xf32>
    %435 = vector.extract_strided_slice %426 {offsets = [0, 128], sizes = [8, 128], strides = [1, 1]} : vector<8x512xf32> to vector<8x128xf32>
    %cst_161 = arith.constant 5.000000e-01 : f32
    %436 = vector.broadcast %cst_161 : f32 to vector<8x128xf32>
    %437 = arith.mulf %436, %435 : vector<8x128xf32>
    %438 = math.tanh %437 : vector<8x128xf32>
    %cst_162 = arith.constant 5.000000e-01 : f32
    %439 = vector.broadcast %cst_162 : f32 to vector<8x128xf32>
    %440 = arith.mulf %439, %438 : vector<8x128xf32>
    %cst_163 = arith.constant 5.000000e-01 : f32
    %441 = vector.broadcast %cst_163 : f32 to vector<8x128xf32>
    %442 = arith.addf %440, %441 : vector<8x128xf32>
    %443 = vector.extract_strided_slice %426 {offsets = [0, 256], sizes = [8, 128], strides = [1, 1]} : vector<8x512xf32> to vector<8x128xf32>
    %444 = math.tanh %443 : vector<8x128xf32>
    %445 = vector.extract_strided_slice %426 {offsets = [0, 384], sizes = [8, 128], strides = [1, 1]} : vector<8x512xf32> to vector<8x128xf32>
    %cst_164 = arith.constant 5.000000e-01 : f32
    %446 = vector.broadcast %cst_164 : f32 to vector<8x128xf32>
    %447 = arith.mulf %446, %445 : vector<8x128xf32>
    %448 = math.tanh %447 : vector<8x128xf32>
    %cst_165 = arith.constant 5.000000e-01 : f32
    %449 = vector.broadcast %cst_165 : f32 to vector<8x128xf32>
    %450 = arith.mulf %449, %448 : vector<8x128xf32>
    %cst_166 = arith.constant 5.000000e-01 : f32
    %451 = vector.broadcast %cst_166 : f32 to vector<8x128xf32>
    %452 = arith.addf %450, %451 : vector<8x128xf32>
    %453 = arith.mulf %442, %415 : vector<8x128xf32>
    %454 = arith.mulf %434, %444 : vector<8x128xf32>
    %455 = arith.addf %453, %454 : vector<8x128xf32>
    %456 = math.tanh %455 : vector<8x128xf32>
    %457 = arith.mulf %452, %456 : vector<8x128xf32>
    %458 = arith.index_cast %421 : i32 to index
    %c0_167 = arith.constant 0 : index
    %459 = vector.load %arg13[%458, %c0_167] : memref<64x128xf32, #tpu.memory_space<vmem>>, vector<8x128xf32>
    tpu.vector_store %arg13[%458, %c0_167], %457 {strides = array<i32>} : memref<64x128xf32, #tpu.memory_space<vmem>>, vector<8x128xf32>,
    %c3_i32_168 = arith.constant 3 : i32
    %c8_i32_169 = arith.constant 8 : i32
    %460 = arith.muli %c3_i32_168, %c8_i32_169 : i32
    %461 = tpu.assume_multiple %460, 8 : i32
    %462 = arith.index_cast %461 : i32 to index
    %c0_170 = arith.constant 0 : index
    %463 = vector.load %arg14[%462, %c0_170] : memref<64x512xf32, #tpu.memory_space<vmem>>, vector<8x512xf32>
    %464 = arith.truncf %457 : vector<8x128xf32> to vector<8x128xbf16>
    %cst_171 = arith.constant dense<0.000000e+00> : vector<8x512xf32>
    %465 = tpu.matmul %464, %338, %cst_171 {dimension_numbers = #tpu.dot_dimension_numbers<[1], [0], [0], [1], [0, 0, 1, 1], [], []>} : vector<8x128xbf16>, vector<128x512xbf16>, vector<8x512xf32> -> vector<8x512xf32>
    %466 = arith.addf %463, %465 : vector<8x512xf32>
    %467 = vector.extract_strided_slice %466 {offsets = [0, 0], sizes = [8, 128], strides = [1, 1]} : vector<8x512xf32> to vector<8x128xf32>
    %cst_172 = arith.constant 5.000000e-01 : f32
    %468 = vector.broadcast %cst_172 : f32 to vector<8x128xf32>
    %469 = arith.mulf %468, %467 : vector<8x128xf32>
    %470 = math.tanh %469 : vector<8x128xf32>
    %cst_173 = arith.constant 5.000000e-01 : f32
    %471 = vector.broadcast %cst_173 : f32 to vector<8x128xf32>
    %472 = arith.mulf %471, %470 : vector<8x128xf32>
    %cst_174 = arith.constant 5.000000e-01 : f32
    %473 = vector.broadcast %cst_174 : f32 to vector<8x128xf32>
    %474 = arith.addf %472, %473 : vector<8x128xf32>
    %475 = vector.extract_strided_slice %466 {offsets = [0, 128], sizes = [8, 128], strides = [1, 1]} : vector<8x512xf32> to vector<8x128xf32>
    %cst_175 = arith.constant 5.000000e-01 : f32
    %476 = vector.broadcast %cst_175 : f32 to vector<8x128xf32>
    %477 = arith.mulf %476, %475 : vector<8x128xf32>
    %478 = math.tanh %477 : vector<8x128xf32>
    %cst_176 = arith.constant 5.000000e-01 : f32
    %479 = vector.broadcast %cst_176 : f32 to vector<8x128xf32>
    %480 = arith.mulf %479, %478 : vector<8x128xf32>
    %cst_177 = arith.constant 5.000000e-01 : f32
    %481 = vector.broadcast %cst_177 : f32 to vector<8x128xf32>
    %482 = arith.addf %480, %481 : vector<8x128xf32>
    %483 = vector.extract_strided_slice %466 {offsets = [0, 256], sizes = [8, 128], strides = [1, 1]} : vector<8x512xf32> to vector<8x128xf32>
    %484 = math.tanh %483 : vector<8x128xf32>
    %485 = vector.extract_strided_slice %466 {offsets = [0, 384], sizes = [8, 128], strides = [1, 1]} : vector<8x512xf32> to vector<8x128xf32>
    %cst_178 = arith.constant 5.000000e-01 : f32
    %486 = vector.broadcast %cst_178 : f32 to vector<8x128xf32>
    %487 = arith.mulf %486, %485 : vector<8x128xf32>
    %488 = math.tanh %487 : vector<8x128xf32>
    %cst_179 = arith.constant 5.000000e-01 : f32
    %489 = vector.broadcast %cst_179 : f32 to vector<8x128xf32>
    %490 = arith.mulf %489, %488 : vector<8x128xf32>
    %cst_180 = arith.constant 5.000000e-01 : f32
    %491 = vector.broadcast %cst_180 : f32 to vector<8x128xf32>
    %492 = arith.addf %490, %491 : vector<8x128xf32>
    %493 = arith.mulf %482, %455 : vector<8x128xf32>
    %494 = arith.mulf %474, %484 : vector<8x128xf32>
    %495 = arith.addf %493, %494 : vector<8x128xf32>
    %496 = math.tanh %495 : vector<8x128xf32>
    %497 = arith.mulf %492, %496 : vector<8x128xf32>
    %498 = arith.index_cast %461 : i32 to index
    %c0_181 = arith.constant 0 : index
    %499 = vector.load %arg13[%498, %c0_181] : memref<64x128xf32, #tpu.memory_space<vmem>>, vector<8x128xf32>
    tpu.vector_store %arg13[%498, %c0_181], %497 {strides = array<i32>} : memref<64x128xf32, #tpu.memory_space<vmem>>, vector<8x128xf32>,
    %c4_i32_182 = arith.constant 4 : i32
    %c8_i32_183 = arith.constant 8 : i32
    %500 = arith.muli %c4_i32_182, %c8_i32_183 : i32
    %501 = tpu.assume_multiple %500, 8 : i32
    %502 = arith.index_cast %501 : i32 to index
    %c0_184 = arith.constant 0 : index
    %503 = vector.load %arg14[%502, %c0_184] : memref<64x512xf32, #tpu.memory_space<vmem>>, vector<8x512xf32>
    %504 = arith.truncf %497 : vector<8x128xf32> to vector<8x128xbf16>
    %cst_185 = arith.constant dense<0.000000e+00> : vector<8x512xf32>
    %505 = tpu.matmul %504, %338, %cst_185 {dimension_numbers = #tpu.dot_dimension_numbers<[1], [0], [0], [1], [0, 0, 1, 1], [], []>} : vector<8x128xbf16>, vector<128x512xbf16>, vector<8x512xf32> -> vector<8x512xf32>
    %506 = arith.addf %503, %505 : vector<8x512xf32>
    %507 = vector.extract_strided_slice %506 {offsets = [0, 0], sizes = [8, 128], strides = [1, 1]} : vector<8x512xf32> to vector<8x128xf32>
    %cst_186 = arith.constant 5.000000e-01 : f32
    %508 = vector.broadcast %cst_186 : f32 to vector<8x128xf32>
    %509 = arith.mulf %508, %507 : vector<8x128xf32>
    %510 = math.tanh %509 : vector<8x128xf32>
    %cst_187 = arith.constant 5.000000e-01 : f32
    %511 = vector.broadcast %cst_187 : f32 to vector<8x128xf32>
    %512 = arith.mulf %511, %510 : vector<8x128xf32>
    %cst_188 = arith.constant 5.000000e-01 : f32
    %513 = vector.broadcast %cst_188 : f32 to vector<8x128xf32>
    %514 = arith.addf %512, %513 : vector<8x128xf32>
    %515 = vector.extract_strided_slice %506 {offsets = [0, 128], sizes = [8, 128], strides = [1, 1]} : vector<8x512xf32> to vector<8x128xf32>
    %cst_189 = arith.constant 5.000000e-01 : f32
    %516 = vector.broadcast %cst_189 : f32 to vector<8x128xf32>
    %517 = arith.mulf %516, %515 : vector<8x128xf32>
    %518 = math.tanh %517 : vector<8x128xf32>
    %cst_190 = arith.constant 5.000000e-01 : f32
    %519 = vector.broadcast %cst_190 : f32 to vector<8x128xf32>
    %520 = arith.mulf %519, %518 : vector<8x128xf32>
    %cst_191 = arith.constant 5.000000e-01 : f32
    %521 = vector.broadcast %cst_191 : f32 to vector<8x128xf32>
    %522 = arith.addf %520, %521 : vector<8x128xf32>
    %523 = vector.extract_strided_slice %506 {offsets = [0, 256], sizes = [8, 128], strides = [1, 1]} : vector<8x512xf32> to vector<8x128xf32>
    %524 = math.tanh %523 : vector<8x128xf32>
    %525 = vector.extract_strided_slice %506 {offsets = [0, 384], sizes = [8, 128], strides = [1, 1]} : vector<8x512xf32> to vector<8x128xf32>
    %cst_192 = arith.constant 5.000000e-01 : f32
    %526 = vector.broadcast %cst_192 : f32 to vector<8x128xf32>
    %527 = arith.mulf %526, %525 : vector<8x128xf32>
    %528 = math.tanh %527 : vector<8x128xf32>
    %cst_193 = arith.constant 5.000000e-01 : f32
    %529 = vector.broadcast %cst_193 : f32 to vector<8x128xf32>
    %530 = arith.mulf %529, %528 : vector<8x128xf32>
    %cst_194 = arith.constant 5.000000e-01 : f32
    %531 = vector.broadcast %cst_194 : f32 to vector<8x128xf32>
    %532 = arith.addf %530, %531 : vector<8x128xf32>
    %533 = arith.mulf %522, %495 : vector<8x128xf32>
    %534 = arith.mulf %514, %524 : vector<8x128xf32>
    %535 = arith.addf %533, %534 : vector<8x128xf32>
    %536 = math.tanh %535 : vector<8x128xf32>
    %537 = arith.mulf %532, %536 : vector<8x128xf32>
    %538 = arith.index_cast %501 : i32 to index
    %c0_195 = arith.constant 0 : index
    %539 = vector.load %arg13[%538, %c0_195] : memref<64x128xf32, #tpu.memory_space<vmem>>, vector<8x128xf32>
    tpu.vector_store %arg13[%538, %c0_195], %537 {strides = array<i32>} : memref<64x128xf32, #tpu.memory_space<vmem>>, vector<8x128xf32>,
    %c5_i32_196 = arith.constant 5 : i32
    %c8_i32_197 = arith.constant 8 : i32
    %540 = arith.muli %c5_i32_196, %c8_i32_197 : i32
    %541 = tpu.assume_multiple %540, 8 : i32
    %542 = arith.index_cast %541 : i32 to index
    %c0_198 = arith.constant 0 : index
    %543 = vector.load %arg14[%542, %c0_198] : memref<64x512xf32, #tpu.memory_space<vmem>>, vector<8x512xf32>
    %544 = arith.truncf %537 : vector<8x128xf32> to vector<8x128xbf16>
    %cst_199 = arith.constant dense<0.000000e+00> : vector<8x512xf32>
    %545 = tpu.matmul %544, %338, %cst_199 {dimension_numbers = #tpu.dot_dimension_numbers<[1], [0], [0], [1], [0, 0, 1, 1], [], []>} : vector<8x128xbf16>, vector<128x512xbf16>, vector<8x512xf32> -> vector<8x512xf32>
    %546 = arith.addf %543, %545 : vector<8x512xf32>
    %547 = vector.extract_strided_slice %546 {offsets = [0, 0], sizes = [8, 128], strides = [1, 1]} : vector<8x512xf32> to vector<8x128xf32>
    %cst_200 = arith.constant 5.000000e-01 : f32
    %548 = vector.broadcast %cst_200 : f32 to vector<8x128xf32>
    %549 = arith.mulf %548, %547 : vector<8x128xf32>
    %550 = math.tanh %549 : vector<8x128xf32>
    %cst_201 = arith.constant 5.000000e-01 : f32
    %551 = vector.broadcast %cst_201 : f32 to vector<8x128xf32>
    %552 = arith.mulf %551, %550 : vector<8x128xf32>
    %cst_202 = arith.constant 5.000000e-01 : f32
    %553 = vector.broadcast %cst_202 : f32 to vector<8x128xf32>
    %554 = arith.addf %552, %553 : vector<8x128xf32>
    %555 = vector.extract_strided_slice %546 {offsets = [0, 128], sizes = [8, 128], strides = [1, 1]} : vector<8x512xf32> to vector<8x128xf32>
    %cst_203 = arith.constant 5.000000e-01 : f32
    %556 = vector.broadcast %cst_203 : f32 to vector<8x128xf32>
    %557 = arith.mulf %556, %555 : vector<8x128xf32>
    %558 = math.tanh %557 : vector<8x128xf32>
    %cst_204 = arith.constant 5.000000e-01 : f32
    %559 = vector.broadcast %cst_204 : f32 to vector<8x128xf32>
    %560 = arith.mulf %559, %558 : vector<8x128xf32>
    %cst_205 = arith.constant 5.000000e-01 : f32
    %561 = vector.broadcast %cst_205 : f32 to vector<8x128xf32>
    %562 = arith.addf %560, %561 : vector<8x128xf32>
    %563 = vector.extract_strided_slice %546 {offsets = [0, 256], sizes = [8, 128], strides = [1, 1]} : vector<8x512xf32> to vector<8x128xf32>
    %564 = math.tanh %563 : vector<8x128xf32>
    %565 = vector.extract_strided_slice %546 {offsets = [0, 384], sizes = [8, 128], strides = [1, 1]} : vector<8x512xf32> to vector<8x128xf32>
    %cst_206 = arith.constant 5.000000e-01 : f32
    %566 = vector.broadcast %cst_206 : f32 to vector<8x128xf32>
    %567 = arith.mulf %566, %565 : vector<8x128xf32>
    %568 = math.tanh %567 : vector<8x128xf32>
    %cst_207 = arith.constant 5.000000e-01 : f32
    %569 = vector.broadcast %cst_207 : f32 to vector<8x128xf32>
    %570 = arith.mulf %569, %568 : vector<8x128xf32>
    %cst_208 = arith.constant 5.000000e-01 : f32
    %571 = vector.broadcast %cst_208 : f32 to vector<8x128xf32>
    %572 = arith.addf %570, %571 : vector<8x128xf32>
    %573 = arith.mulf %562, %535 : vector<8x128xf32>
    %574 = arith.mulf %554, %564 : vector<8x128xf32>
    %575 = arith.addf %573, %574 : vector<8x128xf32>
    %576 = math.tanh %575 : vector<8x128xf32>
    %577 = arith.mulf %572, %576 : vector<8x128xf32>
    %578 = arith.index_cast %541 : i32 to index
    %c0_209 = arith.constant 0 : index
    %579 = vector.load %arg13[%578, %c0_209] : memref<64x128xf32, #tpu.memory_space<vmem>>, vector<8x128xf32>
    tpu.vector_store %arg13[%578, %c0_209], %577 {strides = array<i32>} : memref<64x128xf32, #tpu.memory_space<vmem>>, vector<8x128xf32>,
    %c6_i32_210 = arith.constant 6 : i32
    %c8_i32_211 = arith.constant 8 : i32
    %580 = arith.muli %c6_i32_210, %c8_i32_211 : i32
    %581 = tpu.assume_multiple %580, 8 : i32
    %582 = arith.index_cast %581 : i32 to index
    %c0_212 = arith.constant 0 : index
    %583 = vector.load %arg14[%582, %c0_212] : memref<64x512xf32, #tpu.memory_space<vmem>>, vector<8x512xf32>
    %584 = arith.truncf %577 : vector<8x128xf32> to vector<8x128xbf16>
    %cst_213 = arith.constant dense<0.000000e+00> : vector<8x512xf32>
    %585 = tpu.matmul %584, %338, %cst_213 {dimension_numbers = #tpu.dot_dimension_numbers<[1], [0], [0], [1], [0, 0, 1, 1], [], []>} : vector<8x128xbf16>, vector<128x512xbf16>, vector<8x512xf32> -> vector<8x512xf32>
    %586 = arith.addf %583, %585 : vector<8x512xf32>
    %587 = vector.extract_strided_slice %586 {offsets = [0, 0], sizes = [8, 128], strides = [1, 1]} : vector<8x512xf32> to vector<8x128xf32>
    %cst_214 = arith.constant 5.000000e-01 : f32
    %588 = vector.broadcast %cst_214 : f32 to vector<8x128xf32>
    %589 = arith.mulf %588, %587 : vector<8x128xf32>
    %590 = math.tanh %589 : vector<8x128xf32>
    %cst_215 = arith.constant 5.000000e-01 : f32
    %591 = vector.broadcast %cst_215 : f32 to vector<8x128xf32>
    %592 = arith.mulf %591, %590 : vector<8x128xf32>
    %cst_216 = arith.constant 5.000000e-01 : f32
    %593 = vector.broadcast %cst_216 : f32 to vector<8x128xf32>
    %594 = arith.addf %592, %593 : vector<8x128xf32>
    %595 = vector.extract_strided_slice %586 {offsets = [0, 128], sizes = [8, 128], strides = [1, 1]} : vector<8x512xf32> to vector<8x128xf32>
    %cst_217 = arith.constant 5.000000e-01 : f32
    %596 = vector.broadcast %cst_217 : f32 to vector<8x128xf32>
    %597 = arith.mulf %596, %595 : vector<8x128xf32>
    %598 = math.tanh %597 : vector<8x128xf32>
    %cst_218 = arith.constant 5.000000e-01 : f32
    %599 = vector.broadcast %cst_218 : f32 to vector<8x128xf32>
    %600 = arith.mulf %599, %598 : vector<8x128xf32>
    %cst_219 = arith.constant 5.000000e-01 : f32
    %601 = vector.broadcast %cst_219 : f32 to vector<8x128xf32>
    %602 = arith.addf %600, %601 : vector<8x128xf32>
    %603 = vector.extract_strided_slice %586 {offsets = [0, 256], sizes = [8, 128], strides = [1, 1]} : vector<8x512xf32> to vector<8x128xf32>
    %604 = math.tanh %603 : vector<8x128xf32>
    %605 = vector.extract_strided_slice %586 {offsets = [0, 384], sizes = [8, 128], strides = [1, 1]} : vector<8x512xf32> to vector<8x128xf32>
    %cst_220 = arith.constant 5.000000e-01 : f32
    %606 = vector.broadcast %cst_220 : f32 to vector<8x128xf32>
    %607 = arith.mulf %606, %605 : vector<8x128xf32>
    %608 = math.tanh %607 : vector<8x128xf32>
    %cst_221 = arith.constant 5.000000e-01 : f32
    %609 = vector.broadcast %cst_221 : f32 to vector<8x128xf32>
    %610 = arith.mulf %609, %608 : vector<8x128xf32>
    %cst_222 = arith.constant 5.000000e-01 : f32
    %611 = vector.broadcast %cst_222 : f32 to vector<8x128xf32>
    %612 = arith.addf %610, %611 : vector<8x128xf32>
    %613 = arith.mulf %602, %575 : vector<8x128xf32>
    %614 = arith.mulf %594, %604 : vector<8x128xf32>
    %615 = arith.addf %613, %614 : vector<8x128xf32>
    %616 = math.tanh %615 : vector<8x128xf32>
    %617 = arith.mulf %612, %616 : vector<8x128xf32>
    %618 = arith.index_cast %581 : i32 to index
    %c0_223 = arith.constant 0 : index
    %619 = vector.load %arg13[%618, %c0_223] : memref<64x128xf32, #tpu.memory_space<vmem>>, vector<8x128xf32>
    tpu.vector_store %arg13[%618, %c0_223], %617 {strides = array<i32>} : memref<64x128xf32, #tpu.memory_space<vmem>>, vector<8x128xf32>,
    %c7_i32_224 = arith.constant 7 : i32
    %c8_i32_225 = arith.constant 8 : i32
    %620 = arith.muli %c7_i32_224, %c8_i32_225 : i32
    %621 = tpu.assume_multiple %620, 8 : i32
    %622 = arith.index_cast %621 : i32 to index
    %c0_226 = arith.constant 0 : index
    %623 = vector.load %arg14[%622, %c0_226] : memref<64x512xf32, #tpu.memory_space<vmem>>, vector<8x512xf32>
    %624 = arith.truncf %617 : vector<8x128xf32> to vector<8x128xbf16>
    %cst_227 = arith.constant dense<0.000000e+00> : vector<8x512xf32>
    %625 = tpu.matmul %624, %338, %cst_227 {dimension_numbers = #tpu.dot_dimension_numbers<[1], [0], [0], [1], [0, 0, 1, 1], [], []>} : vector<8x128xbf16>, vector<128x512xbf16>, vector<8x512xf32> -> vector<8x512xf32>
    %626 = arith.addf %623, %625 : vector<8x512xf32>
    %627 = vector.extract_strided_slice %626 {offsets = [0, 0], sizes = [8, 128], strides = [1, 1]} : vector<8x512xf32> to vector<8x128xf32>
    %cst_228 = arith.constant 5.000000e-01 : f32
    %628 = vector.broadcast %cst_228 : f32 to vector<8x128xf32>
    %629 = arith.mulf %628, %627 : vector<8x128xf32>
    %630 = math.tanh %629 : vector<8x128xf32>
    %cst_229 = arith.constant 5.000000e-01 : f32
    %631 = vector.broadcast %cst_229 : f32 to vector<8x128xf32>
    %632 = arith.mulf %631, %630 : vector<8x128xf32>
    %cst_230 = arith.constant 5.000000e-01 : f32
    %633 = vector.broadcast %cst_230 : f32 to vector<8x128xf32>
    %634 = arith.addf %632, %633 : vector<8x128xf32>
    %635 = vector.extract_strided_slice %626 {offsets = [0, 128], sizes = [8, 128], strides = [1, 1]} : vector<8x512xf32> to vector<8x128xf32>
    %cst_231 = arith.constant 5.000000e-01 : f32
    %636 = vector.broadcast %cst_231 : f32 to vector<8x128xf32>
    %637 = arith.mulf %636, %635 : vector<8x128xf32>
    %638 = math.tanh %637 : vector<8x128xf32>
    %cst_232 = arith.constant 5.000000e-01 : f32
    %639 = vector.broadcast %cst_232 : f32 to vector<8x128xf32>
    %640 = arith.mulf %639, %638 : vector<8x128xf32>
    %cst_233 = arith.constant 5.000000e-01 : f32
    %641 = vector.broadcast %cst_233 : f32 to vector<8x128xf32>
    %642 = arith.addf %640, %641 : vector<8x128xf32>
    %643 = vector.extract_strided_slice %626 {offsets = [0, 256], sizes = [8, 128], strides = [1, 1]} : vector<8x512xf32> to vector<8x128xf32>
    %644 = math.tanh %643 : vector<8x128xf32>
    %645 = vector.extract_strided_slice %626 {offsets = [0, 384], sizes = [8, 128], strides = [1, 1]} : vector<8x512xf32> to vector<8x128xf32>
    %cst_234 = arith.constant 5.000000e-01 : f32
    %646 = vector.broadcast %cst_234 : f32 to vector<8x128xf32>
    %647 = arith.mulf %646, %645 : vector<8x128xf32>
    %648 = math.tanh %647 : vector<8x128xf32>
    %cst_235 = arith.constant 5.000000e-01 : f32
    %649 = vector.broadcast %cst_235 : f32 to vector<8x128xf32>
    %650 = arith.mulf %649, %648 : vector<8x128xf32>
    %cst_236 = arith.constant 5.000000e-01 : f32
    %651 = vector.broadcast %cst_236 : f32 to vector<8x128xf32>
    %652 = arith.addf %650, %651 : vector<8x128xf32>
    %653 = arith.mulf %642, %615 : vector<8x128xf32>
    %654 = arith.mulf %634, %644 : vector<8x128xf32>
    %655 = arith.addf %653, %654 : vector<8x128xf32>
    %656 = math.tanh %655 : vector<8x128xf32>
    %657 = arith.mulf %652, %656 : vector<8x128xf32>
    %658 = arith.index_cast %621 : i32 to index
    %c0_237 = arith.constant 0 : index
    %659 = vector.load %arg13[%658, %c0_237] : memref<64x128xf32, #tpu.memory_space<vmem>>, vector<8x128xf32>
    tpu.vector_store %arg13[%658, %c0_237], %657 {strides = array<i32>} : memref<64x128xf32, #tpu.memory_space<vmem>>, vector<8x128xf32>,
    %c8_i32_238 = arith.constant 8 : i32
    %c0_239 = arith.constant 0 : index
    %c0_240 = arith.constant 0 : index
    %660 = vector.load %arg13[%c0_239, %c0_240] : memref<64x128xf32, #tpu.memory_space<vmem>>, vector<64x128xf32>
    %661 = arith.truncf %660 : vector<64x128xf32> to vector<64x128xbf16>
    %c0_241 = arith.constant 0 : index
    %c0_242 = arith.constant 0 : index
    %662 = vector.load %arg7[%c0_241, %c0_242] : memref<128x512xbf16, #tpu.memory_space<vmem>>, vector<128x512xbf16>
    %cst_243 = arith.constant dense<0.000000e+00> : vector<64x512xf32>
    %663 = tpu.matmul %661, %662, %cst_243 {dimension_numbers = #tpu.dot_dimension_numbers<[1], [0], [0], [1], [0, 0, 1, 1], [], []>} : vector<64x128xbf16>, vector<128x512xbf16>, vector<64x512xf32> -> vector<64x512xf32>
    %c0_244 = arith.constant 0 : index
    %c0_245 = arith.constant 0 : index
    %664 = vector.load %arg9[%c0_244, %c0_245] : memref<1x512xf32, #tpu.memory_space<vmem>>, vector<1x512xf32>
    %665 = vector.broadcast %664 : vector<1x512xf32> to vector<64x512xf32>
    %666 = arith.addf %663, %665 : vector<64x512xf32>
    %c0_246 = arith.constant 0 : index
    %c0_247 = arith.constant 0 : index
    %667 = vector.load %arg14[%c0_246, %c0_247] : memref<64x512xf32, #tpu.memory_space<vmem>>, vector<64x512xf32>
    tpu.vector_store %arg14[%c0_246, %c0_247], %666 {strides = array<i32>} : memref<64x512xf32, #tpu.memory_space<vmem>>, vector<64x512xf32>,
    %c0_248 = arith.constant 0 : index
    %c0_249 = arith.constant 0 : index
    %668 = vector.load %arg8[%c0_248, %c0_249] : memref<128x512xbf16, #tpu.memory_space<vmem>>, vector<128x512xbf16>
    %cst_250 = arith.constant 0.000000e+00 : f32
    %669 = vector.broadcast %cst_250 : f32 to vector<8x128xf32>
    %c0_i32_251 = arith.constant 0 : i32
    %c8_i32_252 = arith.constant 8 : i32
    %670 = arith.muli %c0_i32_251, %c8_i32_252 : i32
    %671 = tpu.assume_multiple %670, 8 : i32
    %672 = arith.index_cast %671 : i32 to index
    %c0_253 = arith.constant 0 : index
    %673 = vector.load %arg14[%672, %c0_253] : memref<64x512xf32, #tpu.memory_space<vmem>>, vector<8x512xf32>
    %674 = arith.truncf %669 : vector<8x128xf32> to vector<8x128xbf16>
    %cst_254 = arith.constant dense<0.000000e+00> : vector<8x512xf32>
    %675 = tpu.matmul %674, %668, %cst_254 {dimension_numbers = #tpu.dot_dimension_numbers<[1], [0], [0], [1], [0, 0, 1, 1], [], []>} : vector<8x128xbf16>, vector<128x512xbf16>, vector<8x512xf32> -> vector<8x512xf32>
    %676 = arith.addf %673, %675 : vector<8x512xf32>
    %677 = vector.extract_strided_slice %676 {offsets = [0, 0], sizes = [8, 128], strides = [1, 1]} : vector<8x512xf32> to vector<8x128xf32>
    %cst_255 = arith.constant 5.000000e-01 : f32
    %678 = vector.broadcast %cst_255 : f32 to vector<8x128xf32>
    %679 = arith.mulf %678, %677 : vector<8x128xf32>
    %680 = math.tanh %679 : vector<8x128xf32>
    %cst_256 = arith.constant 5.000000e-01 : f32
    %681 = vector.broadcast %cst_256 : f32 to vector<8x128xf32>
    %682 = arith.mulf %681, %680 : vector<8x128xf32>
    %cst_257 = arith.constant 5.000000e-01 : f32
    %683 = vector.broadcast %cst_257 : f32 to vector<8x128xf32>
    %684 = arith.addf %682, %683 : vector<8x128xf32>
    %685 = vector.extract_strided_slice %676 {offsets = [0, 128], sizes = [8, 128], strides = [1, 1]} : vector<8x512xf32> to vector<8x128xf32>
    %cst_258 = arith.constant 5.000000e-01 : f32
    %686 = vector.broadcast %cst_258 : f32 to vector<8x128xf32>
    %687 = arith.mulf %686, %685 : vector<8x128xf32>
    %688 = math.tanh %687 : vector<8x128xf32>
    %cst_259 = arith.constant 5.000000e-01 : f32
    %689 = vector.broadcast %cst_259 : f32 to vector<8x128xf32>
    %690 = arith.mulf %689, %688 : vector<8x128xf32>
    %cst_260 = arith.constant 5.000000e-01 : f32
    %691 = vector.broadcast %cst_260 : f32 to vector<8x128xf32>
    %692 = arith.addf %690, %691 : vector<8x128xf32>
    %693 = vector.extract_strided_slice %676 {offsets = [0, 256], sizes = [8, 128], strides = [1, 1]} : vector<8x512xf32> to vector<8x128xf32>
    %694 = math.tanh %693 : vector<8x128xf32>
    %695 = vector.extract_strided_slice %676 {offsets = [0, 384], sizes = [8, 128], strides = [1, 1]} : vector<8x512xf32> to vector<8x128xf32>
    %cst_261 = arith.constant 5.000000e-01 : f32
    %696 = vector.broadcast %cst_261 : f32 to vector<8x128xf32>
    %697 = arith.mulf %696, %695 : vector<8x128xf32>
    %698 = math.tanh %697 : vector<8x128xf32>
    %cst_262 = arith.constant 5.000000e-01 : f32
    %699 = vector.broadcast %cst_262 : f32 to vector<8x128xf32>
    %700 = arith.mulf %699, %698 : vector<8x128xf32>
    %cst_263 = arith.constant 5.000000e-01 : f32
    %701 = vector.broadcast %cst_263 : f32 to vector<8x128xf32>
    %702 = arith.addf %700, %701 : vector<8x128xf32>
    %703 = arith.mulf %692, %669 : vector<8x128xf32>
    %704 = arith.mulf %684, %694 : vector<8x128xf32>
    %705 = arith.addf %703, %704 : vector<8x128xf32>
    %706 = math.tanh %705 : vector<8x128xf32>
    %707 = arith.mulf %702, %706 : vector<8x128xf32>
    %c1_i32_264 = arith.constant 1 : i32
    %c8_i32_265 = arith.constant 8 : i32
    %708 = arith.muli %c1_i32_264, %c8_i32_265 : i32
    %709 = tpu.assume_multiple %708, 8 : i32
    %710 = arith.index_cast %709 : i32 to index
    %c0_266 = arith.constant 0 : index
    %711 = vector.load %arg14[%710, %c0_266] : memref<64x512xf32, #tpu.memory_space<vmem>>, vector<8x512xf32>
    %712 = arith.truncf %707 : vector<8x128xf32> to vector<8x128xbf16>
    %cst_267 = arith.constant dense<0.000000e+00> : vector<8x512xf32>
    %713 = tpu.matmul %712, %668, %cst_267 {dimension_numbers = #tpu.dot_dimension_numbers<[1], [0], [0], [1], [0, 0, 1, 1], [], []>} : vector<8x128xbf16>, vector<128x512xbf16>, vector<8x512xf32> -> vector<8x512xf32>
    %714 = arith.addf %711, %713 : vector<8x512xf32>
    %715 = vector.extract_strided_slice %714 {offsets = [0, 0], sizes = [8, 128], strides = [1, 1]} : vector<8x512xf32> to vector<8x128xf32>
    %cst_268 = arith.constant 5.000000e-01 : f32
    %716 = vector.broadcast %cst_268 : f32 to vector<8x128xf32>
    %717 = arith.mulf %716, %715 : vector<8x128xf32>
    %718 = math.tanh %717 : vector<8x128xf32>
    %cst_269 = arith.constant 5.000000e-01 : f32
    %719 = vector.broadcast %cst_269 : f32 to vector<8x128xf32>
    %720 = arith.mulf %719, %718 : vector<8x128xf32>
    %cst_270 = arith.constant 5.000000e-01 : f32
    %721 = vector.broadcast %cst_270 : f32 to vector<8x128xf32>
    %722 = arith.addf %720, %721 : vector<8x128xf32>
    %723 = vector.extract_strided_slice %714 {offsets = [0, 128], sizes = [8, 128], strides = [1, 1]} : vector<8x512xf32> to vector<8x128xf32>
    %cst_271 = arith.constant 5.000000e-01 : f32
    %724 = vector.broadcast %cst_271 : f32 to vector<8x128xf32>
    %725 = arith.mulf %724, %723 : vector<8x128xf32>
    %726 = math.tanh %725 : vector<8x128xf32>
    %cst_272 = arith.constant 5.000000e-01 : f32
    %727 = vector.broadcast %cst_272 : f32 to vector<8x128xf32>
    %728 = arith.mulf %727, %726 : vector<8x128xf32>
    %cst_273 = arith.constant 5.000000e-01 : f32
    %729 = vector.broadcast %cst_273 : f32 to vector<8x128xf32>
    %730 = arith.addf %728, %729 : vector<8x128xf32>
    %731 = vector.extract_strided_slice %714 {offsets = [0, 256], sizes = [8, 128], strides = [1, 1]} : vector<8x512xf32> to vector<8x128xf32>
    %732 = math.tanh %731 : vector<8x128xf32>
    %733 = vector.extract_strided_slice %714 {offsets = [0, 384], sizes = [8, 128], strides = [1, 1]} : vector<8x512xf32> to vector<8x128xf32>
    %cst_274 = arith.constant 5.000000e-01 : f32
    %734 = vector.broadcast %cst_274 : f32 to vector<8x128xf32>
    %735 = arith.mulf %734, %733 : vector<8x128xf32>
    %736 = math.tanh %735 : vector<8x128xf32>
    %cst_275 = arith.constant 5.000000e-01 : f32
    %737 = vector.broadcast %cst_275 : f32 to vector<8x128xf32>
    %738 = arith.mulf %737, %736 : vector<8x128xf32>
    %cst_276 = arith.constant 5.000000e-01 : f32
    %739 = vector.broadcast %cst_276 : f32 to vector<8x128xf32>
    %740 = arith.addf %738, %739 : vector<8x128xf32>
    %741 = arith.mulf %730, %705 : vector<8x128xf32>
    %742 = arith.mulf %722, %732 : vector<8x128xf32>
    %743 = arith.addf %741, %742 : vector<8x128xf32>
    %744 = math.tanh %743 : vector<8x128xf32>
    %745 = arith.mulf %740, %744 : vector<8x128xf32>
    %c2_i32_277 = arith.constant 2 : i32
    %c8_i32_278 = arith.constant 8 : i32
    %746 = arith.muli %c2_i32_277, %c8_i32_278 : i32
    %747 = tpu.assume_multiple %746, 8 : i32
    %748 = arith.index_cast %747 : i32 to index
    %c0_279 = arith.constant 0 : index
    %749 = vector.load %arg14[%748, %c0_279] : memref<64x512xf32, #tpu.memory_space<vmem>>, vector<8x512xf32>
    %750 = arith.truncf %745 : vector<8x128xf32> to vector<8x128xbf16>
    %cst_280 = arith.constant dense<0.000000e+00> : vector<8x512xf32>
    %751 = tpu.matmul %750, %668, %cst_280 {dimension_numbers = #tpu.dot_dimension_numbers<[1], [0], [0], [1], [0, 0, 1, 1], [], []>} : vector<8x128xbf16>, vector<128x512xbf16>, vector<8x512xf32> -> vector<8x512xf32>
    %752 = arith.addf %749, %751 : vector<8x512xf32>
    %753 = vector.extract_strided_slice %752 {offsets = [0, 0], sizes = [8, 128], strides = [1, 1]} : vector<8x512xf32> to vector<8x128xf32>
    %cst_281 = arith.constant 5.000000e-01 : f32
    %754 = vector.broadcast %cst_281 : f32 to vector<8x128xf32>
    %755 = arith.mulf %754, %753 : vector<8x128xf32>
    %756 = math.tanh %755 : vector<8x128xf32>
    %cst_282 = arith.constant 5.000000e-01 : f32
    %757 = vector.broadcast %cst_282 : f32 to vector<8x128xf32>
    %758 = arith.mulf %757, %756 : vector<8x128xf32>
    %cst_283 = arith.constant 5.000000e-01 : f32
    %759 = vector.broadcast %cst_283 : f32 to vector<8x128xf32>
    %760 = arith.addf %758, %759 : vector<8x128xf32>
    %761 = vector.extract_strided_slice %752 {offsets = [0, 128], sizes = [8, 128], strides = [1, 1]} : vector<8x512xf32> to vector<8x128xf32>
    %cst_284 = arith.constant 5.000000e-01 : f32
    %762 = vector.broadcast %cst_284 : f32 to vector<8x128xf32>
    %763 = arith.mulf %762, %761 : vector<8x128xf32>
    %764 = math.tanh %763 : vector<8x128xf32>
    %cst_285 = arith.constant 5.000000e-01 : f32
    %765 = vector.broadcast %cst_285 : f32 to vector<8x128xf32>
    %766 = arith.mulf %765, %764 : vector<8x128xf32>
    %cst_286 = arith.constant 5.000000e-01 : f32
    %767 = vector.broadcast %cst_286 : f32 to vector<8x128xf32>
    %768 = arith.addf %766, %767 : vector<8x128xf32>
    %769 = vector.extract_strided_slice %752 {offsets = [0, 256], sizes = [8, 128], strides = [1, 1]} : vector<8x512xf32> to vector<8x128xf32>
    %770 = math.tanh %769 : vector<8x128xf32>
    %771 = vector.extract_strided_slice %752 {offsets = [0, 384], sizes = [8, 128], strides = [1, 1]} : vector<8x512xf32> to vector<8x128xf32>
    %cst_287 = arith.constant 5.000000e-01 : f32
    %772 = vector.broadcast %cst_287 : f32 to vector<8x128xf32>
    %773 = arith.mulf %772, %771 : vector<8x128xf32>
    %774 = math.tanh %773 : vector<8x128xf32>
    %cst_288 = arith.constant 5.000000e-01 : f32
    %775 = vector.broadcast %cst_288 : f32 to vector<8x128xf32>
    %776 = arith.mulf %775, %774 : vector<8x128xf32>
    %cst_289 = arith.constant 5.000000e-01 : f32
    %777 = vector.broadcast %cst_289 : f32 to vector<8x128xf32>
    %778 = arith.addf %776, %777 : vector<8x128xf32>
    %779 = arith.mulf %768, %743 : vector<8x128xf32>
    %780 = arith.mulf %760, %770 : vector<8x128xf32>
    %781 = arith.addf %779, %780 : vector<8x128xf32>
    %782 = math.tanh %781 : vector<8x128xf32>
    %783 = arith.mulf %778, %782 : vector<8x128xf32>
    %c3_i32_290 = arith.constant 3 : i32
    %c8_i32_291 = arith.constant 8 : i32
    %784 = arith.muli %c3_i32_290, %c8_i32_291 : i32
    %785 = tpu.assume_multiple %784, 8 : i32
    %786 = arith.index_cast %785 : i32 to index
    %c0_292 = arith.constant 0 : index
    %787 = vector.load %arg14[%786, %c0_292] : memref<64x512xf32, #tpu.memory_space<vmem>>, vector<8x512xf32>
    %788 = arith.truncf %783 : vector<8x128xf32> to vector<8x128xbf16>
    %cst_293 = arith.constant dense<0.000000e+00> : vector<8x512xf32>
    %789 = tpu.matmul %788, %668, %cst_293 {dimension_numbers = #tpu.dot_dimension_numbers<[1], [0], [0], [1], [0, 0, 1, 1], [], []>} : vector<8x128xbf16>, vector<128x512xbf16>, vector<8x512xf32> -> vector<8x512xf32>
    %790 = arith.addf %787, %789 : vector<8x512xf32>
    %791 = vector.extract_strided_slice %790 {offsets = [0, 0], sizes = [8, 128], strides = [1, 1]} : vector<8x512xf32> to vector<8x128xf32>
    %cst_294 = arith.constant 5.000000e-01 : f32
    %792 = vector.broadcast %cst_294 : f32 to vector<8x128xf32>
    %793 = arith.mulf %792, %791 : vector<8x128xf32>
    %794 = math.tanh %793 : vector<8x128xf32>
    %cst_295 = arith.constant 5.000000e-01 : f32
    %795 = vector.broadcast %cst_295 : f32 to vector<8x128xf32>
    %796 = arith.mulf %795, %794 : vector<8x128xf32>
    %cst_296 = arith.constant 5.000000e-01 : f32
    %797 = vector.broadcast %cst_296 : f32 to vector<8x128xf32>
    %798 = arith.addf %796, %797 : vector<8x128xf32>
    %799 = vector.extract_strided_slice %790 {offsets = [0, 128], sizes = [8, 128], strides = [1, 1]} : vector<8x512xf32> to vector<8x128xf32>
    %cst_297 = arith.constant 5.000000e-01 : f32
    %800 = vector.broadcast %cst_297 : f32 to vector<8x128xf32>
    %801 = arith.mulf %800, %799 : vector<8x128xf32>
    %802 = math.tanh %801 : vector<8x128xf32>
    %cst_298 = arith.constant 5.000000e-01 : f32
    %803 = vector.broadcast %cst_298 : f32 to vector<8x128xf32>
    %804 = arith.mulf %803, %802 : vector<8x128xf32>
    %cst_299 = arith.constant 5.000000e-01 : f32
    %805 = vector.broadcast %cst_299 : f32 to vector<8x128xf32>
    %806 = arith.addf %804, %805 : vector<8x128xf32>
    %807 = vector.extract_strided_slice %790 {offsets = [0, 256], sizes = [8, 128], strides = [1, 1]} : vector<8x512xf32> to vector<8x128xf32>
    %808 = math.tanh %807 : vector<8x128xf32>
    %809 = vector.extract_strided_slice %790 {offsets = [0, 384], sizes = [8, 128], strides = [1, 1]} : vector<8x512xf32> to vector<8x128xf32>
    %cst_300 = arith.constant 5.000000e-01 : f32
    %810 = vector.broadcast %cst_300 : f32 to vector<8x128xf32>
    %811 = arith.mulf %810, %809 : vector<8x128xf32>
    %812 = math.tanh %811 : vector<8x128xf32>
    %cst_301 = arith.constant 5.000000e-01 : f32
    %813 = vector.broadcast %cst_301 : f32 to vector<8x128xf32>
    %814 = arith.mulf %813, %812 : vector<8x128xf32>
    %cst_302 = arith.constant 5.000000e-01 : f32
    %815 = vector.broadcast %cst_302 : f32 to vector<8x128xf32>
    %816 = arith.addf %814, %815 : vector<8x128xf32>
    %817 = arith.mulf %806, %781 : vector<8x128xf32>
    %818 = arith.mulf %798, %808 : vector<8x128xf32>
    %819 = arith.addf %817, %818 : vector<8x128xf32>
    %820 = math.tanh %819 : vector<8x128xf32>
    %821 = arith.mulf %816, %820 : vector<8x128xf32>
    %c4_i32_303 = arith.constant 4 : i32
    %c8_i32_304 = arith.constant 8 : i32
    %822 = arith.muli %c4_i32_303, %c8_i32_304 : i32
    %823 = tpu.assume_multiple %822, 8 : i32
    %824 = arith.index_cast %823 : i32 to index
    %c0_305 = arith.constant 0 : index
    %825 = vector.load %arg14[%824, %c0_305] : memref<64x512xf32, #tpu.memory_space<vmem>>, vector<8x512xf32>
    %826 = arith.truncf %821 : vector<8x128xf32> to vector<8x128xbf16>
    %cst_306 = arith.constant dense<0.000000e+00> : vector<8x512xf32>
    %827 = tpu.matmul %826, %668, %cst_306 {dimension_numbers = #tpu.dot_dimension_numbers<[1], [0], [0], [1], [0, 0, 1, 1], [], []>} : vector<8x128xbf16>, vector<128x512xbf16>, vector<8x512xf32> -> vector<8x512xf32>
    %828 = arith.addf %825, %827 : vector<8x512xf32>
    %829 = vector.extract_strided_slice %828 {offsets = [0, 0], sizes = [8, 128], strides = [1, 1]} : vector<8x512xf32> to vector<8x128xf32>
    %cst_307 = arith.constant 5.000000e-01 : f32
    %830 = vector.broadcast %cst_307 : f32 to vector<8x128xf32>
    %831 = arith.mulf %830, %829 : vector<8x128xf32>
    %832 = math.tanh %831 : vector<8x128xf32>
    %cst_308 = arith.constant 5.000000e-01 : f32
    %833 = vector.broadcast %cst_308 : f32 to vector<8x128xf32>
    %834 = arith.mulf %833, %832 : vector<8x128xf32>
    %cst_309 = arith.constant 5.000000e-01 : f32
    %835 = vector.broadcast %cst_309 : f32 to vector<8x128xf32>
    %836 = arith.addf %834, %835 : vector<8x128xf32>
    %837 = vector.extract_strided_slice %828 {offsets = [0, 128], sizes = [8, 128], strides = [1, 1]} : vector<8x512xf32> to vector<8x128xf32>
    %cst_310 = arith.constant 5.000000e-01 : f32
    %838 = vector.broadcast %cst_310 : f32 to vector<8x128xf32>
    %839 = arith.mulf %838, %837 : vector<8x128xf32>
    %840 = math.tanh %839 : vector<8x128xf32>
    %cst_311 = arith.constant 5.000000e-01 : f32
    %841 = vector.broadcast %cst_311 : f32 to vector<8x128xf32>
    %842 = arith.mulf %841, %840 : vector<8x128xf32>
    %cst_312 = arith.constant 5.000000e-01 : f32
    %843 = vector.broadcast %cst_312 : f32 to vector<8x128xf32>
    %844 = arith.addf %842, %843 : vector<8x128xf32>
    %845 = vector.extract_strided_slice %828 {offsets = [0, 256], sizes = [8, 128], strides = [1, 1]} : vector<8x512xf32> to vector<8x128xf32>
    %846 = math.tanh %845 : vector<8x128xf32>
    %847 = vector.extract_strided_slice %828 {offsets = [0, 384], sizes = [8, 128], strides = [1, 1]} : vector<8x512xf32> to vector<8x128xf32>
    %cst_313 = arith.constant 5.000000e-01 : f32
    %848 = vector.broadcast %cst_313 : f32 to vector<8x128xf32>
    %849 = arith.mulf %848, %847 : vector<8x128xf32>
    %850 = math.tanh %849 : vector<8x128xf32>
    %cst_314 = arith.constant 5.000000e-01 : f32
    %851 = vector.broadcast %cst_314 : f32 to vector<8x128xf32>
    %852 = arith.mulf %851, %850 : vector<8x128xf32>
    %cst_315 = arith.constant 5.000000e-01 : f32
    %853 = vector.broadcast %cst_315 : f32 to vector<8x128xf32>
    %854 = arith.addf %852, %853 : vector<8x128xf32>
    %855 = arith.mulf %844, %819 : vector<8x128xf32>
    %856 = arith.mulf %836, %846 : vector<8x128xf32>
    %857 = arith.addf %855, %856 : vector<8x128xf32>
    %858 = math.tanh %857 : vector<8x128xf32>
    %859 = arith.mulf %854, %858 : vector<8x128xf32>
    %c5_i32_316 = arith.constant 5 : i32
    %c8_i32_317 = arith.constant 8 : i32
    %860 = arith.muli %c5_i32_316, %c8_i32_317 : i32
    %861 = tpu.assume_multiple %860, 8 : i32
    %862 = arith.index_cast %861 : i32 to index
    %c0_318 = arith.constant 0 : index
    %863 = vector.load %arg14[%862, %c0_318] : memref<64x512xf32, #tpu.memory_space<vmem>>, vector<8x512xf32>
    %864 = arith.truncf %859 : vector<8x128xf32> to vector<8x128xbf16>
    %cst_319 = arith.constant dense<0.000000e+00> : vector<8x512xf32>
    %865 = tpu.matmul %864, %668, %cst_319 {dimension_numbers = #tpu.dot_dimension_numbers<[1], [0], [0], [1], [0, 0, 1, 1], [], []>} : vector<8x128xbf16>, vector<128x512xbf16>, vector<8x512xf32> -> vector<8x512xf32>
    %866 = arith.addf %863, %865 : vector<8x512xf32>
    %867 = vector.extract_strided_slice %866 {offsets = [0, 0], sizes = [8, 128], strides = [1, 1]} : vector<8x512xf32> to vector<8x128xf32>
    %cst_320 = arith.constant 5.000000e-01 : f32
    %868 = vector.broadcast %cst_320 : f32 to vector<8x128xf32>
    %869 = arith.mulf %868, %867 : vector<8x128xf32>
    %870 = math.tanh %869 : vector<8x128xf32>
    %cst_321 = arith.constant 5.000000e-01 : f32
    %871 = vector.broadcast %cst_321 : f32 to vector<8x128xf32>
    %872 = arith.mulf %871, %870 : vector<8x128xf32>
    %cst_322 = arith.constant 5.000000e-01 : f32
    %873 = vector.broadcast %cst_322 : f32 to vector<8x128xf32>
    %874 = arith.addf %872, %873 : vector<8x128xf32>
    %875 = vector.extract_strided_slice %866 {offsets = [0, 128], sizes = [8, 128], strides = [1, 1]} : vector<8x512xf32> to vector<8x128xf32>
    %cst_323 = arith.constant 5.000000e-01 : f32
    %876 = vector.broadcast %cst_323 : f32 to vector<8x128xf32>
    %877 = arith.mulf %876, %875 : vector<8x128xf32>
    %878 = math.tanh %877 : vector<8x128xf32>
    %cst_324 = arith.constant 5.000000e-01 : f32
    %879 = vector.broadcast %cst_324 : f32 to vector<8x128xf32>
    %880 = arith.mulf %879, %878 : vector<8x128xf32>
    %cst_325 = arith.constant 5.000000e-01 : f32
    %881 = vector.broadcast %cst_325 : f32 to vector<8x128xf32>
    %882 = arith.addf %880, %881 : vector<8x128xf32>
    %883 = vector.extract_strided_slice %866 {offsets = [0, 256], sizes = [8, 128], strides = [1, 1]} : vector<8x512xf32> to vector<8x128xf32>
    %884 = math.tanh %883 : vector<8x128xf32>
    %885 = vector.extract_strided_slice %866 {offsets = [0, 384], sizes = [8, 128], strides = [1, 1]} : vector<8x512xf32> to vector<8x128xf32>
    %cst_326 = arith.constant 5.000000e-01 : f32
    %886 = vector.broadcast %cst_326 : f32 to vector<8x128xf32>
    %887 = arith.mulf %886, %885 : vector<8x128xf32>
    %888 = math.tanh %887 : vector<8x128xf32>
    %cst_327 = arith.constant 5.000000e-01 : f32
    %889 = vector.broadcast %cst_327 : f32 to vector<8x128xf32>
    %890 = arith.mulf %889, %888 : vector<8x128xf32>
    %cst_328 = arith.constant 5.000000e-01 : f32
    %891 = vector.broadcast %cst_328 : f32 to vector<8x128xf32>
    %892 = arith.addf %890, %891 : vector<8x128xf32>
    %893 = arith.mulf %882, %857 : vector<8x128xf32>
    %894 = arith.mulf %874, %884 : vector<8x128xf32>
    %895 = arith.addf %893, %894 : vector<8x128xf32>
    %896 = math.tanh %895 : vector<8x128xf32>
    %897 = arith.mulf %892, %896 : vector<8x128xf32>
    %c6_i32_329 = arith.constant 6 : i32
    %c8_i32_330 = arith.constant 8 : i32
    %898 = arith.muli %c6_i32_329, %c8_i32_330 : i32
    %899 = tpu.assume_multiple %898, 8 : i32
    %900 = arith.index_cast %899 : i32 to index
    %c0_331 = arith.constant 0 : index
    %901 = vector.load %arg14[%900, %c0_331] : memref<64x512xf32, #tpu.memory_space<vmem>>, vector<8x512xf32>
    %902 = arith.truncf %897 : vector<8x128xf32> to vector<8x128xbf16>
    %cst_332 = arith.constant dense<0.000000e+00> : vector<8x512xf32>
    %903 = tpu.matmul %902, %668, %cst_332 {dimension_numbers = #tpu.dot_dimension_numbers<[1], [0], [0], [1], [0, 0, 1, 1], [], []>} : vector<8x128xbf16>, vector<128x512xbf16>, vector<8x512xf32> -> vector<8x512xf32>
    %904 = arith.addf %901, %903 : vector<8x512xf32>
    %905 = vector.extract_strided_slice %904 {offsets = [0, 0], sizes = [8, 128], strides = [1, 1]} : vector<8x512xf32> to vector<8x128xf32>
    %cst_333 = arith.constant 5.000000e-01 : f32
    %906 = vector.broadcast %cst_333 : f32 to vector<8x128xf32>
    %907 = arith.mulf %906, %905 : vector<8x128xf32>
    %908 = math.tanh %907 : vector<8x128xf32>
    %cst_334 = arith.constant 5.000000e-01 : f32
    %909 = vector.broadcast %cst_334 : f32 to vector<8x128xf32>
    %910 = arith.mulf %909, %908 : vector<8x128xf32>
    %cst_335 = arith.constant 5.000000e-01 : f32
    %911 = vector.broadcast %cst_335 : f32 to vector<8x128xf32>
    %912 = arith.addf %910, %911 : vector<8x128xf32>
    %913 = vector.extract_strided_slice %904 {offsets = [0, 128], sizes = [8, 128], strides = [1, 1]} : vector<8x512xf32> to vector<8x128xf32>
    %cst_336 = arith.constant 5.000000e-01 : f32
    %914 = vector.broadcast %cst_336 : f32 to vector<8x128xf32>
    %915 = arith.mulf %914, %913 : vector<8x128xf32>
    %916 = math.tanh %915 : vector<8x128xf32>
    %cst_337 = arith.constant 5.000000e-01 : f32
    %917 = vector.broadcast %cst_337 : f32 to vector<8x128xf32>
    %918 = arith.mulf %917, %916 : vector<8x128xf32>
    %cst_338 = arith.constant 5.000000e-01 : f32
    %919 = vector.broadcast %cst_338 : f32 to vector<8x128xf32>
    %920 = arith.addf %918, %919 : vector<8x128xf32>
    %921 = vector.extract_strided_slice %904 {offsets = [0, 256], sizes = [8, 128], strides = [1, 1]} : vector<8x512xf32> to vector<8x128xf32>
    %922 = math.tanh %921 : vector<8x128xf32>
    %923 = vector.extract_strided_slice %904 {offsets = [0, 384], sizes = [8, 128], strides = [1, 1]} : vector<8x512xf32> to vector<8x128xf32>
    %cst_339 = arith.constant 5.000000e-01 : f32
    %924 = vector.broadcast %cst_339 : f32 to vector<8x128xf32>
    %925 = arith.mulf %924, %923 : vector<8x128xf32>
    %926 = math.tanh %925 : vector<8x128xf32>
    %cst_340 = arith.constant 5.000000e-01 : f32
    %927 = vector.broadcast %cst_340 : f32 to vector<8x128xf32>
    %928 = arith.mulf %927, %926 : vector<8x128xf32>
    %cst_341 = arith.constant 5.000000e-01 : f32
    %929 = vector.broadcast %cst_341 : f32 to vector<8x128xf32>
    %930 = arith.addf %928, %929 : vector<8x128xf32>
    %931 = arith.mulf %920, %895 : vector<8x128xf32>
    %932 = arith.mulf %912, %922 : vector<8x128xf32>
    %933 = arith.addf %931, %932 : vector<8x128xf32>
    %934 = math.tanh %933 : vector<8x128xf32>
    %935 = arith.mulf %930, %934 : vector<8x128xf32>
    %c7_i32_342 = arith.constant 7 : i32
    %c8_i32_343 = arith.constant 8 : i32
    %936 = arith.muli %c7_i32_342, %c8_i32_343 : i32
    %937 = tpu.assume_multiple %936, 8 : i32
    %938 = arith.index_cast %937 : i32 to index
    %c0_344 = arith.constant 0 : index
    %939 = vector.load %arg14[%938, %c0_344] : memref<64x512xf32, #tpu.memory_space<vmem>>, vector<8x512xf32>
    %940 = arith.truncf %935 : vector<8x128xf32> to vector<8x128xbf16>
    %cst_345 = arith.constant dense<0.000000e+00> : vector<8x512xf32>
    %941 = tpu.matmul %940, %668, %cst_345 {dimension_numbers = #tpu.dot_dimension_numbers<[1], [0], [0], [1], [0, 0, 1, 1], [], []>} : vector<8x128xbf16>, vector<128x512xbf16>, vector<8x512xf32> -> vector<8x512xf32>
    %942 = arith.addf %939, %941 : vector<8x512xf32>
    %943 = vector.extract_strided_slice %942 {offsets = [0, 0], sizes = [8, 128], strides = [1, 1]} : vector<8x512xf32> to vector<8x128xf32>
    %cst_346 = arith.constant 5.000000e-01 : f32
    %944 = vector.broadcast %cst_346 : f32 to vector<8x128xf32>
    %945 = arith.mulf %944, %943 : vector<8x128xf32>
    %946 = math.tanh %945 : vector<8x128xf32>
    %cst_347 = arith.constant 5.000000e-01 : f32
    %947 = vector.broadcast %cst_347 : f32 to vector<8x128xf32>
    %948 = arith.mulf %947, %946 : vector<8x128xf32>
    %cst_348 = arith.constant 5.000000e-01 : f32
    %949 = vector.broadcast %cst_348 : f32 to vector<8x128xf32>
    %950 = arith.addf %948, %949 : vector<8x128xf32>
    %951 = vector.extract_strided_slice %942 {offsets = [0, 128], sizes = [8, 128], strides = [1, 1]} : vector<8x512xf32> to vector<8x128xf32>
    %cst_349 = arith.constant 5.000000e-01 : f32
    %952 = vector.broadcast %cst_349 : f32 to vector<8x128xf32>
    %953 = arith.mulf %952, %951 : vector<8x128xf32>
    %954 = math.tanh %953 : vector<8x128xf32>
    %cst_350 = arith.constant 5.000000e-01 : f32
    %955 = vector.broadcast %cst_350 : f32 to vector<8x128xf32>
    %956 = arith.mulf %955, %954 : vector<8x128xf32>
    %cst_351 = arith.constant 5.000000e-01 : f32
    %957 = vector.broadcast %cst_351 : f32 to vector<8x128xf32>
    %958 = arith.addf %956, %957 : vector<8x128xf32>
    %959 = vector.extract_strided_slice %942 {offsets = [0, 256], sizes = [8, 128], strides = [1, 1]} : vector<8x512xf32> to vector<8x128xf32>
    %960 = math.tanh %959 : vector<8x128xf32>
    %961 = vector.extract_strided_slice %942 {offsets = [0, 384], sizes = [8, 128], strides = [1, 1]} : vector<8x512xf32> to vector<8x128xf32>
    %cst_352 = arith.constant 5.000000e-01 : f32
    %962 = vector.broadcast %cst_352 : f32 to vector<8x128xf32>
    %963 = arith.mulf %962, %961 : vector<8x128xf32>
    %964 = math.tanh %963 : vector<8x128xf32>
    %cst_353 = arith.constant 5.000000e-01 : f32
    %965 = vector.broadcast %cst_353 : f32 to vector<8x128xf32>
    %966 = arith.mulf %965, %964 : vector<8x128xf32>
    %cst_354 = arith.constant 5.000000e-01 : f32
    %967 = vector.broadcast %cst_354 : f32 to vector<8x128xf32>
    %968 = arith.addf %966, %967 : vector<8x128xf32>
    %969 = arith.mulf %958, %933 : vector<8x128xf32>
    %970 = arith.mulf %950, %960 : vector<8x128xf32>
    %971 = arith.addf %969, %970 : vector<8x128xf32>
    %972 = math.tanh %971 : vector<8x128xf32>
    %973 = arith.mulf %968, %972 : vector<8x128xf32>
    %c8_i32_355 = arith.constant 8 : i32
    %974 = arith.truncf %973 : vector<8x128xf32> to vector<8x128xbf16>
    %c0_356 = arith.constant 0 : index
    %c0_357 = arith.constant 0 : index
    %975 = vector.load %arg10[%c0_356, %c0_357] : memref<128x128xbf16, #tpu.memory_space<vmem>>, vector<128x128xbf16>
    %cst_358 = arith.constant dense<0.000000e+00> : vector<8x128xf32>
    %976 = tpu.matmul %974, %975, %cst_358 {dimension_numbers = #tpu.dot_dimension_numbers<[1], [0], [0], [1], [0, 0, 1, 1], [], []>} : vector<8x128xbf16>, vector<128x128xbf16>, vector<8x128xf32> -> vector<8x128xf32>
    %c0_359 = arith.constant 0 : index
    %c0_360 = arith.constant 0 : index
    %977 = vector.load %arg11[%c0_359, %c0_360] : memref<1x128xf32, #tpu.memory_space<vmem>>, vector<1x128xf32>
    %978 = vector.broadcast %977 : vector<1x128xf32> to vector<8x128xf32>
    %979 = arith.addf %976, %978 : vector<8x128xf32>
    %c0_361 = arith.constant 0 : index
    %c0_362 = arith.constant 0 : index
    %980 = vector.load %arg12[%c0_361, %c0_362] : memref<8x128xf32, #tpu.memory_space<vmem>>, vector<8x128xf32>
    tpu.vector_store %arg12[%c0_361, %c0_362], %979 {strides = array<i32>} : memref<8x128xf32, #tpu.memory_space<vmem>>, vector<8x128xf32>,
    return
  }
}

</mosaic_0001>

<llo_original>
// kernel: tpu_custom_call.1
$region0: #{tpu_custom_call.1}
  #allocation0 [shape = 'u32[]', space=smem, size = 0x4, offset = 0x4, fixed_abs, tag = 'smem constant byte address 0x4 - core index']
  #allocation1 [shape = 'u32[144,128]{1,0:T(1,128)}', space=vmem, size = 0x12000, scoped, tag = 'internal scratch']
  #allocation2 [shape = 'f32[64,128]{1,0:T(8,128)}', space=vmem, size = 0x8000, scoped, tag = 'scratch operand']
  #allocation3 [shape = 'f32[64,512]{1,0:T(8,128)}', space=vmem, size = 0x20000, scoped, tag = 'scratch operand']
  %s0 = inlined_call_operand.vmem [shape: f32[64,16], index: 0, kind: input, shape index: {}]
  %s1 = inlined_call_operand.vmem [shape: bf16[16,512], index: 1, kind: input, shape index: {}]
  %s2 = inlined_call_operand.hbm [shape: bf16[128,512], index: 2, kind: input, shape index: {}]
  %s3 = inlined_call_operand.hbm [shape: f32[1,512], index: 3, kind: input, shape index: {}]
  %s4 = inlined_call_operand.hbm [shape: bf16[128,512], index: 4, kind: input, shape index: {}]
  %s5 = inlined_call_operand.hbm [shape: bf16[128,512], index: 5, kind: input, shape index: {}]
  %s6 = inlined_call_operand.hbm [shape: f32[1,512], index: 6, kind: input, shape index: {}]
  %s7 = inlined_call_operand.hbm [shape: bf16[128,512], index: 7, kind: input, shape index: {}]
  %s8 = inlined_call_operand.hbm [shape: bf16[128,512], index: 8, kind: input, shape index: {}]
  %s9 = inlined_call_operand.hbm [shape: f32[1,512], index: 9, kind: input, shape index: {}]
  %s10 = inlined_call_operand.vmem [shape: bf16[128,128], index: 10, kind: input, shape index: {}]
  %s11 = inlined_call_operand.vmem [shape: f32[1,128], index: 11, kind: input, shape index: {}]
  %s12 = inlined_call_operand.hbm [shape: f32[8,128], index: 12, kind: output, shape index: {}]
  %s13 = sld [smem:[#allocation0]]
  $region90: #{tpu_custom_call.1} parent=0
    _
  %s15 = ssub.s32 1, %s13
  %s16 = scalar_select 0, %s15, %s13
  $region1: #{tpu_custom_call.1} parent=0
    #allocation4 [shape = 'u8[131072]{0}', space=vmem, size = 0x20000, scoped, tag = 'input window, operand 2, single buffered']
    #allocation5 [shape = 's32[1]{0}', space=sflag, size = 0x4, scoped, tag = 'scoped memory for tpu_custom_call.1']
    #allocation6 [shape = 's32[1]{0}', space=sflag, size = 0x4, scoped, tag = 'scoped memory for tpu_custom_call.1']
    #allocation7 [shape = 'u8[2048]{0}', space=vmem, size = 0x800, scoped, tag = 'input window, operand 3, single buffered']
    #allocation8 [shape = 's32[1]{0}', space=sflag, size = 0x4, scoped, tag = 'scoped memory for tpu_custom_call.1']
    #allocation9 [shape = 'u8[131072]{0}', space=vmem, size = 0x20000, scoped, tag = 'input window, operand 4, single buffered']
    #allocation10 [shape = 'u8[131072]{0}', space=vmem, size = 0x20000, scoped, tag = 'input window, operand 5, single buffered']
    #allocation11 [shape = 's32[1]{0}', space=sflag, size = 0x4, scoped, tag = 'scoped memory for tpu_custom_call.1']
    #allocation12 [shape = 'u8[2048]{0}', space=vmem, size = 0x800, scoped, tag = 'input window, operand 6, single buffered']
    #allocation13 [shape = 'u8[131072]{0}', space=vmem, size = 0x20000, scoped, tag = 'input window, operand 7, single buffered']
    #allocation14 [shape = 's32[1]{0}', space=sflag, size = 0x4, scoped, tag = 'scoped memory for tpu_custom_call.1']
    #allocation15 [shape = 'u8[131072]{0}', space=vmem, size = 0x20000, scoped, tag = 'input window, operand 8, single buffered']
    #allocation16 [shape = 'u8[2048]{0}', space=vmem, size = 0x800, scoped, tag = 'input window, operand 9, single buffered']
    #allocation17 [shape = 's32[1]{0}', space=sflag, size = 0x4, scoped, tag = 'scoped memory for tpu_custom_call.1']
    #allocation18 [shape = 'u8[4096]{0}', space=vmem, size = 0x1000, scoped, tag = 'output window, operand 0, single buffered']
    %17 = vsyncpa [#allocation5], 0
    %18 = vsyncpa [#allocation8], 0
    %19 = vsyncpa [#allocation11], 0
    %20 = vsyncpa [#allocation14], 0
    %21 = vsyncpa [#allocation17], 0
    %22 = vsyncpa [#allocation6], 0
    // Predicated region
    $region2: #{tpu_custom_call.1} parent=1 // pred_check
      _
    $region3: #{tpu_custom_call.1} parent=1 // pred_check_branch
      %24 = sbr.rel (0) target = $region5
    $region4: #{tpu_custom_call.1} parent=1 // pred_region
      _
    $region5: #{tpu_custom_call.1} parent=1 // pred_fallthru
      _
    // Predicated region
    $region6: #{tpu_custom_call.1} parent=1 // pred_check
      _
    $region7: #{tpu_custom_call.1} parent=1 // pred_check_branch
      %26 = sbr.rel (0) target = $region9
    $region8: #{tpu_custom_call.1} parent=1 // pred_region
      _
    $region9: #{tpu_custom_call.1} parent=1 // pred_fallthru
      _
    // Predicated region
    $region10: #{tpu_custom_call.1} parent=1 // pred_check
      _
    $region11: #{tpu_custom_call.1} parent=1 // pred_check_branch
      %28 = sbr.rel (0) target = $region13
    $region12: #{tpu_custom_call.1} parent=1 // pred_region
      %s30 = ssub.s32 4096, 4096
      %31 = vsyncadd [#allocation5], %s30
      %s32 = sshll.u32 [#allocation4], 4
      %s33 = int_to_ptr.vmem [resolvable:$true] %s32
      %38 = dma.hbm_to_vmem [thread:$0]  %s2, 4096, %s33, [#allocation5], 256, 256, 16
    $region13: #{tpu_custom_call.1} parent=1 // pred_fallthru
      _
    // Predicated region
    $region14: #{tpu_custom_call.1} parent=1 // pred_check
      _
    $region15: #{tpu_custom_call.1} parent=1 // pred_check_branch
      %40 = sbr.rel (0) target = $region17
    $region16: #{tpu_custom_call.1} parent=1 // pred_region
      %s42 = ssub.s32 64, 64
      %43 = vsyncadd [#allocation8], %s42
      %s45 = sshll.u32 [#allocation7], 4
      %s46 = int_to_ptr.vmem [resolvable:$true] %s45
      %48 = dma.hbm_to_vmem [thread:$0]  %s3, 64, %s46, [#allocation8]
    $region17: #{tpu_custom_call.1} parent=1 // pred_fallthru
      _
    // Predicated region
    $region18: #{tpu_custom_call.1} parent=1 // pred_check
      _
    $region19: #{tpu_custom_call.1} parent=1 // pred_check_branch
      %50 = sbr.rel (0) target = $region21
    $region20: #{tpu_custom_call.1} parent=1 // pred_region
      %s52 = ssub.s32 4096, 4096
      %53 = vsyncadd [#allocation8], %s52
      %s54 = sshll.u32 [#allocation9], 4
      %s55 = int_to_ptr.vmem [resolvable:$true] %s54
      %60 = dma.hbm_to_vmem [thread:$0]  %s4, 4096, %s55, [#allocation8], 256, 256, 16
    $region21: #{tpu_custom_call.1} parent=1 // pred_fallthru
      _
    // Predicated region
    $region22: #{tpu_custom_call.1} parent=1 // pred_check
      _
    $region23: #{tpu_custom_call.1} parent=1 // pred_check_branch
      %62 = sbr.rel (0) target = $region25
    $region24: #{tpu_custom_call.1} parent=1 // pred_region
      %s64 = ssub.s32 4096, 4096
      %65 = vsyncadd [#allocation11], %s64
      %s66 = sshll.u32 [#allocation10], 4
      %s67 = int_to_ptr.vmem [resolvable:$true] %s66
      %72 = dma.hbm_to_vmem [thread:$0]  %s5, 4096, %s67, [#allocation11], 256, 256, 16
    $region25: #{tpu_custom_call.1} parent=1 // pred_fallthru
      _
    // Predicated region
    $region26: #{tpu_custom_call.1} parent=1 // pred_check
      _
    $region27: #{tpu_custom_call.1} parent=1 // pred_check_branch
      %74 = sbr.rel (0) target = $region29
    $region28: #{tpu_custom_call.1} parent=1 // pred_region
      %s76 = ssub.s32 64, 64
      %77 = vsyncadd [#allocation11], %s76
      %s79 = sshll.u32 [#allocation12], 4
      %s80 = int_to_ptr.vmem [resolvable:$true] %s79
      %82 = dma.hbm_to_vmem [thread:$0]  %s6, 64, %s80, [#allocation11]
    $region29: #{tpu_custom_call.1} parent=1 // pred_fallthru
      _
    // Predicated region
    $region30: #{tpu_custom_call.1} parent=1 // pred_check
      _
    $region31: #{tpu_custom_call.1} parent=1 // pred_check_branch
      %84 = sbr.rel (0) target = $region33
    $region32: #{tpu_custom_call.1} parent=1 // pred_region
      %s86 = ssub.s32 4096, 4096
      %87 = vsyncadd [#allocation14], %s86
      %s88 = sshll.u32 [#allocation13], 4
      %s89 = int_to_ptr.vmem [resolvable:$true] %s88
      %94 = dma.hbm_to_vmem [thread:$0]  %s7, 4096, %s89, [#allocation14], 256, 256, 16
    $region33: #{tpu_custom_call.1} parent=1 // pred_fallthru
      _
    // Predicated region
    $region34: #{tpu_custom_call.1} parent=1 // pred_check
      _
    $region35: #{tpu_custom_call.1} parent=1 // pred_check_branch
      %96 = sbr.rel (0) target = $region37
    $region36: #{tpu_custom_call.1} parent=1 // pred_region
      %s98 = ssub.s32 4096, 4096
      %99 = vsyncadd [#allocation14], %s98
      %s100 = sshll.u32 [#allocation15], 4
      %s101 = int_to_ptr.vmem [resolvable:$true] %s100
      %106 = dma.hbm_to_vmem [thread:$0]  %s8, 4096, %s101, [#allocation14], 256, 256, 16
    $region37: #{tpu_custom_call.1} parent=1 // pred_fallthru
      _
    // Predicated region
    $region38: #{tpu_custom_call.1} parent=1 // pred_check
      _
    $region39: #{tpu_custom_call.1} parent=1 // pred_check_branch
      %108 = sbr.rel (0) target = $region41
    $region40: #{tpu_custom_call.1} parent=1 // pred_region
      %s110 = ssub.s32 64, 64
      %111 = vsyncadd [#allocation17], %s110
      %s113 = sshll.u32 [#allocation16], 4
      %s114 = int_to_ptr.vmem [resolvable:$true] %s113
      %116 = dma.hbm_to_vmem [thread:$0]  %s9, 64, %s114, [#allocation17]
    $region41: #{tpu_custom_call.1} parent=1 // pred_fallthru
      _
    // Predicated region
    $region42: #{tpu_custom_call.1} parent=1 // pred_check
      _
    $region43: #{tpu_custom_call.1} parent=1 // pred_check_branch
      %118 = sbr.rel (0) target = $region45
    $region44: #{tpu_custom_call.1} parent=1 // pred_region
      _
    $region45: #{tpu_custom_call.1} parent=1 // pred_fallthru
      _
    // Predicated region
    $region46: #{tpu_custom_call.1} parent=1 // pred_check
      _
    $region47: #{tpu_custom_call.1} parent=1 // pred_check_branch
      %120 = sbr.rel (0) target = $region49
    $region48: #{tpu_custom_call.1} parent=1 // pred_region
      _
    $region49: #{tpu_custom_call.1} parent=1 // pred_fallthru
      _
    // Predicated region
    $region50: #{tpu_custom_call.1} parent=1 // pred_check
      _
    $region51: #{tpu_custom_call.1} parent=1 // pred_check_branch
      %122 = sbr.rel (0) target = $region53
    $region52: #{tpu_custom_call.1} parent=1 // pred_region
      %123 = dma.done [#allocation5], 4096
    $region53: #{tpu_custom_call.1} parent=1 // pred_fallthru
      _
    // Predicated region
    $region54: #{tpu_custom_call.1} parent=1 // pred_check
      _
    $region55: #{tpu_custom_call.1} parent=1 // pred_check_branch
      %125 = sbr.rel (0) target = $region57
    $region56: #{tpu_custom_call.1} parent=1 // pred_region
      %126 = dma.done [#allocation8], 64
    $region57: #{tpu_custom_call.1} parent=1 // pred_fallthru
      _
    // Predicated region
    $region58: #{tpu_custom_call.1} parent=1 // pred_check
      _
    $region59: #{tpu_custom_call.1} parent=1 // pred_check_branch
      %128 = sbr.rel (0) target = $region61
    $region60: #{tpu_custom_call.1} parent=1 // pred_region
      %129 = dma.done [#allocation8], 4096
    $region61: #{tpu_custom_call.1} parent=1 // pred_fallthru
      _
    // Predicated region
    $region62: #{tpu_custom_call.1} parent=1 // pred_check
      _
    $region63: #{tpu_custom_call.1} parent=1 // pred_check_branch
      %131 = sbr.rel (0) target = $region65
    $region64: #{tpu_custom_call.1} parent=1 // pred_region
      %132 = dma.done [#allocation11], 4096
    $region65: #{tpu_custom_call.1} parent=1 // pred_fallthru
      _
    // Predicated region
    $region66: #{tpu_custom_call.1} parent=1 // pred_check
      _
    $region67: #{tpu_custom_call.1} parent=1 // pred_check_branch
      %134 = sbr.rel (0) target = $region69
    $region68: #{tpu_custom_call.1} parent=1 // pred_region
      %135 = dma.done [#allocation11], 64
    $region69: #{tpu_custom_call.1} parent=1 // pred_fallthru
      _
    // Predicated region
    $region70: #{tpu_custom_call.1} parent=1 // pred_check
      _
    $region71: #{tpu_custom_call.1} parent=1 // pred_check_branch
      %137 = sbr.rel (0) target = $region73
    $region72: #{tpu_custom_call.1} parent=1 // pred_region
      %138 = dma.done [#allocation14], 4096
    $region73: #{tpu_custom_call.1} parent=1 // pred_fallthru
      _
    // Predicated region
    $region74: #{tpu_custom_call.1} parent=1 // pred_check
      _
    $region75: #{tpu_custom_call.1} parent=1 // pred_check_branch
      %140 = sbr.rel (0) target = $region77
    $region76: #{tpu_custom_call.1} parent=1 // pred_region
      %141 = dma.done [#allocation14], 4096
    $region77: #{tpu_custom_call.1} parent=1 // pred_fallthru
      _
    // Predicated region
    $region78: #{tpu_custom_call.1} parent=1 // pred_check
      _
    $region79: #{tpu_custom_call.1} parent=1 // pred_check_branch
      %143 = sbr.rel (0) target = $region81
    $region80: #{tpu_custom_call.1} parent=1 // pred_region
      %144 = dma.done [#allocation17], 64
    $region81: #{tpu_custom_call.1} parent=1 // pred_fallthru
      _
    %v146 = vld [vmem:[%s0] sm:$0xff]
    %v147 = vld [vmem:[%s0 + $0x8] sm:$0xff]
    %v148 = vld [vmem:[%s0 + $0x10] sm:$0xff]
    %v149 = vld [vmem:[%s0 + $0x18] sm:$0xff]
    %v150 = vld [vmem:[%s0 + $0x20] sm:$0xff]
    %v151 = vld [vmem:[%s0 + $0x28] sm:$0xff]
    %v152 = vld [vmem:[%s0 + $0x30] sm:$0xff]
    %v153 = vld [vmem:[%s0 + $0x38] sm:$0xff]
    %v154 = vpack.c.bf16 %v147, %v146
    %v155 = vpack.c.bf16 %v149, %v148
    %v156 = vpack.c.bf16 %v151, %v150
    %v157 = vpack.c.bf16 %v153, %v152
    %v158 = vld [vmem:[%s1] sm:$0xff]
    %v159 = vld [vmem:[%s1 + $0x8] sm:$0xff]
    %v160 = vld [vmem:[%s1 + $0x10] sm:$0xff]
    %v161 = vld [vmem:[%s1 + $0x18] sm:$0xff]
    %v162 = vld [vmem:[#allocation7] sm:$0xf]
    %v164 = vlaneseq
    %v165 = vshrl.u32 %v164, 7
    %v166 = vsub.s32 0, %v165
    %v167 = vrot.slane %v162, %v166
    %v168 = vlaneseq
    %v169 = vshrl.u32 %v168, 7
    %v170 = vsub.s32 1, %v169
    %v171 = vrot.slane %v162, %v170
    %v172 = vlaneseq
    %v173 = vshrl.u32 %v172, 7
    %v174 = vsub.s32 2, %v173
    %v175 = vrot.slane %v162, %v174
    %v176 = vlaneseq
    %v177 = vshrl.u32 %v176, 7
    %v178 = vsub.s32 3, %v177
    %v179 = vrot.slane %v162, %v178
    %v188 = vunpack.c.l.b16 %v158
    %v189 = vunpack.c.h.b16 %v158
    %v190 = vunpack.c.l.b16 %v159
    %v191 = vunpack.c.h.b16 %v159
    %v192 = vunpack.c.l.b16 %v160
    %v193 = vunpack.c.h.b16 %v160
    %v194 = vunpack.c.l.b16 %v161
    %v195 = vunpack.c.h.b16 %v161
    %v196 = vpack.c.b16 %v192, %v188
    %v197 = vpack.c.b16 %v193, %v189
    %v198 = vpack.c.b16 %v194, %v190
    %v199 = vpack.c.b16 %v195, %v191
    %vm204 = vcmask 130048
    %v206 = vsel %vm204, %v154, 0
    %v209 = vsel %vm204, %v155, 0
    %v212 = vsel %vm204, %v156, 0
    %v215 = vsel %vm204, %v157, 0
    %217 = vmatprep.subr.bf16.mxu0 0
    %218 = vmatpush1.bf16.msra.mxu0 0
    %219 = vmatprep.subr.bf16.mxu0 0
    %220 = vmatpush1.bf16.msra.mxu0 0
    %221 = vmatprep.subr.bf16.mxu0 0
    %222 = vmatpush1.bf16.msra.mxu0 0
    %223 = vmatprep.subr.bf16.mxu0 0
    %224 = vmatpush1.bf16.msra.mxu0 0
    %225 = vmatprep.subr.bf16.mxu0 0
    %226 = vmatpush1.bf16.msra.mxu0 0
    %227 = vmatprep.subr.bf16.mxu0 0
    %228 = vmatpush1.bf16.msra.mxu0 0
    %229 = vmatprep.subr.bf16.mxu0 0
    %230 = vmatpush1.bf16.msra.mxu0 0
    %231 = vmatprep.subr.bf16.mxu0 %v197
    %232 = vmatpush1.bf16.msra.mxu0 %v196
    %233 = vmatprep.subr.bf16.mxu0 0
    %234 = vmatpush2.bf16.msra.mxu0 0
    %235 = vmatprep.subr.bf16.mxu0 0
    %236 = vmatpush2.bf16.msra.mxu0 0
    %237 = vmatprep.subr.bf16.mxu0 0
    %238 = vmatpush2.bf16.msra.mxu0 0
    %239 = vmatprep.subr.bf16.mxu0 0
    %240 = vmatpush2.bf16.msra.mxu0 0
    %241 = vmatprep.subr.bf16.mxu0 0
    %242 = vmatpush2.bf16.msra.mxu0 0
    %243 = vmatprep.subr.bf16.mxu0 0
    %244 = vmatpush2.bf16.msra.mxu0 0
    %245 = vmatprep.subr.bf16.mxu0 0
    %246 = vmatpush2.bf16.msra.mxu0 0
    %247 = vmatprep.subr.bf16.mxu0 0
    %248 = vmatpush2.bf16.msra.mxu0 0
    %249 = vmatprep.mubr.bf16.mxu0 0
    %250 = vmatmul.mubr.bf16.gmra.mxu0 %v206
    %v251 = vpop.f32.mrf.mxu0
    %v252 = vadd.f32 %v167, %v251
    %v253 = vpop.f32.mrf.mxu0
    %v254 = vadd.f32 %v171, %v253
    %v255 = vpop.f32.mrf.mxu0
    %v256 = vadd.f32 %v167, %v255
    %v257 = vpop.f32.mrf.mxu0
    %v258 = vadd.f32 %v171, %v257
    %259 = vmatprep.mubr.bf16.mxu0 0
    %260 = vmatmul.mubr.bf16.gmra.mxu0 %v209
    %v261 = vpop.f32.mrf.mxu0
    %v262 = vadd.f32 %v167, %v261
    %v263 = vpop.f32.mrf.mxu0
    %v264 = vadd.f32 %v171, %v263
    %v265 = vpop.f32.mrf.mxu0
    %v266 = vadd.f32 %v167, %v265
    %v267 = vpop.f32.mrf.mxu0
    %v268 = vadd.f32 %v171, %v267
    %269 = vmatprep.mubr.bf16.mxu0 0
    %270 = vmatmul.mubr.bf16.gmra.mxu0 %v212
    %v271 = vpop.f32.mrf.mxu0
    %v272 = vadd.f32 %v167, %v271
    %v273 = vpop.f32.mrf.mxu0
    %v274 = vadd.f32 %v171, %v273
    %v275 = vpop.f32.mrf.mxu0
    %v276 = vadd.f32 %v167, %v275
    %v277 = vpop.f32.mrf.mxu0
    %v278 = vadd.f32 %v171, %v277
    %279 = vmatprep.mubr.bf16.mxu0 0
    %280 = vmatmul.mubr.bf16.gmra.mxu0 %v215
    %v281 = vpop.f32.mrf.mxu0
    %v282 = vadd.f32 %v167, %v281
    %v283 = vpop.f32.mrf.mxu0
    %v284 = vadd.f32 %v171, %v283
    %v285 = vpop.f32.mrf.mxu0
    %v286 = vadd.f32 %v167, %v285
    %v287 = vpop.f32.mrf.mxu0
    %v288 = vadd.f32 %v171, %v287
    %289 = vdwg.mxu0
    %290 = vmatprep.subr.bf16.mxu0 0
    %291 = vmatpush1.bf16.msra.mxu0 0
    %292 = vmatprep.subr.bf16.mxu0 0
    %293 = vmatpush1.bf16.msra.mxu0 0
    %294 = vmatprep.subr.bf16.mxu0 0
    %295 = vmatpush1.bf16.msra.mxu0 0
    %296 = vmatprep.subr.bf16.mxu0 0
    %297 = vmatpush1.bf16.msra.mxu0 0
    %298 = vmatprep.subr.bf16.mxu0 0
    %299 = vmatpush1.bf16.msra.mxu0 0
    %300 = vmatprep.subr.bf16.mxu0 0
    %301 = vmatpush1.bf16.msra.mxu0 0
    %302 = vmatprep.subr.bf16.mxu0 0
    %303 = vmatpush1.bf16.msra.mxu0 0
    %304 = vmatprep.subr.bf16.mxu0 %v199
    %305 = vmatpush1.bf16.msra.mxu0 %v198
    %306 = vmatprep.subr.bf16.mxu0 0
    %307 = vmatpush2.bf16.msra.mxu0 0
    %308 = vmatprep.subr.bf16.mxu0 0
    %309 = vmatpush2.bf16.msra.mxu0 0
    %310 = vmatprep.subr.bf16.mxu0 0
    %311 = vmatpush2.bf16.msra.mxu0 0
    %312 = vmatprep.subr.bf16.mxu0 0
    %313 = vmatpush2.bf16.msra.mxu0 0
    %314 = vmatprep.subr.bf16.mxu0 0
    %315 = vmatpush2.bf16.msra.mxu0 0
    %316 = vmatprep.subr.bf16.mxu0 0
    %317 = vmatpush2.bf16.msra.mxu0 0
    %318 = vmatprep.subr.bf16.mxu0 0
    %319 = vmatpush2.bf16.msra.mxu0 0
    %320 = vmatprep.subr.bf16.mxu0 0
    %321 = vmatpush2.bf16.msra.mxu0 0
    %322 = vmatprep.mubr.bf16.mxu0 0
    %323 = vmatmul.mubr.bf16.gmra.mxu0 %v206
    %v324 = vpop.f32.mrf.mxu0
    %v325 = vadd.f32 %v175, %v324
    %v326 = vpop.f32.mrf.mxu0
    %v327 = vadd.f32 %v179, %v326
    %v328 = vpop.f32.mrf.mxu0
    %v329 = vadd.f32 %v175, %v328
    %v330 = vpop.f32.mrf.mxu0
    %v331 = vadd.f32 %v179, %v330
    %332 = vmatprep.mubr.bf16.mxu0 0
    %333 = vmatmul.mubr.bf16.gmra.mxu0 %v209
    %v334 = vpop.f32.mrf.mxu0
    %v335 = vadd.f32 %v175, %v334
    %v336 = vpop.f32.mrf.mxu0
    %v337 = vadd.f32 %v179, %v336
    %v338 = vpop.f32.mrf.mxu0
    %v339 = vadd.f32 %v175, %v338
    %v340 = vpop.f32.mrf.mxu0
    %v341 = vadd.f32 %v179, %v340
    %342 = vmatprep.mubr.bf16.mxu0 0
    %343 = vmatmul.mubr.bf16.gmra.mxu0 %v212
    %v344 = vpop.f32.mrf.mxu0
    %v345 = vadd.f32 %v175, %v344
    %v346 = vpop.f32.mrf.mxu0
    %v347 = vadd.f32 %v179, %v346
    %v348 = vpop.f32.mrf.mxu0
    %v349 = vadd.f32 %v175, %v348
    %v350 = vpop.f32.mrf.mxu0
    %v351 = vadd.f32 %v179, %v350
    %352 = vmatprep.mubr.bf16.mxu0 0
    %353 = vmatmul.mubr.bf16.gmra.mxu0 %v215
    %v354 = vpop.f32.mrf.mxu0
    %v355 = vadd.f32 %v175, %v354
    %v356 = vpop.f32.mrf.mxu0
    %v357 = vadd.f32 %v179, %v356
    %v358 = vpop.f32.mrf.mxu0
    %v359 = vadd.f32 %v175, %v358
    %v360 = vpop.f32.mrf.mxu0
    %v361 = vadd.f32 %v179, %v360
    %362 = vdwg.mxu0
    %363 = vst [vmem:[#allocation3] sm:$0xff] %v252
    %364 = vst [vmem:[#allocation3 + $0x8] sm:$0xff] %v254
    %365 = vst [vmem:[#allocation3 + $0x10] sm:$0xff] %v325
    %366 = vst [vmem:[#allocation3 + $0x18] sm:$0xff] %v327
    %367 = vst [vmem:[#allocation3 + $0x20] sm:$0xff] %v256
    %368 = vst [vmem:[#allocation3 + $0x28] sm:$0xff] %v258
    %369 = vst [vmem:[#allocation3 + $0x30] sm:$0xff] %v329
    %370 = vst [vmem:[#allocation3 + $0x38] sm:$0xff] %v331
    %371 = vst [vmem:[#allocation3 + $0x40] sm:$0xff] %v262
    %372 = vst [vmem:[#allocation3 + $0x48] sm:$0xff] %v264
    %373 = vst [vmem:[#allocation3 + $0x50] sm:$0xff] %v335
    %374 = vst [vmem:[#allocation3 + $0x58] sm:$0xff] %v337
    %375 = vst [vmem:[#allocation3 + $0x60] sm:$0xff] %v266
    %376 = vst [vmem:[#allocation3 + $0x68] sm:$0xff] %v268
    %377 = vst [vmem:[#allocation3 + $0x70] sm:$0xff] %v339
    %378 = vst [vmem:[#allocation3 + $0x78] sm:$0xff] %v341
    %379 = vst [vmem:[#allocation3 + $0x80] sm:$0xff] %v272
    %380 = vst [vmem:[#allocation3 + $0x88] sm:$0xff] %v274
    %381 = vst [vmem:[#allocation3 + $0x90] sm:$0xff] %v345
    %382 = vst [vmem:[#allocation3 + $0x98] sm:$0xff] %v347
    %383 = vst [vmem:[#allocation3 + $0xa0] sm:$0xff] %v276
    %384 = vst [vmem:[#allocation3 + $0xa8] sm:$0xff] %v278
    %385 = vst [vmem:[#allocation3 + $0xb0] sm:$0xff] %v349
    %386 = vst [vmem:[#allocation3 + $0xb8] sm:$0xff] %v351
    %387 = vst [vmem:[#allocation3 + $0xc0] sm:$0xff] %v282
    %388 = vst [vmem:[#allocation3 + $0xc8] sm:$0xff] %v284
    %389 = vst [vmem:[#allocation3 + $0xd0] sm:$0xff] %v355
    %390 = vst [vmem:[#allocation3 + $0xd8] sm:$0xff] %v357
    %391 = vst [vmem:[#allocation3 + $0xe0] sm:$0xff] %v286
    %392 = vst [vmem:[#allocation3 + $0xe8] sm:$0xff] %v288
    %393 = vst [vmem:[#allocation3 + $0xf0] sm:$0xff] %v359
    %394 = vst [vmem:[#allocation3 + $0xf8] sm:$0xff] %v361
    %v395 = vld [vmem:[#allocation4] sm:$0xff]
    %v396 = vld [vmem:[#allocation4 + $0x8] sm:$0xff]
    %v397 = vld [vmem:[#allocation4 + $0x10] sm:$0xff]
    %v398 = vld [vmem:[#allocation4 + $0x18] sm:$0xff]
    %v399 = vld [vmem:[#allocation4 + $0x20] sm:$0xff]
    %v400 = vld [vmem:[#allocation4 + $0x28] sm:$0xff]
    %v401 = vld [vmem:[#allocation4 + $0x30] sm:$0xff]
    %v402 = vld [vmem:[#allocation4 + $0x38] sm:$0xff]
    %v403 = vld [vmem:[#allocation4 + $0x40] sm:$0xff]
    %v404 = vld [vmem:[#allocation4 + $0x48] sm:$0xff]
    %v405 = vld [vmem:[#allocation4 + $0x50] sm:$0xff]
    %v406 = vld [vmem:[#allocation4 + $0x58] sm:$0xff]
    %v407 = vld [vmem:[#allocation4 + $0x60] sm:$0xff]
    %v408 = vld [vmem:[#allocation4 + $0x68] sm:$0xff]
    %v409 = vld [vmem:[#allocation4 + $0x70] sm:$0xff]
    %v410 = vld [vmem:[#allocation4 + $0x78] sm:$0xff]
    %v411 = vld [vmem:[#allocation4 + $0x80] sm:$0xff]
    %v412 = vld [vmem:[#allocation4 + $0x88] sm:$0xff]
    %v413 = vld [vmem:[#allocation4 + $0x90] sm:$0xff]
    %v414 = vld [vmem:[#allocation4 + $0x98] sm:$0xff]
    %v415 = vld [vmem:[#allocation4 + $0xa0] sm:$0xff]
    %v416 = vld [vmem:[#allocation4 + $0xa8] sm:$0xff]
    %v417 = vld [vmem:[#allocation4 + $0xb0] sm:$0xff]
    %v418 = vld [vmem:[#allocation4 + $0xb8] sm:$0xff]
    %v419 = vld [vmem:[#allocation4 + $0xc0] sm:$0xff]
    %v420 = vld [vmem:[#allocation4 + $0xc8] sm:$0xff]
    %v421 = vld [vmem:[#allocation4 + $0xd0] sm:$0xff]
    %v422 = vld [vmem:[#allocation4 + $0xd8] sm:$0xff]
    %v423 = vld [vmem:[#allocation4 + $0xe0] sm:$0xff]
    %v424 = vld [vmem:[#allocation4 + $0xe8] sm:$0xff]
    %v425 = vld [vmem:[#allocation4 + $0xf0] sm:$0xff]
    %v426 = vld [vmem:[#allocation4 + $0xf8] sm:$0xff]
    %s427 = smul.u32 0, 4
    %s428 = smul.addr %s427, 8
    %s429 = scalar_lea.vmem [#allocation3], %s428
    %v430 = vld [vmem:[%s429] sm:$0xff]
    %v431 = vld [vmem:[%s429 + $0x8] sm:$0xff]
    %v432 = vld [vmem:[%s429 + $0x10] sm:$0xff]
    %v433 = vld [vmem:[%s429 + $0x18] sm:$0xff]
    %v466 = vunpack.c.l.b16 %v395
    %v467 = vunpack.c.h.b16 %v395
    %v468 = vunpack.c.l.b16 %v396
    %v469 = vunpack.c.h.b16 %v396
    %v470 = vunpack.c.l.b16 %v397
    %v471 = vunpack.c.h.b16 %v397
    %v472 = vunpack.c.l.b16 %v398
    %v473 = vunpack.c.h.b16 %v398
    %v474 = vunpack.c.l.b16 %v399
    %v475 = vunpack.c.h.b16 %v399
    %v476 = vunpack.c.l.b16 %v400
    %v477 = vunpack.c.h.b16 %v400
    %v478 = vunpack.c.l.b16 %v401
    %v479 = vunpack.c.h.b16 %v401
    %v480 = vunpack.c.l.b16 %v402
    %v481 = vunpack.c.h.b16 %v402
    %v482 = vunpack.c.l.b16 %v403
    %v483 = vunpack.c.h.b16 %v403
    %v484 = vunpack.c.l.b16 %v404
    %v485 = vunpack.c.h.b16 %v404
    %v486 = vunpack.c.l.b16 %v405
    %v487 = vunpack.c.h.b16 %v405
    %v488 = vunpack.c.l.b16 %v406
    %v489 = vunpack.c.h.b16 %v406
    %v490 = vunpack.c.l.b16 %v407
    %v491 = vunpack.c.h.b16 %v407
    %v492 = vunpack.c.l.b16 %v408
    %v493 = vunpack.c.h.b16 %v408
    %v494 = vunpack.c.l.b16 %v409
    %v495 = vunpack.c.h.b16 %v409
    %v496 = vunpack.c.l.b16 %v410
    %v497 = vunpack.c.h.b16 %v410
    %v498 = vunpack.c.l.b16 %v411
    %v499 = vunpack.c.h.b16 %v411
    %v500 = vunpack.c.l.b16 %v412
    %v501 = vunpack.c.h.b16 %v412
    %v502 = vunpack.c.l.b16 %v413
    %v503 = vunpack.c.h.b16 %v413
    %v504 = vunpack.c.l.b16 %v414
    %v505 = vunpack.c.h.b16 %v414
    %v506 = vunpack.c.l.b16 %v415
    %v507 = vunpack.c.h.b16 %v415
    %v508 = vunpack.c.l.b16 %v416
    %v509 = vunpack.c.h.b16 %v416
    %v510 = vunpack.c.l.b16 %v417
    %v511 = vunpack.c.h.b16 %v417
    %v512 = vunpack.c.l.b16 %v418
    %v513 = vunpack.c.h.b16 %v418
    %v514 = vunpack.c.l.b16 %v419
    %v515 = vunpack.c.h.b16 %v419
    %v516 = vunpack.c.l.b16 %v420
    %v517 = vunpack.c.h.b16 %v420
    %v518 = vunpack.c.l.b16 %v421
    %v519 = vunpack.c.h.b16 %v421
    %v520 = vunpack.c.l.b16 %v422
    %v521 = vunpack.c.h.b16 %v422
    %v522 = vunpack.c.l.b16 %v423
    %v523 = vunpack.c.h.b16 %v423
    %v524 = vunpack.c.l.b16 %v424
    %v525 = vunpack.c.h.b16 %v424
    %v526 = vunpack.c.l.b16 %v425
    %v527 = vunpack.c.h.b16 %v425
    %v528 = vunpack.c.l.b16 %v426
    %v529 = vunpack.c.h.b16 %v426
    %v530 = vpack.c.b16 %v470, %v466
    %v531 = vpack.c.b16 %v471, %v467
    %v532 = vpack.c.b16 %v472, %v468
    %v533 = vpack.c.b16 %v473, %v469
    %v534 = vpack.c.b16 %v478, %v474
    %v535 = vpack.c.b16 %v479, %v475
    %v536 = vpack.c.b16 %v480, %v476
    %v537 = vpack.c.b16 %v481, %v477
    %v538 = vpack.c.b16 %v486, %v482
    %v539 = vpack.c.b16 %v487, %v483
    %v540 = vpack.c.b16 %v488, %v484
    %v541 = vpack.c.b16 %v489, %v485
    %v542 = vpack.c.b16 %v494, %v490
    %v543 = vpack.c.b16 %v495, %v491
    %v544 = vpack.c.b16 %v496, %v492
    %v545 = vpack.c.b16 %v497, %v493
    %v546 = vpack.c.b16 %v502, %v498
    %v547 = vpack.c.b16 %v503, %v499
    %v548 = vpack.c.b16 %v504, %v500
    %v549 = vpack.c.b16 %v505, %v501
    %v550 = vpack.c.b16 %v510, %v506
    %v551 = vpack.c.b16 %v511, %v507
    %v552 = vpack.c.b16 %v512, %v508
    %v553 = vpack.c.b16 %v513, %v509
    %v554 = vpack.c.b16 %v518, %v514
    %v555 = vpack.c.b16 %v519, %v515
    %v556 = vpack.c.b16 %v520, %v516
    %v557 = vpack.c.b16 %v521, %v517
    %v558 = vpack.c.b16 %v526, %v522
    %v559 = vpack.c.b16 %v527, %v523
    %v560 = vpack.c.b16 %v528, %v524
    %v561 = vpack.c.b16 %v529, %v525
    %594 = vmatprep.subr.bf16.mxu0 %v559
    %595 = vmatpush1.bf16.msra.mxu0 %v558
    %596 = vmatprep.subr.bf16.mxu0 %v555
    %597 = vmatpush1.bf16.msra.mxu0 %v554
    %598 = vmatprep.subr.bf16.mxu0 %v551
    %599 = vmatpush1.bf16.msra.mxu0 %v550
    %600 = vmatprep.subr.bf16.mxu0 %v547
    %601 = vmatpush1.bf16.msra.mxu0 %v546
    %602 = vmatprep.subr.bf16.mxu0 %v543
    %603 = vmatpush1.bf16.msra.mxu0 %v542
    %604 = vmatprep.subr.bf16.mxu0 %v539
    %605 = vmatpush1.bf16.msra.mxu0 %v538
    %606 = vmatprep.subr.bf16.mxu0 %v535
    %607 = vmatpush1.bf16.msra.mxu0 %v534
    %608 = vmatprep.subr.bf16.mxu0 %v531
    %609 = vmatpush1.bf16.msra.mxu0 %v530
    %610 = vmatprep.subr.bf16.mxu0 0
    %611 = vmatpush2.bf16.msra.mxu0 0
    %612 = vmatprep.subr.bf16.mxu0 0
    %613 = vmatpush2.bf16.msra.mxu0 0
    %614 = vmatprep.subr.bf16.mxu0 0
    %615 = vmatpush2.bf16.msra.mxu0 0
    %616 = vmatprep.subr.bf16.mxu0 0
    %617 = vmatpush2.bf16.msra.mxu0 0
    %618 = vmatprep.subr.bf16.mxu0 0
    %619 = vmatpush2.bf16.msra.mxu0 0
    %620 = vmatprep.subr.bf16.mxu0 0
    %621 = vmatpush2.bf16.msra.mxu0 0
    %622 = vmatprep.subr.bf16.mxu0 0
    %623 = vmatpush2.bf16.msra.mxu0 0
    %624 = vmatprep.subr.bf16.mxu0 0
    %625 = vmatpush2.bf16.msra.mxu0 0
    %626 = vmatprep.mubr.bf16.mxu0 0
    %627 = vmatmul.mubr.bf16.gmra.mxu0 0
    %v628 = vpop.f32.mrf.mxu0
    %v629 = vadd.f32 0.0, %v628
    %v630 = vpop.f32.mrf.mxu0
    %v631 = vadd.f32 0.0, %v630
    %v632 = vpop.f32.mrf.mxu0
    %v633 = vpop.f32.mrf.mxu0
    %634 = vdwg.mxu0
    %635 = vmatprep.subr.bf16.mxu0 %v561
    %636 = vmatpush1.bf16.msra.mxu0 %v560
    %637 = vmatprep.subr.bf16.mxu0 %v557
    %638 = vmatpush1.bf16.msra.mxu0 %v556
    %639 = vmatprep.subr.bf16.mxu0 %v553
    %640 = vmatpush1.bf16.msra.mxu0 %v552
    %641 = vmatprep.subr.bf16.mxu0 %v549
    %642 = vmatpush1.bf16.msra.mxu0 %v548
    %643 = vmatprep.subr.bf16.mxu0 %v545
    %644 = vmatpush1.bf16.msra.mxu0 %v544
    %645 = vmatprep.subr.bf16.mxu0 %v541
    %646 = vmatpush1.bf16.msra.mxu0 %v540
    %647 = vmatprep.subr.bf16.mxu0 %v537
    %648 = vmatpush1.bf16.msra.mxu0 %v536
    %649 = vmatprep.subr.bf16.mxu0 %v533
    %650 = vmatpush1.bf16.msra.mxu0 %v532
    %651 = vmatprep.subr.bf16.mxu0 0
    %652 = vmatpush2.bf16.msra.mxu0 0
    %653 = vmatprep.subr.bf16.mxu0 0
    %654 = vmatpush2.bf16.msra.mxu0 0
    %655 = vmatprep.subr.bf16.mxu0 0
    %656 = vmatpush2.bf16.msra.mxu0 0
    %657 = vmatprep.subr.bf16.mxu0 0
    %658 = vmatpush2.bf16.msra.mxu0 0
    %659 = vmatprep.subr.bf16.mxu0 0
    %660 = vmatpush2.bf16.msra.mxu0 0
    %661 = vmatprep.subr.bf16.mxu0 0
    %662 = vmatpush2.bf16.msra.mxu0 0
    %663 = vmatprep.subr.bf16.mxu0 0
    %664 = vmatpush2.bf16.msra.mxu0 0
    %665 = vmatprep.subr.bf16.mxu0 0
    %666 = vmatpush2.bf16.msra.mxu0 0
    %667 = vmatprep.mubr.bf16.mxu0 0
    %668 = vmatmul.mubr.bf16.gmra.mxu0 0
    %v669 = vpop.f32.mrf.mxu0
    %v670 = vadd.f32 0.0, %v669
    %v671 = vpop.f32.mrf.mxu0
    %v672 = vadd.f32 0.0, %v671
    %v673 = vpop.f32.mrf.mxu0
    %v674 = vpop.f32.mrf.mxu0
    %675 = vdwg.mxu0
    %v676 = vadd.f32 %v430, %v629
    %v677 = vadd.f32 %v431, %v631
    %v678 = vadd.f32 %v432, %v670
    %v679 = vadd.f32 %v433, %v672
    %v680 = vmul.f32 %v676, 0.5
    %v681 = vtanh.pop %v680
    %v682 = vmul.f32 %v681, 0.5
    %v683 = vadd.f32 %v682, 0.5
    %v684 = vmul.f32 %v677, 0.5
    %v685 = vtanh.pop %v684
    %v686 = vmul.f32 %v685, 0.5
    %v687 = vadd.f32 %v686, 0.5
    %v688 = vtanh.pop %v678
    %v689 = vmul.f32 %v679, 0.5
    %v690 = vtanh.pop %v689
    %v691 = vmul.f32 %v690, 0.5
    %v692 = vadd.f32 %v691, 0.5
    %v693 = vmul.f32 %v687, 0.0
    %v694 = vmul.f32 %v683, %v688
    %v695 = vadd.f32 %v693, %v694
    %v696 = vtanh.pop %v695
    %v697 = vmul.f32 %v692, %v696
    %698 = vst [vmem:[#allocation2] sm:$0xff] %v697
    %s699 = smul.u32 1, 4
    %s700 = smul.addr %s699, 8
    %s701 = scalar_lea.vmem [#allocation3], %s700
    %v702 = vld [vmem:[%s701] sm:$0xff]
    %v703 = vld [vmem:[%s701 + $0x8] sm:$0xff]
    %v704 = vld [vmem:[%s701 + $0x10] sm:$0xff]
    %v705 = vld [vmem:[%s701 + $0x18] sm:$0xff]
    %v706 = vpack.c.bf16 %v697, %v697
    %707 = vmatprep.subr.bf16.mxu0 %v559
    %708 = vmatpush1.bf16.msra.mxu0 %v558
    %709 = vmatprep.subr.bf16.mxu0 %v555
    %710 = vmatpush1.bf16.msra.mxu0 %v554
    %711 = vmatprep.subr.bf16.mxu0 %v551
    %712 = vmatpush1.bf16.msra.mxu0 %v550
    %713 = vmatprep.subr.bf16.mxu0 %v547
    %714 = vmatpush1.bf16.msra.mxu0 %v546
    %715 = vmatprep.subr.bf16.mxu0 %v543
    %716 = vmatpush1.bf16.msra.mxu0 %v542
    %717 = vmatprep.subr.bf16.mxu0 %v539
    %718 = vmatpush1.bf16.msra.mxu0 %v538
    %719 = vmatprep.subr.bf16.mxu0 %v535
    %720 = vmatpush1.bf16.msra.mxu0 %v534
    %721 = vmatprep.subr.bf16.mxu0 %v531
    %722 = vmatpush1.bf16.msra.mxu0 %v530
    %723 = vmatprep.subr.bf16.mxu0 0
    %724 = vmatpush2.bf16.msra.mxu0 0
    %725 = vmatprep.subr.bf16.mxu0 0
    %726 = vmatpush2.bf16.msra.mxu0 0
    %727 = vmatprep.subr.bf16.mxu0 0
    %728 = vmatpush2.bf16.msra.mxu0 0
    %729 = vmatprep.subr.bf16.mxu0 0
    %730 = vmatpush2.bf16.msra.mxu0 0
    %731 = vmatprep.subr.bf16.mxu0 0
    %732 = vmatpush2.bf16.msra.mxu0 0
    %733 = vmatprep.subr.bf16.mxu0 0
    %734 = vmatpush2.bf16.msra.mxu0 0
    %735 = vmatprep.subr.bf16.mxu0 0
    %736 = vmatpush2.bf16.msra.mxu0 0
    %737 = vmatprep.subr.bf16.mxu0 0
    %738 = vmatpush2.bf16.msra.mxu0 0
    %739 = vmatprep.mubr.bf16.mxu0 0
    %740 = vmatmul.mubr.bf16.gmra.mxu0 %v706
    %v741 = vpop.f32.mrf.mxu0
    %v742 = vadd.f32 0.0, %v741
    %v743 = vpop.f32.mrf.mxu0
    %v744 = vadd.f32 0.0, %v743
    %v745 = vpop.f32.mrf.mxu0
    %v746 = vpop.f32.mrf.mxu0
    %747 = vdwg.mxu0
    %748 = vmatprep.subr.bf16.mxu0 %v561
    %749 = vmatpush1.bf16.msra.mxu0 %v560
    %750 = vmatprep.subr.bf16.mxu0 %v557
    %751 = vmatpush1.bf16.msra.mxu0 %v556
    %752 = vmatprep.subr.bf16.mxu0 %v553
    %753 = vmatpush1.bf16.msra.mxu0 %v552
    %754 = vmatprep.subr.bf16.mxu0 %v549
    %755 = vmatpush1.bf16.msra.mxu0 %v548
    %756 = vmatprep.subr.bf16.mxu0 %v545
    %757 = vmatpush1.bf16.msra.mxu0 %v544
    %758 = vmatprep.subr.bf16.mxu0 %v541
    %759 = vmatpush1.bf16.msra.mxu0 %v540
    %760 = vmatprep.subr.bf16.mxu0 %v537
    %761 = vmatpush1.bf16.msra.mxu0 %v536
    %762 = vmatprep.subr.bf16.mxu0 %v533
    %763 = vmatpush1.bf16.msra.mxu0 %v532
    %764 = vmatprep.subr.bf16.mxu0 0
    %765 = vmatpush2.bf16.msra.mxu0 0
    %766 = vmatprep.subr.bf16.mxu0 0
    %767 = vmatpush2.bf16.msra.mxu0 0
    %768 = vmatprep.subr.bf16.mxu0 0
    %769 = vmatpush2.bf16.msra.mxu0 0
    %770 = vmatprep.subr.bf16.mxu0 0
    %771 = vmatpush2.bf16.msra.mxu0 0
    %772 = vmatprep.subr.bf16.mxu0 0
    %773 = vmatpush2.bf16.msra.mxu0 0
    %774 = vmatprep.subr.bf16.mxu0 0
    %775 = vmatpush2.bf16.msra.mxu0 0
    %776 = vmatprep.subr.bf16.mxu0 0
    %777 = vmatpush2.bf16.msra.mxu0 0
    %778 = vmatprep.subr.bf16.mxu0 0
    %779 = vmatpush2.bf16.msra.mxu0 0
    %780 = vmatprep.mubr.bf16.mxu0 0
    %781 = vmatmul.mubr.bf16.gmra.mxu0 %v706
    %v782 = vpop.f32.mrf.mxu0
    %v783 = vadd.f32 0.0, %v782
    %v784 = vpop.f32.mrf.mxu0
    %v785 = vadd.f32 0.0, %v784
    %v786 = vpop.f32.mrf.mxu0
    %v787 = vpop.f32.mrf.mxu0
    %788 = vdwg.mxu0
    %v789 = vadd.f32 %v702, %v742
    %v790 = vadd.f32 %v703, %v744
    %v791 = vadd.f32 %v704, %v783
    %v792 = vadd.f32 %v705, %v785
    %v793 = vmul.f32 %v789, 0.5
    %v794 = vtanh.pop %v793
    %v795 = vmul.f32 %v794, 0.5
    %v796 = vadd.f32 %v795, 0.5
    %v797 = vmul.f32 %v790, 0.5
    %v798 = vtanh.pop %v797
    %v799 = vmul.f32 %v798, 0.5
    %v800 = vadd.f32 %v799, 0.5
    %v801 = vtanh.pop %v791
    %v802 = vmul.f32 %v792, 0.5
    %v803 = vtanh.pop %v802
    %v804 = vmul.f32 %v803, 0.5
    %v805 = vadd.f32 %v804, 0.5
    %v806 = vmul.f32 %v800, %v695
    %v807 = vmul.f32 %v796, %v801
    %v808 = vadd.f32 %v806, %v807
    %v809 = vtanh.pop %v808
    %v810 = vmul.f32 %v805, %v809
    %s811 = scalar_lea.vmem [#allocation2], 8
    %812 = vst [vmem:[%s811] sm:$0xff] %v810
    %s813 = smul.u32 2, 4
    %s814 = smul.addr %s813, 8
    %s815 = scalar_lea.vmem [#allocation3], %s814
    %v816 = vld [vmem:[%s815] sm:$0xff]
    %v817 = vld [vmem:[%s815 + $0x8] sm:$0xff]
    %v818 = vld [vmem:[%s815 + $0x10] sm:$0xff]
    %v819 = vld [vmem:[%s815 + $0x18] sm:$0xff]
    %v820 = vpack.c.bf16 %v810, %v810
    %821 = vmatprep.subr.bf16.mxu0 %v559
    %822 = vmatpush1.bf16.msra.mxu0 %v558
    %823 = vmatprep.subr.bf16.mxu0 %v555
    %824 = vmatpush1.bf16.msra.mxu0 %v554
    %825 = vmatprep.subr.bf16.mxu0 %v551
    %826 = vmatpush1.bf16.msra.mxu0 %v550
    %827 = vmatprep.subr.bf16.mxu0 %v547
    %828 = vmatpush1.bf16.msra.mxu0 %v546
    %829 = vmatprep.subr.bf16.mxu0 %v543
    %830 = vmatpush1.bf16.msra.mxu0 %v542
    %831 = vmatprep.subr.bf16.mxu0 %v539
    %832 = vmatpush1.bf16.msra.mxu0 %v538
    %833 = vmatprep.subr.bf16.mxu0 %v535
    %834 = vmatpush1.bf16.msra.mxu0 %v534
    %835 = vmatprep.subr.bf16.mxu0 %v531
    %836 = vmatpush1.bf16.msra.mxu0 %v530
    %837 = vmatprep.subr.bf16.mxu0 0
    %838 = vmatpush2.bf16.msra.mxu0 0
    %839 = vmatprep.subr.bf16.mxu0 0
    %840 = vmatpush2.bf16.msra.mxu0 0
    %841 = vmatprep.subr.bf16.mxu0 0
    %842 = vmatpush2.bf16.msra.mxu0 0
    %843 = vmatprep.subr.bf16.mxu0 0
    %844 = vmatpush2.bf16.msra.mxu0 0
    %845 = vmatprep.subr.bf16.mxu0 0
    %846 = vmatpush2.bf16.msra.mxu0 0
    %847 = vmatprep.subr.bf16.mxu0 0
    %848 = vmatpush2.bf16.msra.mxu0 0
    %849 = vmatprep.subr.bf16.mxu0 0
    %850 = vmatpush2.bf16.msra.mxu0 0
    %851 = vmatprep.subr.bf16.mxu0 0
    %852 = vmatpush2.bf16.msra.mxu0 0
    %853 = vmatprep.mubr.bf16.mxu0 0
    %854 = vmatmul.mubr.bf16.gmra.mxu0 %v820
    %v855 = vpop.f32.mrf.mxu0
    %v856 = vadd.f32 0.0, %v855
    %v857 = vpop.f32.mrf.mxu0
    %v858 = vadd.f32 0.0, %v857
    %v859 = vpop.f32.mrf.mxu0
    %v860 = vpop.f32.mrf.mxu0
    %861 = vdwg.mxu0
    %862 = vmatprep.subr.bf16.mxu0 %v561
    %863 = vmatpush1.bf16.msra.mxu0 %v560
    %864 = vmatprep.subr.bf16.mxu0 %v557
    %865 = vmatpush1.bf16.msra.mxu0 %v556
    %866 = vmatprep.subr.bf16.mxu0 %v553
    %867 = vmatpush1.bf16.msra.mxu0 %v552
    %868 = vmatprep.subr.bf16.mxu0 %v549
    %869 = vmatpush1.bf16.msra.mxu0 %v548
    %870 = vmatprep.subr.bf16.mxu0 %v545
    %871 = vmatpush1.bf16.msra.mxu0 %v544
    %872 = vmatprep.subr.bf16.mxu0 %v541
    %873 = vmatpush1.bf16.msra.mxu0 %v540
    %874 = vmatprep.subr.bf16.mxu0 %v537
    %875 = vmatpush1.bf16.msra.mxu0 %v536
    %876 = vmatprep.subr.bf16.mxu0 %v533
    %877 = vmatpush1.bf16.msra.mxu0 %v532
    %878 = vmatprep.subr.bf16.mxu0 0
    %879 = vmatpush2.bf16.msra.mxu0 0
    %880 = vmatprep.subr.bf16.mxu0 0
    %881 = vmatpush2.bf16.msra.mxu0 0
    %882 = vmatprep.subr.bf16.mxu0 0
    %883 = vmatpush2.bf16.msra.mxu0 0
    %884 = vmatprep.subr.bf16.mxu0 0
    %885 = vmatpush2.bf16.msra.mxu0 0
    %886 = vmatprep.subr.bf16.mxu0 0
    %887 = vmatpush2.bf16.msra.mxu0 0
    %888 = vmatprep.subr.bf16.mxu0 0
    %889 = vmatpush2.bf16.msra.mxu0 0
    %890 = vmatprep.subr.bf16.mxu0 0
    %891 = vmatpush2.bf16.msra.mxu0 0
    %892 = vmatprep.subr.bf16.mxu0 0
    %893 = vmatpush2.bf16.msra.mxu0 0
    %894 = vmatprep.mubr.bf16.mxu0 0
    %895 = vmatmul.mubr.bf16.gmra.mxu0 %v820
    %v896 = vpop.f32.mrf.mxu0
    %v897 = vadd.f32 0.0, %v896
    %v898 = vpop.f32.mrf.mxu0
    %v899 = vadd.f32 0.0, %v898
    %v900 = vpop.f32.mrf.mxu0
    %v901 = vpop.f32.mrf.mxu0
    %902 = vdwg.mxu0
    %v903 = vadd.f32 %v816, %v856
    %v904 = vadd.f32 %v817, %v858
    %v905 = vadd.f32 %v818, %v897
    %v906 = vadd.f32 %v819, %v899
    %v907 = vmul.f32 %v903, 0.5
    %v908 = vtanh.pop %v907
    %v909 = vmul.f32 %v908, 0.5
    %v910 = vadd.f32 %v909, 0.5
    %v911 = vmul.f32 %v904, 0.5
    %v912 = vtanh.pop %v911
    %v913 = vmul.f32 %v912, 0.5
    %v914 = vadd.f32 %v913, 0.5
    %v915 = vtanh.pop %v905
    %v916 = vmul.f32 %v906, 0.5
    %v917 = vtanh.pop %v916
    %v918 = vmul.f32 %v917, 0.5
    %v919 = vadd.f32 %v918, 0.5
    %v920 = vmul.f32 %v914, %v808
    %v921 = vmul.f32 %v910, %v915
    %v922 = vadd.f32 %v920, %v921
    %v923 = vtanh.pop %v922
    %v924 = vmul.f32 %v919, %v923
    %s925 = scalar_lea.vmem [#allocation2], 16
    %926 = vst [vmem:[%s925] sm:$0xff] %v924
    %s927 = smul.u32 3, 4
    %s928 = smul.addr %s927, 8
    %s929 = scalar_lea.vmem [#allocation3], %s928
    %v930 = vld [vmem:[%s929] sm:$0xff]
    %v931 = vld [vmem:[%s929 + $0x8] sm:$0xff]
    %v932 = vld [vmem:[%s929 + $0x10] sm:$0xff]
    %v933 = vld [vmem:[%s929 + $0x18] sm:$0xff]
    %v934 = vpack.c.bf16 %v924, %v924
    %935 = vmatprep.subr.bf16.mxu0 %v559
    %936 = vmatpush1.bf16.msra.mxu0 %v558
    %937 = vmatprep.subr.bf16.mxu0 %v555
    %938 = vmatpush1.bf16.msra.mxu0 %v554
    %939 = vmatprep.subr.bf16.mxu0 %v551
    %940 = vmatpush1.bf16.msra.mxu0 %v550
    %941 = vmatprep.subr.bf16.mxu0 %v547
    %942 = vmatpush1.bf16.msra.mxu0 %v546
    %943 = vmatprep.subr.bf16.mxu0 %v543
    %944 = vmatpush1.bf16.msra.mxu0 %v542
    %945 = vmatprep.subr.bf16.mxu0 %v539
    %946 = vmatpush1.bf16.msra.mxu0 %v538
    %947 = vmatprep.subr.bf16.mxu0 %v535
    %948 = vmatpush1.bf16.msra.mxu0 %v534
    %949 = vmatprep.subr.bf16.mxu0 %v531
    %950 = vmatpush1.bf16.msra.mxu0 %v530
    %951 = vmatprep.subr.bf16.mxu0 0
    %952 = vmatpush2.bf16.msra.mxu0 0
    %953 = vmatprep.subr.bf16.mxu0 0
    %954 = vmatpush2.bf16.msra.mxu0 0
    %955 = vmatprep.subr.bf16.mxu0 0
    %956 = vmatpush2.bf16.msra.mxu0 0
    %957 = vmatprep.subr.bf16.mxu0 0
    %958 = vmatpush2.bf16.msra.mxu0 0
    %959 = vmatprep.subr.bf16.mxu0 0
    %960 = vmatpush2.bf16.msra.mxu0 0
    %961 = vmatprep.subr.bf16.mxu0 0
    %962 = vmatpush2.bf16.msra.mxu0 0
    %963 = vmatprep.subr.bf16.mxu0 0
    %964 = vmatpush2.bf16.msra.mxu0 0
    %965 = vmatprep.subr.bf16.mxu0 0
    %966 = vmatpush2.bf16.msra.mxu0 0
    %967 = vmatprep.mubr.bf16.mxu0 0
    %968 = vmatmul.mubr.bf16.gmra.mxu0 %v934
    %v969 = vpop.f32.mrf.mxu0
    %v970 = vadd.f32 0.0, %v969
    %v971 = vpop.f32.mrf.mxu0
    %v972 = vadd.f32 0.0, %v971
    %v973 = vpop.f32.mrf.mxu0
    %v974 = vpop.f32.mrf.mxu0
    %975 = vdwg.mxu0
    %976 = vmatprep.subr.bf16.mxu0 %v561
    %977 = vmatpush1.bf16.msra.mxu0 %v560
    %978 = vmatprep.subr.bf16.mxu0 %v557
    %979 = vmatpush1.bf16.msra.mxu0 %v556
    %980 = vmatprep.subr.bf16.mxu0 %v553
    %981 = vmatpush1.bf16.msra.mxu0 %v552
    %982 = vmatprep.subr.bf16.mxu0 %v549
    %983 = vmatpush1.bf16.msra.mxu0 %v548
    %984 = vmatprep.subr.bf16.mxu0 %v545
    %985 = vmatpush1.bf16.msra.mxu0 %v544
    %986 = vmatprep.subr.bf16.mxu0 %v541
    %987 = vmatpush1.bf16.msra.mxu0 %v540
    %988 = vmatprep.subr.bf16.mxu0 %v537
    %989 = vmatpush1.bf16.msra.mxu0 %v536
    %990 = vmatprep.subr.bf16.mxu0 %v533
    %991 = vmatpush1.bf16.msra.mxu0 %v532
    %992 = vmatprep.subr.bf16.mxu0 0
    %993 = vmatpush2.bf16.msra.mxu0 0
    %994 = vmatprep.subr.bf16.mxu0 0
    %995 = vmatpush2.bf16.msra.mxu0 0
    %996 = vmatprep.subr.bf16.mxu0 0
    %997 = vmatpush2.bf16.msra.mxu0 0
    %998 = vmatprep.subr.bf16.mxu0 0
    %999 = vmatpush2.bf16.msra.mxu0 0
    %1000 = vmatprep.subr.bf16.mxu0 0
    %1001 = vmatpush2.bf16.msra.mxu0 0
    %1002 = vmatprep.subr.bf16.mxu0 0
    %1003 = vmatpush2.bf16.msra.mxu0 0
    %1004 = vmatprep.subr.bf16.mxu0 0
    %1005 = vmatpush2.bf16.msra.mxu0 0
    %1006 = vmatprep.subr.bf16.mxu0 0
    %1007 = vmatpush2.bf16.msra.mxu0 0
    %1008 = vmatprep.mubr.bf16.mxu0 0
    %1009 = vmatmul.mubr.bf16.gmra.mxu0 %v934
    %v1010 = vpop.f32.mrf.mxu0
    %v1011 = vadd.f32 0.0, %v1010
    %v1012 = vpop.f32.mrf.mxu0
    %v1013 = vadd.f32 0.0, %v1012
    %v1014 = vpop.f32.mrf.mxu0
    %v1015 = vpop.f32.mrf.mxu0
    %1016 = vdwg.mxu0
    %v1017 = vadd.f32 %v930, %v970
    %v1018 = vadd.f32 %v931, %v972
    %v1019 = vadd.f32 %v932, %v1011
    %v1020 = vadd.f32 %v933, %v1013
    %v1021 = vmul.f32 %v1017, 0.5
    %v1022 = vtanh.pop %v1021
    %v1023 = vmul.f32 %v1022, 0.5
    %v1024 = vadd.f32 %v1023, 0.5
    %v1025 = vmul.f32 %v1018, 0.5
    %v1026 = vtanh.pop %v1025
    %v1027 = vmul.f32 %v1026, 0.5
    %v1028 = vadd.f32 %v1027, 0.5
    %v1029 = vtanh.pop %v1019
    %v1030 = vmul.f32 %v1020, 0.5
    %v1031 = vtanh.pop %v1030
    %v1032 = vmul.f32 %v1031, 0.5
    %v1033 = vadd.f32 %v1032, 0.5
    %v1034 = vmul.f32 %v1028, %v922
    %v1035 = vmul.f32 %v1024, %v1029
    %v1036 = vadd.f32 %v1034, %v1035
    %v1037 = vtanh.pop %v1036
    %v1038 = vmul.f32 %v1033, %v1037
    %s1039 = scalar_lea.vmem [#allocation2], 24
    %1040 = vst [vmem:[%s1039] sm:$0xff] %v1038
    %s1041 = smul.u32 4, 4
    %s1042 = smul.addr %s1041, 8
    %s1043 = scalar_lea.vmem [#allocation3], %s1042
    %v1044 = vld [vmem:[%s1043] sm:$0xff]
    %v1045 = vld [vmem:[%s1043 + $0x8] sm:$0xff]
    %v1046 = vld [vmem:[%s1043 + $0x10] sm:$0xff]
    %v1047 = vld [vmem:[%s1043 + $0x18] sm:$0xff]
    %v1048 = vpack.c.bf16 %v1038, %v1038
    %1049 = vmatprep.subr.bf16.mxu0 %v559
    %1050 = vmatpush1.bf16.msra.mxu0 %v558
    %1051 = vmatprep.subr.bf16.mxu0 %v555
    %1052 = vmatpush1.bf16.msra.mxu0 %v554
    %1053 = vmatprep.subr.bf16.mxu0 %v551
    %1054 = vmatpush1.bf16.msra.mxu0 %v550
    %1055 = vmatprep.subr.bf16.mxu0 %v547
    %1056 = vmatpush1.bf16.msra.mxu0 %v546
    %1057 = vmatprep.subr.bf16.mxu0 %v543
    %1058 = vmatpush1.bf16.msra.mxu0 %v542
    %1059 = vmatprep.subr.bf16.mxu0 %v539
    %1060 = vmatpush1.bf16.msra.mxu0 %v538
    %1061 = vmatprep.subr.bf16.mxu0 %v535
    %1062 = vmatpush1.bf16.msra.mxu0 %v534
    %1063 = vmatprep.subr.bf16.mxu0 %v531
    %1064 = vmatpush1.bf16.msra.mxu0 %v530
    %1065 = vmatprep.subr.bf16.mxu0 0
    %1066 = vmatpush2.bf16.msra.mxu0 0
    %1067 = vmatprep.subr.bf16.mxu0 0
    %1068 = vmatpush2.bf16.msra.mxu0 0
    %1069 = vmatprep.subr.bf16.mxu0 0
    %1070 = vmatpush2.bf16.msra.mxu0 0
    %1071 = vmatprep.subr.bf16.mxu0 0
    %1072 = vmatpush2.bf16.msra.mxu0 0
    %1073 = vmatprep.subr.bf16.mxu0 0
    %1074 = vmatpush2.bf16.msra.mxu0 0
    %1075 = vmatprep.subr.bf16.mxu0 0
    %1076 = vmatpush2.bf16.msra.mxu0 0
    %1077 = vmatprep.subr.bf16.mxu0 0
    %1078 = vmatpush2.bf16.msra.mxu0 0
    %1079 = vmatprep.subr.bf16.mxu0 0
    %1080 = vmatpush2.bf16.msra.mxu0 0
    %1081 = vmatprep.mubr.bf16.mxu0 0
    %1082 = vmatmul.mubr.bf16.gmra.mxu0 %v1048
    %v1083 = vpop.f32.mrf.mxu0
    %v1084 = vadd.f32 0.0, %v1083
    %v1085 = vpop.f32.mrf.mxu0
    %v1086 = vadd.f32 0.0, %v1085
    %v1087 = vpop.f32.mrf.mxu0
    %v1088 = vpop.f32.mrf.mxu0
    %1089 = vdwg.mxu0
    %1090 = vmatprep.subr.bf16.mxu0 %v561
    %1091 = vmatpush1.bf16.msra.mxu0 %v560
    %1092 = vmatprep.subr.bf16.mxu0 %v557
    %1093 = vmatpush1.bf16.msra.mxu0 %v556
    %1094 = vmatprep.subr.bf16.mxu0 %v553
    %1095 = vmatpush1.bf16.msra.mxu0 %v552
    %1096 = vmatprep.subr.bf16.mxu0 %v549
    %1097 = vmatpush1.bf16.msra.mxu0 %v548
    %1098 = vmatprep.subr.bf16.mxu0 %v545
    %1099 = vmatpush1.bf16.msra.mxu0 %v544
    %1100 = vmatprep.subr.bf16.mxu0 %v541
    %1101 = vmatpush1.bf16.msra.mxu0 %v540
    %1102 = vmatprep.subr.bf16.mxu0 %v537
    %1103 = vmatpush1.bf16.msra.mxu0 %v536
    %1104 = vmatprep.subr.bf16.mxu0 %v533
    %1105 = vmatpush1.bf16.msra.mxu0 %v532
    %1106 = vmatprep.subr.bf16.mxu0 0
    %1107 = vmatpush2.bf16.msra.mxu0 0
    %1108 = vmatprep.subr.bf16.mxu0 0
    %1109 = vmatpush2.bf16.msra.mxu0 0
    %1110 = vmatprep.subr.bf16.mxu0 0
    %1111 = vmatpush2.bf16.msra.mxu0 0
    %1112 = vmatprep.subr.bf16.mxu0 0
    %1113 = vmatpush2.bf16.msra.mxu0 0
    %1114 = vmatprep.subr.bf16.mxu0 0
    %1115 = vmatpush2.bf16.msra.mxu0 0
    %1116 = vmatprep.subr.bf16.mxu0 0
    %1117 = vmatpush2.bf16.msra.mxu0 0
    %1118 = vmatprep.subr.bf16.mxu0 0
    %1119 = vmatpush2.bf16.msra.mxu0 0
    %1120 = vmatprep.subr.bf16.mxu0 0
    %1121 = vmatpush2.bf16.msra.mxu0 0
    %1122 = vmatprep.mubr.bf16.mxu0 0
    %1123 = vmatmul.mubr.bf16.gmra.mxu0 %v1048
    %v1124 = vpop.f32.mrf.mxu0
    %v1125 = vadd.f32 0.0, %v1124
    %v1126 = vpop.f32.mrf.mxu0
    %v1127 = vadd.f32 0.0, %v1126
    %v1128 = vpop.f32.mrf.mxu0
    %v1129 = vpop.f32.mrf.mxu0
    %1130 = vdwg.mxu0
    %v1131 = vadd.f32 %v1044, %v1084
    %v1132 = vadd.f32 %v1045, %v1086
    %v1133 = vadd.f32 %v1046, %v1125
    %v1134 = vadd.f32 %v1047, %v1127
    %v1135 = vmul.f32 %v1131, 0.5
    %v1136 = vtanh.pop %v1135
    %v1137 = vmul.f32 %v1136, 0.5
    %v1138 = vadd.f32 %v1137, 0.5
    %v1139 = vmul.f32 %v1132, 0.5
    %v1140 = vtanh.pop %v1139
    %v1141 = vmul.f32 %v1140, 0.5
    %v1142 = vadd.f32 %v1141, 0.5
    %v1143 = vtanh.pop %v1133
    %v1144 = vmul.f32 %v1134, 0.5
    %v1145 = vtanh.pop %v1144
    %v1146 = vmul.f32 %v1145, 0.5
    %v1147 = vadd.f32 %v1146, 0.5
    %v1148 = vmul.f32 %v1142, %v1036
    %v1149 = vmul.f32 %v1138, %v1143
    %v1150 = vadd.f32 %v1148, %v1149
    %v1151 = vtanh.pop %v1150
    %v1152 = vmul.f32 %v1147, %v1151
    %s1153 = scalar_lea.vmem [#allocation2], 32
    %1154 = vst [vmem:[%s1153] sm:$0xff] %v1152
    %s1155 = smul.u32 5, 4
    %s1156 = smul.addr %s1155, 8
    %s1157 = scalar_lea.vmem [#allocation3], %s1156
    %v1158 = vld [vmem:[%s1157] sm:$0xff]
    %v1159 = vld [vmem:[%s1157 + $0x8] sm:$0xff]
    %v1160 = vld [vmem:[%s1157 + $0x10] sm:$0xff]
    %v1161 = vld [vmem:[%s1157 + $0x18] sm:$0xff]
    %v1162 = vpack.c.bf16 %v1152, %v1152
    %1163 = vmatprep.subr.bf16.mxu0 %v559
    %1164 = vmatpush1.bf16.msra.mxu0 %v558
    %1165 = vmatprep.subr.bf16.mxu0 %v555
    %1166 = vmatpush1.bf16.msra.mxu0 %v554
    %1167 = vmatprep.subr.bf16.mxu0 %v551
    %1168 = vmatpush1.bf16.msra.mxu0 %v550
    %1169 = vmatprep.subr.bf16.mxu0 %v547
    %1170 = vmatpush1.bf16.msra.mxu0 %v546
    %1171 = vmatprep.subr.bf16.mxu0 %v543
    %1172 = vmatpush1.bf16.msra.mxu0 %v542
    %1173 = vmatprep.subr.bf16.mxu0 %v539
    %1174 = vmatpush1.bf16.msra.mxu0 %v538
    %1175 = vmatprep.subr.bf16.mxu0 %v535
    %1176 = vmatpush1.bf16.msra.mxu0 %v534
    %1177 = vmatprep.subr.bf16.mxu0 %v531
    %1178 = vmatpush1.bf16.msra.mxu0 %v530
    %1179 = vmatprep.subr.bf16.mxu0 0
    %1180 = vmatpush2.bf16.msra.mxu0 0
    %1181 = vmatprep.subr.bf16.mxu0 0
    %1182 = vmatpush2.bf16.msra.mxu0 0
    %1183 = vmatprep.subr.bf16.mxu0 0
    %1184 = vmatpush2.bf16.msra.mxu0 0
    %1185 = vmatprep.subr.bf16.mxu0 0
    %1186 = vmatpush2.bf16.msra.mxu0 0
    %1187 = vmatprep.subr.bf16.mxu0 0
    %1188 = vmatpush2.bf16.msra.mxu0 0
    %1189 = vmatprep.subr.bf16.mxu0 0
    %1190 = vmatpush2.bf16.msra.mxu0 0
    %1191 = vmatprep.subr.bf16.mxu0 0
    %1192 = vmatpush2.bf16.msra.mxu0 0
    %1193 = vmatprep.subr.bf16.mxu0 0
    %1194 = vmatpush2.bf16.msra.mxu0 0
    %1195 = vmatprep.mubr.bf16.mxu0 0
    %1196 = vmatmul.mubr.bf16.gmra.mxu0 %v1162
    %v1197 = vpop.f32.mrf.mxu0
    %v1198 = vadd.f32 0.0, %v1197
    %v1199 = vpop.f32.mrf.mxu0
    %v1200 = vadd.f32 0.0, %v1199
    %v1201 = vpop.f32.mrf.mxu0
    %v1202 = vpop.f32.mrf.mxu0
    %1203 = vdwg.mxu0
    %1204 = vmatprep.subr.bf16.mxu0 %v561
    %1205 = vmatpush1.bf16.msra.mxu0 %v560
    %1206 = vmatprep.subr.bf16.mxu0 %v557
    %1207 = vmatpush1.bf16.msra.mxu0 %v556
    %1208 = vmatprep.subr.bf16.mxu0 %v553
    %1209 = vmatpush1.bf16.msra.mxu0 %v552
    %1210 = vmatprep.subr.bf16.mxu0 %v549
    %1211 = vmatpush1.bf16.msra.mxu0 %v548
    %1212 = vmatprep.subr.bf16.mxu0 %v545
    %1213 = vmatpush1.bf16.msra.mxu0 %v544
    %1214 = vmatprep.subr.bf16.mxu0 %v541
    %1215 = vmatpush1.bf16.msra.mxu0 %v540
    %1216 = vmatprep.subr.bf16.mxu0 %v537
    %1217 = vmatpush1.bf16.msra.mxu0 %v536
    %1218 = vmatprep.subr.bf16.mxu0 %v533
    %1219 = vmatpush1.bf16.msra.mxu0 %v532
    %1220 = vmatprep.subr.bf16.mxu0 0
    %1221 = vmatpush2.bf16.msra.mxu0 0
    %1222 = vmatprep.subr.bf16.mxu0 0
    %1223 = vmatpush2.bf16.msra.mxu0 0
    %1224 = vmatprep.subr.bf16.mxu0 0
    %1225 = vmatpush2.bf16.msra.mxu0 0
    %1226 = vmatprep.subr.bf16.mxu0 0
    %1227 = vmatpush2.bf16.msra.mxu0 0
    %1228 = vmatprep.subr.bf16.mxu0 0
    %1229 = vmatpush2.bf16.msra.mxu0 0
    %1230 = vmatprep.subr.bf16.mxu0 0
    %1231 = vmatpush2.bf16.msra.mxu0 0
    %1232 = vmatprep.subr.bf16.mxu0 0
    %1233 = vmatpush2.bf16.msra.mxu0 0
    %1234 = vmatprep.subr.bf16.mxu0 0
    %1235 = vmatpush2.bf16.msra.mxu0 0
    %1236 = vmatprep.mubr.bf16.mxu0 0
    %1237 = vmatmul.mubr.bf16.gmra.mxu0 %v1162
    %v1238 = vpop.f32.mrf.mxu0
    %v1239 = vadd.f32 0.0, %v1238
    %v1240 = vpop.f32.mrf.mxu0
    %v1241 = vadd.f32 0.0, %v1240
    %v1242 = vpop.f32.mrf.mxu0
    %v1243 = vpop.f32.mrf.mxu0
    %1244 = vdwg.mxu0
    %v1245 = vadd.f32 %v1158, %v1198
    %v1246 = vadd.f32 %v1159, %v1200
    %v1247 = vadd.f32 %v1160, %v1239
    %v1248 = vadd.f32 %v1161, %v1241
    %v1249 = vmul.f32 %v1245, 0.5
    %v1250 = vtanh.pop %v1249
    %v1251 = vmul.f32 %v1250, 0.5
    %v1252 = vadd.f32 %v1251, 0.5
    %v1253 = vmul.f32 %v1246, 0.5
    %v1254 = vtanh.pop %v1253
    %v1255 = vmul.f32 %v1254, 0.5
    %v1256 = vadd.f32 %v1255, 0.5
    %v1257 = vtanh.pop %v1247
    %v1258 = vmul.f32 %v1248, 0.5
    %v1259 = vtanh.pop %v1258
    %v1260 = vmul.f32 %v1259, 0.5
    %v1261 = vadd.f32 %v1260, 0.5
    %v1262 = vmul.f32 %v1256, %v1150
    %v1263 = vmul.f32 %v1252, %v1257
    %v1264 = vadd.f32 %v1262, %v1263
    %v1265 = vtanh.pop %v1264
    %v1266 = vmul.f32 %v1261, %v1265
    %s1267 = scalar_lea.vmem [#allocation2], 40
    %1268 = vst [vmem:[%s1267] sm:$0xff] %v1266
    %s1269 = smul.u32 6, 4
    %s1270 = smul.addr %s1269, 8
    %s1271 = scalar_lea.vmem [#allocation3], %s1270
    %v1272 = vld [vmem:[%s1271] sm:$0xff]
    %v1273 = vld [vmem:[%s1271 + $0x8] sm:$0xff]
    %v1274 = vld [vmem:[%s1271 + $0x10] sm:$0xff]
    %v1275 = vld [vmem:[%s1271 + $0x18] sm:$0xff]
    %v1276 = vpack.c.bf16 %v1266, %v1266
    %1277 = vmatprep.subr.bf16.mxu0 %v559
    %1278 = vmatpush1.bf16.msra.mxu0 %v558
    %1279 = vmatprep.subr.bf16.mxu0 %v555
    %1280 = vmatpush1.bf16.msra.mxu0 %v554
    %1281 = vmatprep.subr.bf16.mxu0 %v551
    %1282 = vmatpush1.bf16.msra.mxu0 %v550
    %1283 = vmatprep.subr.bf16.mxu0 %v547
    %1284 = vmatpush1.bf16.msra.mxu0 %v546
    %1285 = vmatprep.subr.bf16.mxu0 %v543
    %1286 = vmatpush1.bf16.msra.mxu0 %v542
    %1287 = vmatprep.subr.bf16.mxu0 %v539
    %1288 = vmatpush1.bf16.msra.mxu0 %v538
    %1289 = vmatprep.subr.bf16.mxu0 %v535
    %1290 = vmatpush1.bf16.msra.mxu0 %v534
    %1291 = vmatprep.subr.bf16.mxu0 %v531
    %1292 = vmatpush1.bf16.msra.mxu0 %v530
    %1293 = vmatprep.subr.bf16.mxu0 0
    %1294 = vmatpush2.bf16.msra.mxu0 0
    %1295 = vmatprep.subr.bf16.mxu0 0
    %1296 = vmatpush2.bf16.msra.mxu0 0
    %1297 = vmatprep.subr.bf16.mxu0 0
    %1298 = vmatpush2.bf16.msra.mxu0 0
    %1299 = vmatprep.subr.bf16.mxu0 0
    %1300 = vmatpush2.bf16.msra.mxu0 0
    %1301 = vmatprep.subr.bf16.mxu0 0
    %1302 = vmatpush2.bf16.msra.mxu0 0
    %1303 = vmatprep.subr.bf16.mxu0 0
    %1304 = vmatpush2.bf16.msra.mxu0 0
    %1305 = vmatprep.subr.bf16.mxu0 0
    %1306 = vmatpush2.bf16.msra.mxu0 0
    %1307 = vmatprep.subr.bf16.mxu0 0
    %1308 = vmatpush2.bf16.msra.mxu0 0
    %1309 = vmatprep.mubr.bf16.mxu0 0
    %1310 = vmatmul.mubr.bf16.gmra.mxu0 %v1276
    %v1311 = vpop.f32.mrf.mxu0
    %v1312 = vadd.f32 0.0, %v1311
    %v1313 = vpop.f32.mrf.mxu0
    %v1314 = vadd.f32 0.0, %v1313
    %v1315 = vpop.f32.mrf.mxu0
    %v1316 = vpop.f32.mrf.mxu0
    %1317 = vdwg.mxu0
    %1318 = vmatprep.subr.bf16.mxu0 %v561
    %1319 = vmatpush1.bf16.msra.mxu0 %v560
    %1320 = vmatprep.subr.bf16.mxu0 %v557
    %1321 = vmatpush1.bf16.msra.mxu0 %v556
    %1322 = vmatprep.subr.bf16.mxu0 %v553
    %1323 = vmatpush1.bf16.msra.mxu0 %v552
    %1324 = vmatprep.subr.bf16.mxu0 %v549
    %1325 = vmatpush1.bf16.msra.mxu0 %v548
    %1326 = vmatprep.subr.bf16.mxu0 %v545
    %1327 = vmatpush1.bf16.msra.mxu0 %v544
    %1328 = vmatprep.subr.bf16.mxu0 %v541
    %1329 = vmatpush1.bf16.msra.mxu0 %v540
    %1330 = vmatprep.subr.bf16.mxu0 %v537
    %1331 = vmatpush1.bf16.msra.mxu0 %v536
    %1332 = vmatprep.subr.bf16.mxu0 %v533
    %1333 = vmatpush1.bf16.msra.mxu0 %v532
    %1334 = vmatprep.subr.bf16.mxu0 0
    %1335 = vmatpush2.bf16.msra.mxu0 0
    %1336 = vmatprep.subr.bf16.mxu0 0
    %1337 = vmatpush2.bf16.msra.mxu0 0
    %1338 = vmatprep.subr.bf16.mxu0 0
    %1339 = vmatpush2.bf16.msra.mxu0 0
    %1340 = vmatprep.subr.bf16.mxu0 0
    %1341 = vmatpush2.bf16.msra.mxu0 0
    %1342 = vmatprep.subr.bf16.mxu0 0
    %1343 = vmatpush2.bf16.msra.mxu0 0
    %1344 = vmatprep.subr.bf16.mxu0 0
    %1345 = vmatpush2.bf16.msra.mxu0 0
    %1346 = vmatprep.subr.bf16.mxu0 0
    %1347 = vmatpush2.bf16.msra.mxu0 0
    %1348 = vmatprep.subr.bf16.mxu0 0
    %1349 = vmatpush2.bf16.msra.mxu0 0
    %1350 = vmatprep.mubr.bf16.mxu0 0
    %1351 = vmatmul.mubr.bf16.gmra.mxu0 %v1276
    %v1352 = vpop.f32.mrf.mxu0
    %v1353 = vadd.f32 0.0, %v1352
    %v1354 = vpop.f32.mrf.mxu0
    %v1355 = vadd.f32 0.0, %v1354
    %v1356 = vpop.f32.mrf.mxu0
    %v1357 = vpop.f32.mrf.mxu0
    %1358 = vdwg.mxu0
    %v1359 = vadd.f32 %v1272, %v1312
    %v1360 = vadd.f32 %v1273, %v1314
    %v1361 = vadd.f32 %v1274, %v1353
    %v1362 = vadd.f32 %v1275, %v1355
    %v1363 = vmul.f32 %v1359, 0.5
    %v1364 = vtanh.pop %v1363
    %v1365 = vmul.f32 %v1364, 0.5
    %v1366 = vadd.f32 %v1365, 0.5
    %v1367 = vmul.f32 %v1360, 0.5
    %v1368 = vtanh.pop %v1367
    %v1369 = vmul.f32 %v1368, 0.5
    %v1370 = vadd.f32 %v1369, 0.5
    %v1371 = vtanh.pop %v1361
    %v1372 = vmul.f32 %v1362, 0.5
    %v1373 = vtanh.pop %v1372
    %v1374 = vmul.f32 %v1373, 0.5
    %v1375 = vadd.f32 %v1374, 0.5
    %v1376 = vmul.f32 %v1370, %v1264
    %v1377 = vmul.f32 %v1366, %v1371
    %v1378 = vadd.f32 %v1376, %v1377
    %v1379 = vtanh.pop %v1378
    %v1380 = vmul.f32 %v1375, %v1379
    %s1381 = scalar_lea.vmem [#allocation2], 48
    %1382 = vst [vmem:[%s1381] sm:$0xff] %v1380
    %s1383 = smul.u32 7, 4
    %s1384 = smul.addr %s1383, 8
    %s1385 = scalar_lea.vmem [#allocation3], %s1384
    %v1386 = vld [vmem:[%s1385] sm:$0xff]
    %v1387 = vld [vmem:[%s1385 + $0x8] sm:$0xff]
    %v1388 = vld [vmem:[%s1385 + $0x10] sm:$0xff]
    %v1389 = vld [vmem:[%s1385 + $0x18] sm:$0xff]
    %v1390 = vpack.c.bf16 %v1380, %v1380
    %1391 = vmatprep.subr.bf16.mxu0 %v559
    %1392 = vmatpush1.bf16.msra.mxu0 %v558
    %1393 = vmatprep.subr.bf16.mxu0 %v555
    %1394 = vmatpush1.bf16.msra.mxu0 %v554
    %1395 = vmatprep.subr.bf16.mxu0 %v551
    %1396 = vmatpush1.bf16.msra.mxu0 %v550
    %1397 = vmatprep.subr.bf16.mxu0 %v547
    %1398 = vmatpush1.bf16.msra.mxu0 %v546
    %1399 = vmatprep.subr.bf16.mxu0 %v543
    %1400 = vmatpush1.bf16.msra.mxu0 %v542
    %1401 = vmatprep.subr.bf16.mxu0 %v539
    %1402 = vmatpush1.bf16.msra.mxu0 %v538
    %1403 = vmatprep.subr.bf16.mxu0 %v535
    %1404 = vmatpush1.bf16.msra.mxu0 %v534
    %1405 = vmatprep.subr.bf16.mxu0 %v531
    %1406 = vmatpush1.bf16.msra.mxu0 %v530
    %1407 = vmatprep.subr.bf16.mxu0 0
    %1408 = vmatpush2.bf16.msra.mxu0 0
    %1409 = vmatprep.subr.bf16.mxu0 0
    %1410 = vmatpush2.bf16.msra.mxu0 0
    %1411 = vmatprep.subr.bf16.mxu0 0
    %1412 = vmatpush2.bf16.msra.mxu0 0
    %1413 = vmatprep.subr.bf16.mxu0 0
    %1414 = vmatpush2.bf16.msra.mxu0 0
    %1415 = vmatprep.subr.bf16.mxu0 0
    %1416 = vmatpush2.bf16.msra.mxu0 0
    %1417 = vmatprep.subr.bf16.mxu0 0
    %1418 = vmatpush2.bf16.msra.mxu0 0
    %1419 = vmatprep.subr.bf16.mxu0 0
    %1420 = vmatpush2.bf16.msra.mxu0 0
    %1421 = vmatprep.subr.bf16.mxu0 0
    %1422 = vmatpush2.bf16.msra.mxu0 0
    %1423 = vmatprep.mubr.bf16.mxu0 0
    %1424 = vmatmul.mubr.bf16.gmra.mxu0 %v1390
    %v1425 = vpop.f32.mrf.mxu0
    %v1426 = vadd.f32 0.0, %v1425
    %v1427 = vpop.f32.mrf.mxu0
    %v1428 = vadd.f32 0.0, %v1427
    %v1429 = vpop.f32.mrf.mxu0
    %v1430 = vpop.f32.mrf.mxu0
    %1431 = vdwg.mxu0
    %1432 = vmatprep.subr.bf16.mxu0 %v561
    %1433 = vmatpush1.bf16.msra.mxu0 %v560
    %1434 = vmatprep.subr.bf16.mxu0 %v557
    %1435 = vmatpush1.bf16.msra.mxu0 %v556
    %1436 = vmatprep.subr.bf16.mxu0 %v553
    %1437 = vmatpush1.bf16.msra.mxu0 %v552
    %1438 = vmatprep.subr.bf16.mxu0 %v549
    %1439 = vmatpush1.bf16.msra.mxu0 %v548
    %1440 = vmatprep.subr.bf16.mxu0 %v545
    %1441 = vmatpush1.bf16.msra.mxu0 %v544
    %1442 = vmatprep.subr.bf16.mxu0 %v541
    %1443 = vmatpush1.bf16.msra.mxu0 %v540
    %1444 = vmatprep.subr.bf16.mxu0 %v537
    %1445 = vmatpush1.bf16.msra.mxu0 %v536
    %1446 = vmatprep.subr.bf16.mxu0 %v533
    %1447 = vmatpush1.bf16.msra.mxu0 %v532
    %1448 = vmatprep.subr.bf16.mxu0 0
    %1449 = vmatpush2.bf16.msra.mxu0 0
    %1450 = vmatprep.subr.bf16.mxu0 0
    %1451 = vmatpush2.bf16.msra.mxu0 0
    %1452 = vmatprep.subr.bf16.mxu0 0
    %1453 = vmatpush2.bf16.msra.mxu0 0
    %1454 = vmatprep.subr.bf16.mxu0 0
    %1455 = vmatpush2.bf16.msra.mxu0 0
    %1456 = vmatprep.subr.bf16.mxu0 0
    %1457 = vmatpush2.bf16.msra.mxu0 0
    %1458 = vmatprep.subr.bf16.mxu0 0
    %1459 = vmatpush2.bf16.msra.mxu0 0
    %1460 = vmatprep.subr.bf16.mxu0 0
    %1461 = vmatpush2.bf16.msra.mxu0 0
    %1462 = vmatprep.subr.bf16.mxu0 0
    %1463 = vmatpush2.bf16.msra.mxu0 0
    %1464 = vmatprep.mubr.bf16.mxu0 0
    %1465 = vmatmul.mubr.bf16.gmra.mxu0 %v1390
    %v1466 = vpop.f32.mrf.mxu0
    %v1467 = vadd.f32 0.0, %v1466
    %v1468 = vpop.f32.mrf.mxu0
    %v1469 = vadd.f32 0.0, %v1468
    %v1470 = vpop.f32.mrf.mxu0
    %v1471 = vpop.f32.mrf.mxu0
    %1472 = vdwg.mxu0
    %v1473 = vadd.f32 %v1386, %v1426
    %v1474 = vadd.f32 %v1387, %v1428
    %v1475 = vadd.f32 %v1388, %v1467
    %v1476 = vadd.f32 %v1389, %v1469
    %v1477 = vmul.f32 %v1473, 0.5
    %v1478 = vtanh.pop %v1477
    %v1479 = vmul.f32 %v1478, 0.5
    %v1480 = vadd.f32 %v1479, 0.5
    %v1481 = vmul.f32 %v1474, 0.5
    %v1482 = vtanh.pop %v1481
    %v1483 = vmul.f32 %v1482, 0.5
    %v1484 = vadd.f32 %v1483, 0.5
    %v1485 = vtanh.pop %v1475
    %v1486 = vmul.f32 %v1476, 0.5
    %v1487 = vtanh.pop %v1486
    %v1488 = vmul.f32 %v1487, 0.5
    %v1489 = vadd.f32 %v1488, 0.5
    %v1490 = vmul.f32 %v1484, %v1378
    %v1491 = vmul.f32 %v1480, %v1485
    %v1492 = vadd.f32 %v1490, %v1491
    %v1493 = vtanh.pop %v1492
    %v1494 = vmul.f32 %v1489, %v1493
    %s1495 = scalar_lea.vmem [#allocation2], 56
    %1496 = vst [vmem:[%s1495] sm:$0xff] %v1494
    %v1497 = vld [vmem:[#allocation2] sm:$0xff]
    %v1498 = vld [vmem:[#allocation2 + $0x8] sm:$0xff]
    %v1499 = vld [vmem:[#allocation2 + $0x10] sm:$0xff]
    %v1500 = vld [vmem:[#allocation2 + $0x18] sm:$0xff]
    %v1501 = vld [vmem:[#allocation2 + $0x20] sm:$0xff]
    %v1502 = vld [vmem:[#allocation2 + $0x28] sm:$0xff]
    %v1503 = vld [vmem:[#allocation2 + $0x30] sm:$0xff]
    %v1504 = vld [vmem:[#allocation2 + $0x38] sm:$0xff]
    %v1505 = vpack.c.bf16 %v1498, %v1497
    %v1506 = vpack.c.bf16 %v1500, %v1499
    %v1507 = vpack.c.bf16 %v1502, %v1501
    %v1508 = vpack.c.bf16 %v1504, %v1503
    %v1509 = vld [vmem:[#allocation9] sm:$0xff]
    %v1510 = vld [vmem:[#allocation9 + $0x8] sm:$0xff]
    %v1511 = vld [vmem:[#allocation9 + $0x10] sm:$0xff]
    %v1512 = vld [vmem:[#allocation9 + $0x18] sm:$0xff]
    %v1513 = vld [vmem:[#allocation9 + $0x20] sm:$0xff]
    %v1514 = vld [vmem:[#allocation9 + $0x28] sm:$0xff]
    %v1515 = vld [vmem:[#allocation9 + $0x30] sm:$0xff]
    %v1516 = vld [vmem:[#allocation9 + $0x38] sm:$0xff]
    %v1517 = vld [vmem:[#allocation9 + $0x40] sm:$0xff]
    %v1518 = vld [vmem:[#allocation9 + $0x48] sm:$0xff]
    %v1519 = vld [vmem:[#allocation9 + $0x50] sm:$0xff]
    %v1520 = vld [vmem:[#allocation9 + $0x58] sm:$0xff]
    %v1521 = vld [vmem:[#allocation9 + $0x60] sm:$0xff]
    %v1522 = vld [vmem:[#allocation9 + $0x68] sm:$0xff]
    %v1523 = vld [vmem:[#allocation9 + $0x70] sm:$0xff]
    %v1524 = vld [vmem:[#allocation9 + $0x78] sm:$0xff]
    %v1525 = vld [vmem:[#allocation9 + $0x80] sm:$0xff]
    %v1526 = vld [vmem:[#allocation9 + $0x88] sm:$0xff]
    %v1527 = vld [vmem:[#allocation9 + $0x90] sm:$0xff]
    %v1528 = vld [vmem:[#allocation9 + $0x98] sm:$0xff]
    %v1529 = vld [vmem:[#allocation9 + $0xa0] sm:$0xff]
    %v1530 = vld [vmem:[#allocation9 + $0xa8] sm:$0xff]
    %v1531 = vld [vmem:[#allocation9 + $0xb0] sm:$0xff]
    %v1532 = vld [vmem:[#allocation9 + $0xb8] sm:$0xff]
    %v1533 = vld [vmem:[#allocation9 + $0xc0] sm:$0xff]
    %v1534 = vld [vmem:[#allocation9 + $0xc8] sm:$0xff]
    %v1535 = vld [vmem:[#allocation9 + $0xd0] sm:$0xff]
    %v1536 = vld [vmem:[#allocation9 + $0xd8] sm:$0xff]
    %v1537 = vld [vmem:[#allocation9 + $0xe0] sm:$0xff]
    %v1538 = vld [vmem:[#allocation9 + $0xe8] sm:$0xff]
    %v1539 = vld [vmem:[#allocation9 + $0xf0] sm:$0xff]
    %v1540 = vld [vmem:[#allocation9 + $0xf8] sm:$0xff]
    %v1541 = vld [vmem:[#allocation12] sm:$0xf]
    %v1543 = vlaneseq
    %v1544 = vshrl.u32 %v1543, 7
    %v1545 = vsub.s32 0, %v1544
    %v1546 = vrot.slane %v1541, %v1545
    %v1547 = vlaneseq
    %v1548 = vshrl.u32 %v1547, 7
    %v1549 = vsub.s32 1, %v1548
    %v1550 = vrot.slane %v1541, %v1549
    %v1551 = vlaneseq
    %v1552 = vshrl.u32 %v1551, 7
    %v1553 = vsub.s32 2, %v1552
    %v1554 = vrot.slane %v1541, %v1553
    %v1555 = vlaneseq
    %v1556 = vshrl.u32 %v1555, 7
    %v1557 = vsub.s32 3, %v1556
    %v1558 = vrot.slane %v1541, %v1557
    %v1595 = vunpack.c.l.b16 %v1509
    %v1596 = vunpack.c.h.b16 %v1509
    %v1597 = vunpack.c.l.b16 %v1510
    %v1598 = vunpack.c.h.b16 %v1510
    %v1599 = vunpack.c.l.b16 %v1511
    %v1600 = vunpack.c.h.b16 %v1511
    %v1601 = vunpack.c.l.b16 %v1512
    %v1602 = vunpack.c.h.b16 %v1512
    %v1603 = vunpack.c.l.b16 %v1513
    %v1604 = vunpack.c.h.b16 %v1513
    %v1605 = vunpack.c.l.b16 %v1514
    %v1606 = vunpack.c.h.b16 %v1514
    %v1607 = vunpack.c.l.b16 %v1515
    %v1608 = vunpack.c.h.b16 %v1515
    %v1609 = vunpack.c.l.b16 %v1516
    %v1610 = vunpack.c.h.b16 %v1516
    %v1611 = vunpack.c.l.b16 %v1517
    %v1612 = vunpack.c.h.b16 %v1517
    %v1613 = vunpack.c.l.b16 %v1518
    %v1614 = vunpack.c.h.b16 %v1518
    %v1615 = vunpack.c.l.b16 %v1519
    %v1616 = vunpack.c.h.b16 %v1519
    %v1617 = vunpack.c.l.b16 %v1520
    %v1618 = vunpack.c.h.b16 %v1520
    %v1619 = vunpack.c.l.b16 %v1521
    %v1620 = vunpack.c.h.b16 %v1521
    %v1621 = vunpack.c.l.b16 %v1522
    %v1622 = vunpack.c.h.b16 %v1522
    %v1623 = vunpack.c.l.b16 %v1523
    %v1624 = vunpack.c.h.b16 %v1523
    %v1625 = vunpack.c.l.b16 %v1524
    %v1626 = vunpack.c.h.b16 %v1524
    %v1627 = vunpack.c.l.b16 %v1525
    %v1628 = vunpack.c.h.b16 %v1525
    %v1629 = vunpack.c.l.b16 %v1526
    %v1630 = vunpack.c.h.b16 %v1526
    %v1631 = vunpack.c.l.b16 %v1527
    %v1632 = vunpack.c.h.b16 %v1527
    %v1633 = vunpack.c.l.b16 %v1528
    %v1634 = vunpack.c.h.b16 %v1528
    %v1635 = vunpack.c.l.b16 %v1529
    %v1636 = vunpack.c.h.b16 %v1529
    %v1637 = vunpack.c.l.b16 %v1530
    %v1638 = vunpack.c.h.b16 %v1530
    %v1639 = vunpack.c.l.b16 %v1531
    %v1640 = vunpack.c.h.b16 %v1531
    %v1641 = vunpack.c.l.b16 %v1532
    %v1642 = vunpack.c.h.b16 %v1532
    %v1643 = vunpack.c.l.b16 %v1533
    %v1644 = vunpack.c.h.b16 %v1533
    %v1645 = vunpack.c.l.b16 %v1534
    %v1646 = vunpack.c.h.b16 %v1534
    %v1647 = vunpack.c.l.b16 %v1535
    %v1648 = vunpack.c.h.b16 %v1535
    %v1649 = vunpack.c.l.b16 %v1536
    %v1650 = vunpack.c.h.b16 %v1536
    %v1651 = vunpack.c.l.b16 %v1537
    %v1652 = vunpack.c.h.b16 %v1537
    %v1653 = vunpack.c.l.b16 %v1538
    %v1654 = vunpack.c.h.b16 %v1538
    %v1655 = vunpack.c.l.b16 %v1539
    %v1656 = vunpack.c.h.b16 %v1539
    %v1657 = vunpack.c.l.b16 %v1540
    %v1658 = vunpack.c.h.b16 %v1540
    %v1659 = vpack.c.b16 %v1599, %v1595
    %v1660 = vpack.c.b16 %v1600, %v1596
    %v1661 = vpack.c.b16 %v1601, %v1597
    %v1662 = vpack.c.b16 %v1602, %v1598
    %v1663 = vpack.c.b16 %v1607, %v1603
    %v1664 = vpack.c.b16 %v1608, %v1604
    %v1665 = vpack.c.b16 %v1609, %v1605
    %v1666 = vpack.c.b16 %v1610, %v1606
    %v1667 = vpack.c.b16 %v1615, %v1611
    %v1668 = vpack.c.b16 %v1616, %v1612
    %v1669 = vpack.c.b16 %v1617, %v1613
    %v1670 = vpack.c.b16 %v1618, %v1614
    %v1671 = vpack.c.b16 %v1623, %v1619
    %v1672 = vpack.c.b16 %v1624, %v1620
    %v1673 = vpack.c.b16 %v1625, %v1621
    %v1674 = vpack.c.b16 %v1626, %v1622
    %v1675 = vpack.c.b16 %v1631, %v1627
    %v1676 = vpack.c.b16 %v1632, %v1628
    %v1677 = vpack.c.b16 %v1633, %v1629
    %v1678 = vpack.c.b16 %v1634, %v1630
    %v1679 = vpack.c.b16 %v1639, %v1635
    %v1680 = vpack.c.b16 %v1640, %v1636
    %v1681 = vpack.c.b16 %v1641, %v1637
    %v1682 = vpack.c.b16 %v1642, %v1638
    %v1683 = vpack.c.b16 %v1647, %v1643
    %v1684 = vpack.c.b16 %v1648, %v1644
    %v1685 = vpack.c.b16 %v1649, %v1645
    %v1686 = vpack.c.b16 %v1650, %v1646
    %v1687 = vpack.c.b16 %v1655, %v1651
    %v1688 = vpack.c.b16 %v1656, %v1652
    %v1689 = vpack.c.b16 %v1657, %v1653
    %v1690 = vpack.c.b16 %v1658, %v1654
    %1723 = vmatprep.subr.bf16.mxu0 %v1688
    %1724 = vmatpush1.bf16.msra.mxu0 %v1687
    %1725 = vmatprep.subr.bf16.mxu0 %v1684
    %1726 = vmatpush1.bf16.msra.mxu0 %v1683
    %1727 = vmatprep.subr.bf16.mxu0 %v1680
    %1728 = vmatpush1.bf16.msra.mxu0 %v1679
    %1729 = vmatprep.subr.bf16.mxu0 %v1676
    %1730 = vmatpush1.bf16.msra.mxu0 %v1675
    %1731 = vmatprep.subr.bf16.mxu0 %v1672
    %1732 = vmatpush1.bf16.msra.mxu0 %v1671
    %1733 = vmatprep.subr.bf16.mxu0 %v1668
    %1734 = vmatpush1.bf16.msra.mxu0 %v1667
    %1735 = vmatprep.subr.bf16.mxu0 %v1664
    %1736 = vmatpush1.bf16.msra.mxu0 %v1663
    %1737 = vmatprep.subr.bf16.mxu0 %v1660
    %1738 = vmatpush1.bf16.msra.mxu0 %v1659
    %1739 = vmatprep.subr.bf16.mxu0 0
    %1740 = vmatpush2.bf16.msra.mxu0 0
    %1741 = vmatprep.subr.bf16.mxu0 0
    %1742 = vmatpush2.bf16.msra.mxu0 0
    %1743 = vmatprep.subr.bf16.mxu0 0
    %1744 = vmatpush2.bf16.msra.mxu0 0
    %1745 = vmatprep.subr.bf16.mxu0 0
    %1746 = vmatpush2.bf16.msra.mxu0 0
    %1747 = vmatprep.subr.bf16.mxu0 0
    %1748 = vmatpush2.bf16.msra.mxu0 0
    %1749 = vmatprep.subr.bf16.mxu0 0
    %1750 = vmatpush2.bf16.msra.mxu0 0
    %1751 = vmatprep.subr.bf16.mxu0 0
    %1752 = vmatpush2.bf16.msra.mxu0 0
    %1753 = vmatprep.subr.bf16.mxu0 0
    %1754 = vmatpush2.bf16.msra.mxu0 0
    %1755 = vmatprep.mubr.bf16.mxu0 0
    %1756 = vmatmul.mubr.bf16.gmra.mxu0 %v1505
    %v1757 = vpop.f32.mrf.mxu0
    %v1758 = vadd.f32 %v1546, %v1757
    %v1759 = vpop.f32.mrf.mxu0
    %v1760 = vadd.f32 %v1550, %v1759
    %v1761 = vpop.f32.mrf.mxu0
    %v1762 = vadd.f32 %v1546, %v1761
    %v1763 = vpop.f32.mrf.mxu0
    %v1764 = vadd.f32 %v1550, %v1763
    %1765 = vmatprep.mubr.bf16.mxu0 0
    %1766 = vmatmul.mubr.bf16.gmra.mxu0 %v1506
    %v1767 = vpop.f32.mrf.mxu0
    %v1768 = vadd.f32 %v1546, %v1767
    %v1769 = vpop.f32.mrf.mxu0
    %v1770 = vadd.f32 %v1550, %v1769
    %v1771 = vpop.f32.mrf.mxu0
    %v1772 = vadd.f32 %v1546, %v1771
    %v1773 = vpop.f32.mrf.mxu0
    %v1774 = vadd.f32 %v1550, %v1773
    %1775 = vmatprep.mubr.bf16.mxu0 0
    %1776 = vmatmul.mubr.bf16.gmra.mxu0 %v1507
    %v1777 = vpop.f32.mrf.mxu0
    %v1778 = vadd.f32 %v1546, %v1777
    %v1779 = vpop.f32.mrf.mxu0
    %v1780 = vadd.f32 %v1550, %v1779
    %v1781 = vpop.f32.mrf.mxu0
    %v1782 = vadd.f32 %v1546, %v1781
    %v1783 = vpop.f32.mrf.mxu0
    %v1784 = vadd.f32 %v1550, %v1783
    %1785 = vmatprep.mubr.bf16.mxu0 0
    %1786 = vmatmul.mubr.bf16.gmra.mxu0 %v1508
    %v1787 = vpop.f32.mrf.mxu0
    %v1788 = vadd.f32 %v1546, %v1787
    %v1789 = vpop.f32.mrf.mxu0
    %v1790 = vadd.f32 %v1550, %v1789
    %v1791 = vpop.f32.mrf.mxu0
    %v1792 = vadd.f32 %v1546, %v1791
    %v1793 = vpop.f32.mrf.mxu0
    %v1794 = vadd.f32 %v1550, %v1793
    %1795 = vdwg.mxu0
    %1796 = vmatprep.subr.bf16.mxu0 %v1690
    %1797 = vmatpush1.bf16.msra.mxu0 %v1689
    %1798 = vmatprep.subr.bf16.mxu0 %v1686
    %1799 = vmatpush1.bf16.msra.mxu0 %v1685
    %1800 = vmatprep.subr.bf16.mxu0 %v1682
    %1801 = vmatpush1.bf16.msra.mxu0 %v1681
    %1802 = vmatprep.subr.bf16.mxu0 %v1678
    %1803 = vmatpush1.bf16.msra.mxu0 %v1677
    %1804 = vmatprep.subr.bf16.mxu0 %v1674
    %1805 = vmatpush1.bf16.msra.mxu0 %v1673
    %1806 = vmatprep.subr.bf16.mxu0 %v1670
    %1807 = vmatpush1.bf16.msra.mxu0 %v1669
    %1808 = vmatprep.subr.bf16.mxu0 %v1666
    %1809 = vmatpush1.bf16.msra.mxu0 %v1665
    %1810 = vmatprep.subr.bf16.mxu0 %v1662
    %1811 = vmatpush1.bf16.msra.mxu0 %v1661
    %1812 = vmatprep.subr.bf16.mxu0 0
    %1813 = vmatpush2.bf16.msra.mxu0 0
    %1814 = vmatprep.subr.bf16.mxu0 0
    %1815 = vmatpush2.bf16.msra.mxu0 0
    %1816 = vmatprep.subr.bf16.mxu0 0
    %1817 = vmatpush2.bf16.msra.mxu0 0
    %1818 = vmatprep.subr.bf16.mxu0 0
    %1819 = vmatpush2.bf16.msra.mxu0 0
    %1820 = vmatprep.subr.bf16.mxu0 0
    %1821 = vmatpush2.bf16.msra.mxu0 0
    %1822 = vmatprep.subr.bf16.mxu0 0
    %1823 = vmatpush2.bf16.msra.mxu0 0
    %1824 = vmatprep.subr.bf16.mxu0 0
    %1825 = vmatpush2.bf16.msra.mxu0 0
    %1826 = vmatprep.subr.bf16.mxu0 0
    %1827 = vmatpush2.bf16.msra.mxu0 0
    %1828 = vmatprep.mubr.bf16.mxu0 0
    %1829 = vmatmul.mubr.bf16.gmra.mxu0 %v1505
    %v1830 = vpop.f32.mrf.mxu0
    %v1831 = vadd.f32 %v1554, %v1830
    %v1832 = vpop.f32.mrf.mxu0
    %v1833 = vadd.f32 %v1558, %v1832
    %v1834 = vpop.f32.mrf.mxu0
    %v1835 = vadd.f32 %v1554, %v1834
    %v1836 = vpop.f32.mrf.mxu0
    %v1837 = vadd.f32 %v1558, %v1836
    %1838 = vmatprep.mubr.bf16.mxu0 0
    %1839 = vmatmul.mubr.bf16.gmra.mxu0 %v1506
    %v1840 = vpop.f32.mrf.mxu0
    %v1841 = vadd.f32 %v1554, %v1840
    %v1842 = vpop.f32.mrf.mxu0
    %v1843 = vadd.f32 %v1558, %v1842
    %v1844 = vpop.f32.mrf.mxu0
    %v1845 = vadd.f32 %v1554, %v1844
    %v1846 = vpop.f32.mrf.mxu0
    %v1847 = vadd.f32 %v1558, %v1846
    %1848 = vmatprep.mubr.bf16.mxu0 0
    %1849 = vmatmul.mubr.bf16.gmra.mxu0 %v1507
    %v1850 = vpop.f32.mrf.mxu0
    %v1851 = vadd.f32 %v1554, %v1850
    %v1852 = vpop.f32.mrf.mxu0
    %v1853 = vadd.f32 %v1558, %v1852
    %v1854 = vpop.f32.mrf.mxu0
    %v1855 = vadd.f32 %v1554, %v1854
    %v1856 = vpop.f32.mrf.mxu0
    %v1857 = vadd.f32 %v1558, %v1856
    %1858 = vmatprep.mubr.bf16.mxu0 0
    %1859 = vmatmul.mubr.bf16.gmra.mxu0 %v1508
    %v1860 = vpop.f32.mrf.mxu0
    %v1861 = vadd.f32 %v1554, %v1860
    %v1862 = vpop.f32.mrf.mxu0
    %v1863 = vadd.f32 %v1558, %v1862
    %v1864 = vpop.f32.mrf.mxu0
    %v1865 = vadd.f32 %v1554, %v1864
    %v1866 = vpop.f32.mrf.mxu0
    %v1867 = vadd.f32 %v1558, %v1866
    %1868 = vdwg.mxu0
    %1869 = vst [vmem:[#allocation3] sm:$0xff] %v1758
    %1870 = vst [vmem:[#allocation3 + $0x8] sm:$0xff] %v1760
    %1871 = vst [vmem:[#allocation3 + $0x10] sm:$0xff] %v1831
    %1872 = vst [vmem:[#allocation3 + $0x18] sm:$0xff] %v1833
    %1873 = vst [vmem:[#allocation3 + $0x20] sm:$0xff] %v1762
    %1874 = vst [vmem:[#allocation3 + $0x28] sm:$0xff] %v1764
    %1875 = vst [vmem:[#allocation3 + $0x30] sm:$0xff] %v1835
    %1876 = vst [vmem:[#allocation3 + $0x38] sm:$0xff] %v1837
    %1877 = vst [vmem:[#allocation3 + $0x40] sm:$0xff] %v1768
    %1878 = vst [vmem:[#allocation3 + $0x48] sm:$0xff] %v1770
    %1879 = vst [vmem:[#allocation3 + $0x50] sm:$0xff] %v1841
    %1880 = vst [vmem:[#allocation3 + $0x58] sm:$0xff] %v1843
    %1881 = vst [vmem:[#allocation3 + $0x60] sm:$0xff] %v1772
    %1882 = vst [vmem:[#allocation3 + $0x68] sm:$0xff] %v1774
    %1883 = vst [vmem:[#allocation3 + $0x70] sm:$0xff] %v1845
    %1884 = vst [vmem:[#allocation3 + $0x78] sm:$0xff] %v1847
    %1885 = vst [vmem:[#allocation3 + $0x80] sm:$0xff] %v1778
    %1886 = vst [vmem:[#allocation3 + $0x88] sm:$0xff] %v1780
    %1887 = vst [vmem:[#allocation3 + $0x90] sm:$0xff] %v1851
    %1888 = vst [vmem:[#allocation3 + $0x98] sm:$0xff] %v1853
    %1889 = vst [vmem:[#allocation3 + $0xa0] sm:$0xff] %v1782
    %1890 = vst [vmem:[#allocation3 + $0xa8] sm:$0xff] %v1784
    %1891 = vst [vmem:[#allocation3 + $0xb0] sm:$0xff] %v1855
    %1892 = vst [vmem:[#allocation3 + $0xb8] sm:$0xff] %v1857
    %1893 = vst [vmem:[#allocation3 + $0xc0] sm:$0xff] %v1788
    %1894 = vst [vmem:[#allocation3 + $0xc8] sm:$0xff] %v1790
    %1895 = vst [vmem:[#allocation3 + $0xd0] sm:$0xff] %v1861
    %1896 = vst [vmem:[#allocation3 + $0xd8] sm:$0xff] %v1863
    %1897 = vst [vmem:[#allocation3 + $0xe0] sm:$0xff] %v1792
    %1898 = vst [vmem:[#allocation3 + $0xe8] sm:$0xff] %v1794
    %1899 = vst [vmem:[#allocation3 + $0xf0] sm:$0xff] %v1865
    %1900 = vst [vmem:[#allocation3 + $0xf8] sm:$0xff] %v1867
    %v1901 = vld [vmem:[#allocation10] sm:$0xff]
    %v1902 = vld [vmem:[#allocation10 + $0x8] sm:$0xff]
    %v1903 = vld [vmem:[#allocation10 + $0x10] sm:$0xff]
    %v1904 = vld [vmem:[#allocation10 + $0x18] sm:$0xff]
    %v1905 = vld [vmem:[#allocation10 + $0x20] sm:$0xff]
    %v1906 = vld [vmem:[#allocation10 + $0x28] sm:$0xff]
    %v1907 = vld [vmem:[#allocation10 + $0x30] sm:$0xff]
    %v1908 = vld [vmem:[#allocation10 + $0x38] sm:$0xff]
    %v1909 = vld [vmem:[#allocation10 + $0x40] sm:$0xff]
    %v1910 = vld [vmem:[#allocation10 + $0x48] sm:$0xff]
    %v1911 = vld [vmem:[#allocation10 + $0x50] sm:$0xff]
    %v1912 = vld [vmem:[#allocation10 + $0x58] sm:$0xff]
    %v1913 = vld [vmem:[#allocation10 + $0x60] sm:$0xff]
    %v1914 = vld [vmem:[#allocation10 + $0x68] sm:$0xff]
    %v1915 = vld [vmem:[#allocation10 + $0x70] sm:$0xff]
    %v1916 = vld [vmem:[#allocation10 + $0x78] sm:$0xff]
    %v1917 = vld [vmem:[#allocation10 + $0x80] sm:$0xff]
    %v1918 = vld [vmem:[#allocation10 + $0x88] sm:$0xff]
    %v1919 = vld [vmem:[#allocation10 + $0x90] sm:$0xff]
    %v1920 = vld [vmem:[#allocation10 + $0x98] sm:$0xff]
    %v1921 = vld [vmem:[#allocation10 + $0xa0] sm:$0xff]
    %v1922 = vld [vmem:[#allocation10 + $0xa8] sm:$0xff]
    %v1923 = vld [vmem:[#allocation10 + $0xb0] sm:$0xff]
    %v1924 = vld [vmem:[#allocation10 + $0xb8] sm:$0xff]
    %v1925 = vld [vmem:[#allocation10 + $0xc0] sm:$0xff]
    %v1926 = vld [vmem:[#allocation10 + $0xc8] sm:$0xff]
    %v1927 = vld [vmem:[#allocation10 + $0xd0] sm:$0xff]
    %v1928 = vld [vmem:[#allocation10 + $0xd8] sm:$0xff]
    %v1929 = vld [vmem:[#allocation10 + $0xe0] sm:$0xff]
    %v1930 = vld [vmem:[#allocation10 + $0xe8] sm:$0xff]
    %v1931 = vld [vmem:[#allocation10 + $0xf0] sm:$0xff]
    %v1932 = vld [vmem:[#allocation10 + $0xf8] sm:$0xff]
    %v1933 = vld [vmem:[%s429] sm:$0xff]
    %v1934 = vld [vmem:[%s429 + $0x8] sm:$0xff]
    %v1935 = vld [vmem:[%s429 + $0x10] sm:$0xff]
    %v1936 = vld [vmem:[%s429 + $0x18] sm:$0xff]
    %v1969 = vunpack.c.l.b16 %v1901
    %v1970 = vunpack.c.h.b16 %v1901
    %v1971 = vunpack.c.l.b16 %v1902
    %v1972 = vunpack.c.h.b16 %v1902
    %v1973 = vunpack.c.l.b16 %v1903
    %v1974 = vunpack.c.h.b16 %v1903
    %v1975 = vunpack.c.l.b16 %v1904
    %v1976 = vunpack.c.h.b16 %v1904
    %v1977 = vunpack.c.l.b16 %v1905
    %v1978 = vunpack.c.h.b16 %v1905
    %v1979 = vunpack.c.l.b16 %v1906
    %v1980 = vunpack.c.h.b16 %v1906
    %v1981 = vunpack.c.l.b16 %v1907
    %v1982 = vunpack.c.h.b16 %v1907
    %v1983 = vunpack.c.l.b16 %v1908
    %v1984 = vunpack.c.h.b16 %v1908
    %v1985 = vunpack.c.l.b16 %v1909
    %v1986 = vunpack.c.h.b16 %v1909
    %v1987 = vunpack.c.l.b16 %v1910
    %v1988 = vunpack.c.h.b16 %v1910
    %v1989 = vunpack.c.l.b16 %v1911
    %v1990 = vunpack.c.h.b16 %v1911
    %v1991 = vunpack.c.l.b16 %v1912
    %v1992 = vunpack.c.h.b16 %v1912
    %v1993 = vunpack.c.l.b16 %v1913
    %v1994 = vunpack.c.h.b16 %v1913
    %v1995 = vunpack.c.l.b16 %v1914
    %v1996 = vunpack.c.h.b16 %v1914
    %v1997 = vunpack.c.l.b16 %v1915
    %v1998 = vunpack.c.h.b16 %v1915
    %v1999 = vunpack.c.l.b16 %v1916
    %v2000 = vunpack.c.h.b16 %v1916
    %v2001 = vunpack.c.l.b16 %v1917
    %v2002 = vunpack.c.h.b16 %v1917
    %v2003 = vunpack.c.l.b16 %v1918
    %v2004 = vunpack.c.h.b16 %v1918
    %v2005 = vunpack.c.l.b16 %v1919
    %v2006 = vunpack.c.h.b16 %v1919
    %v2007 = vunpack.c.l.b16 %v1920
    %v2008 = vunpack.c.h.b16 %v1920
    %v2009 = vunpack.c.l.b16 %v1921
    %v2010 = vunpack.c.h.b16 %v1921
    %v2011 = vunpack.c.l.b16 %v1922
    %v2012 = vunpack.c.h.b16 %v1922
    %v2013 = vunpack.c.l.b16 %v1923
    %v2014 = vunpack.c.h.b16 %v1923
    %v2015 = vunpack.c.l.b16 %v1924
    %v2016 = vunpack.c.h.b16 %v1924
    %v2017 = vunpack.c.l.b16 %v1925
    %v2018 = vunpack.c.h.b16 %v1925
    %v2019 = vunpack.c.l.b16 %v1926
    %v2020 = vunpack.c.h.b16 %v1926
    %v2021 = vunpack.c.l.b16 %v1927
    %v2022 = vunpack.c.h.b16 %v1927
    %v2023 = vunpack.c.l.b16 %v1928
    %v2024 = vunpack.c.h.b16 %v1928
    %v2025 = vunpack.c.l.b16 %v1929
    %v2026 = vunpack.c.h.b16 %v1929
    %v2027 = vunpack.c.l.b16 %v1930
    %v2028 = vunpack.c.h.b16 %v1930
    %v2029 = vunpack.c.l.b16 %v1931
    %v2030 = vunpack.c.h.b16 %v1931
    %v2031 = vunpack.c.l.b16 %v1932
    %v2032 = vunpack.c.h.b16 %v1932
    %v2033 = vpack.c.b16 %v1973, %v1969
    %v2034 = vpack.c.b16 %v1974, %v1970
    %v2035 = vpack.c.b16 %v1975, %v1971
    %v2036 = vpack.c.b16 %v1976, %v1972
    %v2037 = vpack.c.b16 %v1981, %v1977
    %v2038 = vpack.c.b16 %v1982, %v1978
    %v2039 = vpack.c.b16 %v1983, %v1979
    %v2040 = vpack.c.b16 %v1984, %v1980
    %v2041 = vpack.c.b16 %v1989, %v1985
    %v2042 = vpack.c.b16 %v1990, %v1986
    %v2043 = vpack.c.b16 %v1991, %v1987
    %v2044 = vpack.c.b16 %v1992, %v1988
    %v2045 = vpack.c.b16 %v1997, %v1993
    %v2046 = vpack.c.b16 %v1998, %v1994
    %v2047 = vpack.c.b16 %v1999, %v1995
    %v2048 = vpack.c.b16 %v2000, %v1996
    %v2049 = vpack.c.b16 %v2005, %v2001
    %v2050 = vpack.c.b16 %v2006, %v2002
    %v2051 = vpack.c.b16 %v2007, %v2003
    %v2052 = vpack.c.b16 %v2008, %v2004
    %v2053 = vpack.c.b16 %v2013, %v2009
    %v2054 = vpack.c.b16 %v2014, %v2010
    %v2055 = vpack.c.b16 %v2015, %v2011
    %v2056 = vpack.c.b16 %v2016, %v2012
    %v2057 = vpack.c.b16 %v2021, %v2017
    %v2058 = vpack.c.b16 %v2022, %v2018
    %v2059 = vpack.c.b16 %v2023, %v2019
    %v2060 = vpack.c.b16 %v2024, %v2020
    %v2061 = vpack.c.b16 %v2029, %v2025
    %v2062 = vpack.c.b16 %v2030, %v2026
    %v2063 = vpack.c.b16 %v2031, %v2027
    %v2064 = vpack.c.b16 %v2032, %v2028
    %2097 = vmatprep.subr.bf16.mxu0 %v2062
    %2098 = vmatpush1.bf16.msra.mxu0 %v2061
    %2099 = vmatprep.subr.bf16.mxu0 %v2058
    %2100 = vmatpush1.bf16.msra.mxu0 %v2057
    %2101 = vmatprep.subr.bf16.mxu0 %v2054
    %2102 = vmatpush1.bf16.msra.mxu0 %v2053
    %2103 = vmatprep.subr.bf16.mxu0 %v2050
    %2104 = vmatpush1.bf16.msra.mxu0 %v2049
    %2105 = vmatprep.subr.bf16.mxu0 %v2046
    %2106 = vmatpush1.bf16.msra.mxu0 %v2045
    %2107 = vmatprep.subr.bf16.mxu0 %v2042
    %2108 = vmatpush1.bf16.msra.mxu0 %v2041
    %2109 = vmatprep.subr.bf16.mxu0 %v2038
    %2110 = vmatpush1.bf16.msra.mxu0 %v2037
    %2111 = vmatprep.subr.bf16.mxu0 %v2034
    %2112 = vmatpush1.bf16.msra.mxu0 %v2033
    %2113 = vmatprep.subr.bf16.mxu0 0
    %2114 = vmatpush2.bf16.msra.mxu0 0
    %2115 = vmatprep.subr.bf16.mxu0 0
    %2116 = vmatpush2.bf16.msra.mxu0 0
    %2117 = vmatprep.subr.bf16.mxu0 0
    %2118 = vmatpush2.bf16.msra.mxu0 0
    %2119 = vmatprep.subr.bf16.mxu0 0
    %2120 = vmatpush2.bf16.msra.mxu0 0
    %2121 = vmatprep.subr.bf16.mxu0 0
    %2122 = vmatpush2.bf16.msra.mxu0 0
    %2123 = vmatprep.subr.bf16.mxu0 0
    %2124 = vmatpush2.bf16.msra.mxu0 0
    %2125 = vmatprep.subr.bf16.mxu0 0
    %2126 = vmatpush2.bf16.msra.mxu0 0
    %2127 = vmatprep.subr.bf16.mxu0 0
    %2128 = vmatpush2.bf16.msra.mxu0 0
    %2129 = vmatprep.mubr.bf16.mxu0 0
    %2130 = vmatmul.mubr.bf16.gmra.mxu0 0
    %v2131 = vpop.f32.mrf.mxu0
    %v2132 = vadd.f32 0.0, %v2131
    %v2133 = vpop.f32.mrf.mxu0
    %v2134 = vadd.f32 0.0, %v2133
    %v2135 = vpop.f32.mrf.mxu0
    %v2136 = vpop.f32.mrf.mxu0
    %2137 = vdwg.mxu0
    %2138 = vmatprep.subr.bf16.mxu0 %v2064
    %2139 = vmatpush1.bf16.msra.mxu0 %v2063
    %2140 = vmatprep.subr.bf16.mxu0 %v2060
    %2141 = vmatpush1.bf16.msra.mxu0 %v2059
    %2142 = vmatprep.subr.bf16.mxu0 %v2056
    %2143 = vmatpush1.bf16.msra.mxu0 %v2055
    %2144 = vmatprep.subr.bf16.mxu0 %v2052
    %2145 = vmatpush1.bf16.msra.mxu0 %v2051
    %2146 = vmatprep.subr.bf16.mxu0 %v2048
    %2147 = vmatpush1.bf16.msra.mxu0 %v2047
    %2148 = vmatprep.subr.bf16.mxu0 %v2044
    %2149 = vmatpush1.bf16.msra.mxu0 %v2043
    %2150 = vmatprep.subr.bf16.mxu0 %v2040
    %2151 = vmatpush1.bf16.msra.mxu0 %v2039
    %2152 = vmatprep.subr.bf16.mxu0 %v2036
    %2153 = vmatpush1.bf16.msra.mxu0 %v2035
    %2154 = vmatprep.subr.bf16.mxu0 0
    %2155 = vmatpush2.bf16.msra.mxu0 0
    %2156 = vmatprep.subr.bf16.mxu0 0
    %2157 = vmatpush2.bf16.msra.mxu0 0
    %2158 = vmatprep.subr.bf16.mxu0 0
    %2159 = vmatpush2.bf16.msra.mxu0 0
    %2160 = vmatprep.subr.bf16.mxu0 0
    %2161 = vmatpush2.bf16.msra.mxu0 0
    %2162 = vmatprep.subr.bf16.mxu0 0
    %2163 = vmatpush2.bf16.msra.mxu0 0
    %2164 = vmatprep.subr.bf16.mxu0 0
    %2165 = vmatpush2.bf16.msra.mxu0 0
    %2166 = vmatprep.subr.bf16.mxu0 0
    %2167 = vmatpush2.bf16.msra.mxu0 0
    %2168 = vmatprep.subr.bf16.mxu0 0
    %2169 = vmatpush2.bf16.msra.mxu0 0
    %2170 = vmatprep.mubr.bf16.mxu0 0
    %2171 = vmatmul.mubr.bf16.gmra.mxu0 0
    %v2172 = vpop.f32.mrf.mxu0
    %v2173 = vadd.f32 0.0, %v2172
    %v2174 = vpop.f32.mrf.mxu0
    %v2175 = vadd.f32 0.0, %v2174
    %v2176 = vpop.f32.mrf.mxu0
    %v2177 = vpop.f32.mrf.mxu0
    %2178 = vdwg.mxu0
    %v2179 = vadd.f32 %v1933, %v2132
    %v2180 = vadd.f32 %v1934, %v2134
    %v2181 = vadd.f32 %v1935, %v2173
    %v2182 = vadd.f32 %v1936, %v2175
    %v2183 = vmul.f32 %v2179, 0.5
    %v2184 = vtanh.pop %v2183
    %v2185 = vmul.f32 %v2184, 0.5
    %v2186 = vadd.f32 %v2185, 0.5
    %v2187 = vmul.f32 %v2180, 0.5
    %v2188 = vtanh.pop %v2187
    %v2189 = vmul.f32 %v2188, 0.5
    %v2190 = vadd.f32 %v2189, 0.5
    %v2191 = vtanh.pop %v2181
    %v2192 = vmul.f32 %v2182, 0.5
    %v2193 = vtanh.pop %v2192
    %v2194 = vmul.f32 %v2193, 0.5
    %v2195 = vadd.f32 %v2194, 0.5
    %v2196 = vmul.f32 %v2190, 0.0
    %v2197 = vmul.f32 %v2186, %v2191
    %v2198 = vadd.f32 %v2196, %v2197
    %v2199 = vtanh.pop %v2198
    %v2200 = vmul.f32 %v2195, %v2199
    %2201 = vst [vmem:[#allocation2] sm:$0xff] %v2200
    %v2202 = vld [vmem:[%s701] sm:$0xff]
    %v2203 = vld [vmem:[%s701 + $0x8] sm:$0xff]
    %v2204 = vld [vmem:[%s701 + $0x10] sm:$0xff]
    %v2205 = vld [vmem:[%s701 + $0x18] sm:$0xff]
    %v2206 = vpack.c.bf16 %v2200, %v2200
    %2207 = vmatprep.subr.bf16.mxu0 %v2062
    %2208 = vmatpush1.bf16.msra.mxu0 %v2061
    %2209 = vmatprep.subr.bf16.mxu0 %v2058
    %2210 = vmatpush1.bf16.msra.mxu0 %v2057
    %2211 = vmatprep.subr.bf16.mxu0 %v2054
    %2212 = vmatpush1.bf16.msra.mxu0 %v2053
    %2213 = vmatprep.subr.bf16.mxu0 %v2050
    %2214 = vmatpush1.bf16.msra.mxu0 %v2049
    %2215 = vmatprep.subr.bf16.mxu0 %v2046
    %2216 = vmatpush1.bf16.msra.mxu0 %v2045
    %2217 = vmatprep.subr.bf16.mxu0 %v2042
    %2218 = vmatpush1.bf16.msra.mxu0 %v2041
    %2219 = vmatprep.subr.bf16.mxu0 %v2038
    %2220 = vmatpush1.bf16.msra.mxu0 %v2037
    %2221 = vmatprep.subr.bf16.mxu0 %v2034
    %2222 = vmatpush1.bf16.msra.mxu0 %v2033
    %2223 = vmatprep.subr.bf16.mxu0 0
    %2224 = vmatpush2.bf16.msra.mxu0 0
    %2225 = vmatprep.subr.bf16.mxu0 0
    %2226 = vmatpush2.bf16.msra.mxu0 0
    %2227 = vmatprep.subr.bf16.mxu0 0
    %2228 = vmatpush2.bf16.msra.mxu0 0
    %2229 = vmatprep.subr.bf16.mxu0 0
    %2230 = vmatpush2.bf16.msra.mxu0 0
    %2231 = vmatprep.subr.bf16.mxu0 0
    %2232 = vmatpush2.bf16.msra.mxu0 0
    %2233 = vmatprep.subr.bf16.mxu0 0
    %2234 = vmatpush2.bf16.msra.mxu0 0
    %2235 = vmatprep.subr.bf16.mxu0 0
    %2236 = vmatpush2.bf16.msra.mxu0 0
    %2237 = vmatprep.subr.bf16.mxu0 0
    %2238 = vmatpush2.bf16.msra.mxu0 0
    %2239 = vmatprep.mubr.bf16.mxu0 0
    %2240 = vmatmul.mubr.bf16.gmra.mxu0 %v2206
    %v2241 = vpop.f32.mrf.mxu0
    %v2242 = vadd.f32 0.0, %v2241
    %v2243 = vpop.f32.mrf.mxu0
    %v2244 = vadd.f32 0.0, %v2243
    %v2245 = vpop.f32.mrf.mxu0
    %v2246 = vpop.f32.mrf.mxu0
    %2247 = vdwg.mxu0
    %2248 = vmatprep.subr.bf16.mxu0 %v2064
    %2249 = vmatpush1.bf16.msra.mxu0 %v2063
    %2250 = vmatprep.subr.bf16.mxu0 %v2060
    %2251 = vmatpush1.bf16.msra.mxu0 %v2059
    %2252 = vmatprep.subr.bf16.mxu0 %v2056
    %2253 = vmatpush1.bf16.msra.mxu0 %v2055
    %2254 = vmatprep.subr.bf16.mxu0 %v2052
    %2255 = vmatpush1.bf16.msra.mxu0 %v2051
    %2256 = vmatprep.subr.bf16.mxu0 %v2048
    %2257 = vmatpush1.bf16.msra.mxu0 %v2047
    %2258 = vmatprep.subr.bf16.mxu0 %v2044
    %2259 = vmatpush1.bf16.msra.mxu0 %v2043
    %2260 = vmatprep.subr.bf16.mxu0 %v2040
    %2261 = vmatpush1.bf16.msra.mxu0 %v2039
    %2262 = vmatprep.subr.bf16.mxu0 %v2036
    %2263 = vmatpush1.bf16.msra.mxu0 %v2035
    %2264 = vmatprep.subr.bf16.mxu0 0
    %2265 = vmatpush2.bf16.msra.mxu0 0
    %2266 = vmatprep.subr.bf16.mxu0 0
    %2267 = vmatpush2.bf16.msra.mxu0 0
    %2268 = vmatprep.subr.bf16.mxu0 0
    %2269 = vmatpush2.bf16.msra.mxu0 0
    %2270 = vmatprep.subr.bf16.mxu0 0
    %2271 = vmatpush2.bf16.msra.mxu0 0
    %2272 = vmatprep.subr.bf16.mxu0 0
    %2273 = vmatpush2.bf16.msra.mxu0 0
    %2274 = vmatprep.subr.bf16.mxu0 0
    %2275 = vmatpush2.bf16.msra.mxu0 0
    %2276 = vmatprep.subr.bf16.mxu0 0
    %2277 = vmatpush2.bf16.msra.mxu0 0
    %2278 = vmatprep.subr.bf16.mxu0 0
    %2279 = vmatpush2.bf16.msra.mxu0 0
    %2280 = vmatprep.mubr.bf16.mxu0 0
    %2281 = vmatmul.mubr.bf16.gmra.mxu0 %v2206
    %v2282 = vpop.f32.mrf.mxu0
    %v2283 = vadd.f32 0.0, %v2282
    %v2284 = vpop.f32.mrf.mxu0
    %v2285 = vadd.f32 0.0, %v2284
    %v2286 = vpop.f32.mrf.mxu0
    %v2287 = vpop.f32.mrf.mxu0
    %2288 = vdwg.mxu0
    %v2289 = vadd.f32 %v2202, %v2242
    %v2290 = vadd.f32 %v2203, %v2244
    %v2291 = vadd.f32 %v2204, %v2283
    %v2292 = vadd.f32 %v2205, %v2285
    %v2293 = vmul.f32 %v2289, 0.5
    %v2294 = vtanh.pop %v2293
    %v2295 = vmul.f32 %v2294, 0.5
    %v2296 = vadd.f32 %v2295, 0.5
    %v2297 = vmul.f32 %v2290, 0.5
    %v2298 = vtanh.pop %v2297
    %v2299 = vmul.f32 %v2298, 0.5
    %v2300 = vadd.f32 %v2299, 0.5
    %v2301 = vtanh.pop %v2291
    %v2302 = vmul.f32 %v2292, 0.5
    %v2303 = vtanh.pop %v2302
    %v2304 = vmul.f32 %v2303, 0.5
    %v2305 = vadd.f32 %v2304, 0.5
    %v2306 = vmul.f32 %v2300, %v2198
    %v2307 = vmul.f32 %v2296, %v2301
    %v2308 = vadd.f32 %v2306, %v2307
    %v2309 = vtanh.pop %v2308
    %v2310 = vmul.f32 %v2305, %v2309
    %2311 = vst [vmem:[%s811] sm:$0xff] %v2310
    %v2312 = vld [vmem:[%s815] sm:$0xff]
    %v2313 = vld [vmem:[%s815 + $0x8] sm:$0xff]
    %v2314 = vld [vmem:[%s815 + $0x10] sm:$0xff]
    %v2315 = vld [vmem:[%s815 + $0x18] sm:$0xff]
    %v2316 = vpack.c.bf16 %v2310, %v2310
    %2317 = vmatprep.subr.bf16.mxu0 %v2062
    %2318 = vmatpush1.bf16.msra.mxu0 %v2061
    %2319 = vmatprep.subr.bf16.mxu0 %v2058
    %2320 = vmatpush1.bf16.msra.mxu0 %v2057
    %2321 = vmatprep.subr.bf16.mxu0 %v2054
    %2322 = vmatpush1.bf16.msra.mxu0 %v2053
    %2323 = vmatprep.subr.bf16.mxu0 %v2050
    %2324 = vmatpush1.bf16.msra.mxu0 %v2049
    %2325 = vmatprep.subr.bf16.mxu0 %v2046
    %2326 = vmatpush1.bf16.msra.mxu0 %v2045
    %2327 = vmatprep.subr.bf16.mxu0 %v2042
    %2328 = vmatpush1.bf16.msra.mxu0 %v2041
    %2329 = vmatprep.subr.bf16.mxu0 %v2038
    %2330 = vmatpush1.bf16.msra.mxu0 %v2037
    %2331 = vmatprep.subr.bf16.mxu0 %v2034
    %2332 = vmatpush1.bf16.msra.mxu0 %v2033
    %2333 = vmatprep.subr.bf16.mxu0 0
    %2334 = vmatpush2.bf16.msra.mxu0 0
    %2335 = vmatprep.subr.bf16.mxu0 0
    %2336 = vmatpush2.bf16.msra.mxu0 0
    %2337 = vmatprep.subr.bf16.mxu0 0
    %2338 = vmatpush2.bf16.msra.mxu0 0
    %2339 = vmatprep.subr.bf16.mxu0 0
    %2340 = vmatpush2.bf16.msra.mxu0 0
    %2341 = vmatprep.subr.bf16.mxu0 0
    %2342 = vmatpush2.bf16.msra.mxu0 0
    %2343 = vmatprep.subr.bf16.mxu0 0
    %2344 = vmatpush2.bf16.msra.mxu0 0
    %2345 = vmatprep.subr.bf16.mxu0 0
    %2346 = vmatpush2.bf16.msra.mxu0 0
    %2347 = vmatprep.subr.bf16.mxu0 0
    %2348 = vmatpush2.bf16.msra.mxu0 0
    %2349 = vmatprep.mubr.bf16.mxu0 0
    %2350 = vmatmul.mubr.bf16.gmra.mxu0 %v2316
    %v2351 = vpop.f32.mrf.mxu0
    %v2352 = vadd.f32 0.0, %v2351
    %v2353 = vpop.f32.mrf.mxu0
    %v2354 = vadd.f32 0.0, %v2353
    %v2355 = vpop.f32.mrf.mxu0
    %v2356 = vpop.f32.mrf.mxu0
    %2357 = vdwg.mxu0
    %2358 = vmatprep.subr.bf16.mxu0 %v2064
    %2359 = vmatpush1.bf16.msra.mxu0 %v2063
    %2360 = vmatprep.subr.bf16.mxu0 %v2060
    %2361 = vmatpush1.bf16.msra.mxu0 %v2059
    %2362 = vmatprep.subr.bf16.mxu0 %v2056
    %2363 = vmatpush1.bf16.msra.mxu0 %v2055
    %2364 = vmatprep.subr.bf16.mxu0 %v2052
    %2365 = vmatpush1.bf16.msra.mxu0 %v2051
    %2366 = vmatprep.subr.bf16.mxu0 %v2048
    %2367 = vmatpush1.bf16.msra.mxu0 %v2047
    %2368 = vmatprep.subr.bf16.mxu0 %v2044
    %2369 = vmatpush1.bf16.msra.mxu0 %v2043
    %2370 = vmatprep.subr.bf16.mxu0 %v2040
    %2371 = vmatpush1.bf16.msra.mxu0 %v2039
    %2372 = vmatprep.subr.bf16.mxu0 %v2036
    %2373 = vmatpush1.bf16.msra.mxu0 %v2035
    %2374 = vmatprep.subr.bf16.mxu0 0
    %2375 = vmatpush2.bf16.msra.mxu0 0
    %2376 = vmatprep.subr.bf16.mxu0 0
    %2377 = vmatpush2.bf16.msra.mxu0 0
    %2378 = vmatprep.subr.bf16.mxu0 0
    %2379 = vmatpush2.bf16.msra.mxu0 0
    %2380 = vmatprep.subr.bf16.mxu0 0
    %2381 = vmatpush2.bf16.msra.mxu0 0
    %2382 = vmatprep.subr.bf16.mxu0 0
    %2383 = vmatpush2.bf16.msra.mxu0 0
    %2384 = vmatprep.subr.bf16.mxu0 0
    %2385 = vmatpush2.bf16.msra.mxu0 0
    %2386 = vmatprep.subr.bf16.mxu0 0
    %2387 = vmatpush2.bf16.msra.mxu0 0
    %2388 = vmatprep.subr.bf16.mxu0 0
    %2389 = vmatpush2.bf16.msra.mxu0 0
    %2390 = vmatprep.mubr.bf16.mxu0 0
    %2391 = vmatmul.mubr.bf16.gmra.mxu0 %v2316
    %v2392 = vpop.f32.mrf.mxu0
    %v2393 = vadd.f32 0.0, %v2392
    %v2394 = vpop.f32.mrf.mxu0
    %v2395 = vadd.f32 0.0, %v2394
    %v2396 = vpop.f32.mrf.mxu0
    %v2397 = vpop.f32.mrf.mxu0
    %2398 = vdwg.mxu0
    %v2399 = vadd.f32 %v2312, %v2352
    %v2400 = vadd.f32 %v2313, %v2354
    %v2401 = vadd.f32 %v2314, %v2393
    %v2402 = vadd.f32 %v2315, %v2395
    %v2403 = vmul.f32 %v2399, 0.5
    %v2404 = vtanh.pop %v2403
    %v2405 = vmul.f32 %v2404, 0.5
    %v2406 = vadd.f32 %v2405, 0.5
    %v2407 = vmul.f32 %v2400, 0.5
    %v2408 = vtanh.pop %v2407
    %v2409 = vmul.f32 %v2408, 0.5
    %v2410 = vadd.f32 %v2409, 0.5
    %v2411 = vtanh.pop %v2401
    %v2412 = vmul.f32 %v2402, 0.5
    %v2413 = vtanh.pop %v2412
    %v2414 = vmul.f32 %v2413, 0.5
    %v2415 = vadd.f32 %v2414, 0.5
    %v2416 = vmul.f32 %v2410, %v2308
    %v2417 = vmul.f32 %v2406, %v2411
    %v2418 = vadd.f32 %v2416, %v2417
    %v2419 = vtanh.pop %v2418
    %v2420 = vmul.f32 %v2415, %v2419
    %2421 = vst [vmem:[%s925] sm:$0xff] %v2420
    %v2422 = vld [vmem:[%s929] sm:$0xff]
    %v2423 = vld [vmem:[%s929 + $0x8] sm:$0xff]
    %v2424 = vld [vmem:[%s929 + $0x10] sm:$0xff]
    %v2425 = vld [vmem:[%s929 + $0x18] sm:$0xff]
    %v2426 = vpack.c.bf16 %v2420, %v2420
    %2427 = vmatprep.subr.bf16.mxu0 %v2062
    %2428 = vmatpush1.bf16.msra.mxu0 %v2061
    %2429 = vmatprep.subr.bf16.mxu0 %v2058
    %2430 = vmatpush1.bf16.msra.mxu0 %v2057
    %2431 = vmatprep.subr.bf16.mxu0 %v2054
    %2432 = vmatpush1.bf16.msra.mxu0 %v2053
    %2433 = vmatprep.subr.bf16.mxu0 %v2050
    %2434 = vmatpush1.bf16.msra.mxu0 %v2049
    %2435 = vmatprep.subr.bf16.mxu0 %v2046
    %2436 = vmatpush1.bf16.msra.mxu0 %v2045
    %2437 = vmatprep.subr.bf16.mxu0 %v2042
    %2438 = vmatpush1.bf16.msra.mxu0 %v2041
    %2439 = vmatprep.subr.bf16.mxu0 %v2038
    %2440 = vmatpush1.bf16.msra.mxu0 %v2037
    %2441 = vmatprep.subr.bf16.mxu0 %v2034
    %2442 = vmatpush1.bf16.msra.mxu0 %v2033
    %2443 = vmatprep.subr.bf16.mxu0 0
    %2444 = vmatpush2.bf16.msra.mxu0 0
    %2445 = vmatprep.subr.bf16.mxu0 0
    %2446 = vmatpush2.bf16.msra.mxu0 0
    %2447 = vmatprep.subr.bf16.mxu0 0
    %2448 = vmatpush2.bf16.msra.mxu0 0
    %2449 = vmatprep.subr.bf16.mxu0 0
    %2450 = vmatpush2.bf16.msra.mxu0 0
    %2451 = vmatprep.subr.bf16.mxu0 0
    %2452 = vmatpush2.bf16.msra.mxu0 0
    %2453 = vmatprep.subr.bf16.mxu0 0
    %2454 = vmatpush2.bf16.msra.mxu0 0
    %2455 = vmatprep.subr.bf16.mxu0 0
    %2456 = vmatpush2.bf16.msra.mxu0 0
    %2457 = vmatprep.subr.bf16.mxu0 0
    %2458 = vmatpush2.bf16.msra.mxu0 0
    %2459 = vmatprep.mubr.bf16.mxu0 0
    %2460 = vmatmul.mubr.bf16.gmra.mxu0 %v2426
    %v2461 = vpop.f32.mrf.mxu0
    %v2462 = vadd.f32 0.0, %v2461
    %v2463 = vpop.f32.mrf.mxu0
    %v2464 = vadd.f32 0.0, %v2463
    %v2465 = vpop.f32.mrf.mxu0
    %v2466 = vpop.f32.mrf.mxu0
    %2467 = vdwg.mxu0
    %2468 = vmatprep.subr.bf16.mxu0 %v2064
    %2469 = vmatpush1.bf16.msra.mxu0 %v2063
    %2470 = vmatprep.subr.bf16.mxu0 %v2060
    %2471 = vmatpush1.bf16.msra.mxu0 %v2059
    %2472 = vmatprep.subr.bf16.mxu0 %v2056
    %2473 = vmatpush1.bf16.msra.mxu0 %v2055
    %2474 = vmatprep.subr.bf16.mxu0 %v2052
    %2475 = vmatpush1.bf16.msra.mxu0 %v2051
    %2476 = vmatprep.subr.bf16.mxu0 %v2048
    %2477 = vmatpush1.bf16.msra.mxu0 %v2047
    %2478 = vmatprep.subr.bf16.mxu0 %v2044
    %2479 = vmatpush1.bf16.msra.mxu0 %v2043
    %2480 = vmatprep.subr.bf16.mxu0 %v2040
    %2481 = vmatpush1.bf16.msra.mxu0 %v2039
    %2482 = vmatprep.subr.bf16.mxu0 %v2036
    %2483 = vmatpush1.bf16.msra.mxu0 %v2035
    %2484 = vmatprep.subr.bf16.mxu0 0
    %2485 = vmatpush2.bf16.msra.mxu0 0
    %2486 = vmatprep.subr.bf16.mxu0 0
    %2487 = vmatpush2.bf16.msra.mxu0 0
    %2488 = vmatprep.subr.bf16.mxu0 0
    %2489 = vmatpush2.bf16.msra.mxu0 0
    %2490 = vmatprep.subr.bf16.mxu0 0
    %2491 = vmatpush2.bf16.msra.mxu0 0
    %2492 = vmatprep.subr.bf16.mxu0 0
    %2493 = vmatpush2.bf16.msra.mxu0 0
    %2494 = vmatprep.subr.bf16.mxu0 0
    %2495 = vmatpush2.bf16.msra.mxu0 0
    %2496 = vmatprep.subr.bf16.mxu0 0
    %2497 = vmatpush2.bf16.msra.mxu0 0
    %2498 = vmatprep.subr.bf16.mxu0 0
    %2499 = vmatpush2.bf16.msra.mxu0 0
    %2500 = vmatprep.mubr.bf16.mxu0 0
    %2501 = vmatmul.mubr.bf16.gmra.mxu0 %v2426
    %v2502 = vpop.f32.mrf.mxu0
    %v2503 = vadd.f32 0.0, %v2502
    %v2504 = vpop.f32.mrf.mxu0
    %v2505 = vadd.f32 0.0, %v2504
    %v2506 = vpop.f32.mrf.mxu0
    %v2507 = vpop.f32.mrf.mxu0
    %2508 = vdwg.mxu0
    %v2509 = vadd.f32 %v2422, %v2462
    %v2510 = vadd.f32 %v2423, %v2464
    %v2511 = vadd.f32 %v2424, %v2503
    %v2512 = vadd.f32 %v2425, %v2505
    %v2513 = vmul.f32 %v2509, 0.5
    %v2514 = vtanh.pop %v2513
    %v2515 = vmul.f32 %v2514, 0.5
    %v2516 = vadd.f32 %v2515, 0.5
    %v2517 = vmul.f32 %v2510, 0.5
    %v2518 = vtanh.pop %v2517
    %v2519 = vmul.f32 %v2518, 0.5
    %v2520 = vadd.f32 %v2519, 0.5
    %v2521 = vtanh.pop %v2511
    %v2522 = vmul.f32 %v2512, 0.5
    %v2523 = vtanh.pop %v2522
    %v2524 = vmul.f32 %v2523, 0.5
    %v2525 = vadd.f32 %v2524, 0.5
    %v2526 = vmul.f32 %v2520, %v2418
    %v2527 = vmul.f32 %v2516, %v2521
    %v2528 = vadd.f32 %v2526, %v2527
    %v2529 = vtanh.pop %v2528
    %v2530 = vmul.f32 %v2525, %v2529
    %2531 = vst [vmem:[%s1039] sm:$0xff] %v2530
    %v2532 = vld [vmem:[%s1043] sm:$0xff]
    %v2533 = vld [vmem:[%s1043 + $0x8] sm:$0xff]
    %v2534 = vld [vmem:[%s1043 + $0x10] sm:$0xff]
    %v2535 = vld [vmem:[%s1043 + $0x18] sm:$0xff]
    %v2536 = vpack.c.bf16 %v2530, %v2530
    %2537 = vmatprep.subr.bf16.mxu0 %v2062
    %2538 = vmatpush1.bf16.msra.mxu0 %v2061
    %2539 = vmatprep.subr.bf16.mxu0 %v2058
    %2540 = vmatpush1.bf16.msra.mxu0 %v2057
    %2541 = vmatprep.subr.bf16.mxu0 %v2054
    %2542 = vmatpush1.bf16.msra.mxu0 %v2053
    %2543 = vmatprep.subr.bf16.mxu0 %v2050
    %2544 = vmatpush1.bf16.msra.mxu0 %v2049
    %2545 = vmatprep.subr.bf16.mxu0 %v2046
    %2546 = vmatpush1.bf16.msra.mxu0 %v2045
    %2547 = vmatprep.subr.bf16.mxu0 %v2042
    %2548 = vmatpush1.bf16.msra.mxu0 %v2041
    %2549 = vmatprep.subr.bf16.mxu0 %v2038
    %2550 = vmatpush1.bf16.msra.mxu0 %v2037
    %2551 = vmatprep.subr.bf16.mxu0 %v2034
    %2552 = vmatpush1.bf16.msra.mxu0 %v2033
    %2553 = vmatprep.subr.bf16.mxu0 0
    %2554 = vmatpush2.bf16.msra.mxu0 0
    %2555 = vmatprep.subr.bf16.mxu0 0
    %2556 = vmatpush2.bf16.msra.mxu0 0
    %2557 = vmatprep.subr.bf16.mxu0 0
    %2558 = vmatpush2.bf16.msra.mxu0 0
    %2559 = vmatprep.subr.bf16.mxu0 0
    %2560 = vmatpush2.bf16.msra.mxu0 0
    %2561 = vmatprep.subr.bf16.mxu0 0
    %2562 = vmatpush2.bf16.msra.mxu0 0
    %2563 = vmatprep.subr.bf16.mxu0 0
    %2564 = vmatpush2.bf16.msra.mxu0 0
    %2565 = vmatprep.subr.bf16.mxu0 0
    %2566 = vmatpush2.bf16.msra.mxu0 0
    %2567 = vmatprep.subr.bf16.mxu0 0
    %2568 = vmatpush2.bf16.msra.mxu0 0
    %2569 = vmatprep.mubr.bf16.mxu0 0
    %2570 = vmatmul.mubr.bf16.gmra.mxu0 %v2536
    %v2571 = vpop.f32.mrf.mxu0
    %v2572 = vadd.f32 0.0, %v2571
    %v2573 = vpop.f32.mrf.mxu0
    %v2574 = vadd.f32 0.0, %v2573
    %v2575 = vpop.f32.mrf.mxu0
    %v2576 = vpop.f32.mrf.mxu0
    %2577 = vdwg.mxu0
    %2578 = vmatprep.subr.bf16.mxu0 %v2064
    %2579 = vmatpush1.bf16.msra.mxu0 %v2063
    %2580 = vmatprep.subr.bf16.mxu0 %v2060
    %2581 = vmatpush1.bf16.msra.mxu0 %v2059
    %2582 = vmatprep.subr.bf16.mxu0 %v2056
    %2583 = vmatpush1.bf16.msra.mxu0 %v2055
    %2584 = vmatprep.subr.bf16.mxu0 %v2052
    %2585 = vmatpush1.bf16.msra.mxu0 %v2051
    %2586 = vmatprep.subr.bf16.mxu0 %v2048
    %2587 = vmatpush1.bf16.msra.mxu0 %v2047
    %2588 = vmatprep.subr.bf16.mxu0 %v2044
    %2589 = vmatpush1.bf16.msra.mxu0 %v2043
    %2590 = vmatprep.subr.bf16.mxu0 %v2040
    %2591 = vmatpush1.bf16.msra.mxu0 %v2039
    %2592 = vmatprep.subr.bf16.mxu0 %v2036
    %2593 = vmatpush1.bf16.msra.mxu0 %v2035
    %2594 = vmatprep.subr.bf16.mxu0 0
    %2595 = vmatpush2.bf16.msra.mxu0 0
    %2596 = vmatprep.subr.bf16.mxu0 0
    %2597 = vmatpush2.bf16.msra.mxu0 0
    %2598 = vmatprep.subr.bf16.mxu0 0
    %2599 = vmatpush2.bf16.msra.mxu0 0
    %2600 = vmatprep.subr.bf16.mxu0 0
    %2601 = vmatpush2.bf16.msra.mxu0 0
    %2602 = vmatprep.subr.bf16.mxu0 0
    %2603 = vmatpush2.bf16.msra.mxu0 0
    %2604 = vmatprep.subr.bf16.mxu0 0
    %2605 = vmatpush2.bf16.msra.mxu0 0
    %2606 = vmatprep.subr.bf16.mxu0 0
    %2607 = vmatpush2.bf16.msra.mxu0 0
    %2608 = vmatprep.subr.bf16.mxu0 0
    %2609 = vmatpush2.bf16.msra.mxu0 0
    %2610 = vmatprep.mubr.bf16.mxu0 0
    %2611 = vmatmul.mubr.bf16.gmra.mxu0 %v2536
    %v2612 = vpop.f32.mrf.mxu0
    %v2613 = vadd.f32 0.0, %v2612
    %v2614 = vpop.f32.mrf.mxu0
    %v2615 = vadd.f32 0.0, %v2614
    %v2616 = vpop.f32.mrf.mxu0
    %v2617 = vpop.f32.mrf.mxu0
    %2618 = vdwg.mxu0
    %v2619 = vadd.f32 %v2532, %v2572
    %v2620 = vadd.f32 %v2533, %v2574
    %v2621 = vadd.f32 %v2534, %v2613
    %v2622 = vadd.f32 %v2535, %v2615
    %v2623 = vmul.f32 %v2619, 0.5
    %v2624 = vtanh.pop %v2623
    %v2625 = vmul.f32 %v2624, 0.5
    %v2626 = vadd.f32 %v2625, 0.5
    %v2627 = vmul.f32 %v2620, 0.5
    %v2628 = vtanh.pop %v2627
    %v2629 = vmul.f32 %v2628, 0.5
    %v2630 = vadd.f32 %v2629, 0.5
    %v2631 = vtanh.pop %v2621
    %v2632 = vmul.f32 %v2622, 0.5
    %v2633 = vtanh.pop %v2632
    %v2634 = vmul.f32 %v2633, 0.5
    %v2635 = vadd.f32 %v2634, 0.5
    %v2636 = vmul.f32 %v2630, %v2528
    %v2637 = vmul.f32 %v2626, %v2631
    %v2638 = vadd.f32 %v2636, %v2637
    %v2639 = vtanh.pop %v2638
    %v2640 = vmul.f32 %v2635, %v2639
    %2641 = vst [vmem:[%s1153] sm:$0xff] %v2640
    %v2642 = vld [vmem:[%s1157] sm:$0xff]
    %v2643 = vld [vmem:[%s1157 + $0x8] sm:$0xff]
    %v2644 = vld [vmem:[%s1157 + $0x10] sm:$0xff]
    %v2645 = vld [vmem:[%s1157 + $0x18] sm:$0xff]
    %v2646 = vpack.c.bf16 %v2640, %v2640
    %2647 = vmatprep.subr.bf16.mxu0 %v2062
    %2648 = vmatpush1.bf16.msra.mxu0 %v2061
    %2649 = vmatprep.subr.bf16.mxu0 %v2058
    %2650 = vmatpush1.bf16.msra.mxu0 %v2057
    %2651 = vmatprep.subr.bf16.mxu0 %v2054
    %2652 = vmatpush1.bf16.msra.mxu0 %v2053
    %2653 = vmatprep.subr.bf16.mxu0 %v2050
    %2654 = vmatpush1.bf16.msra.mxu0 %v2049
    %2655 = vmatprep.subr.bf16.mxu0 %v2046
    %2656 = vmatpush1.bf16.msra.mxu0 %v2045
    %2657 = vmatprep.subr.bf16.mxu0 %v2042
    %2658 = vmatpush1.bf16.msra.mxu0 %v2041
    %2659 = vmatprep.subr.bf16.mxu0 %v2038
    %2660 = vmatpush1.bf16.msra.mxu0 %v2037
    %2661 = vmatprep.subr.bf16.mxu0 %v2034
    %2662 = vmatpush1.bf16.msra.mxu0 %v2033
    %2663 = vmatprep.subr.bf16.mxu0 0
    %2664 = vmatpush2.bf16.msra.mxu0 0
    %2665 = vmatprep.subr.bf16.mxu0 0
    %2666 = vmatpush2.bf16.msra.mxu0 0
    %2667 = vmatprep.subr.bf16.mxu0 0
    %2668 = vmatpush2.bf16.msra.mxu0 0
    %2669 = vmatprep.subr.bf16.mxu0 0
    %2670 = vmatpush2.bf16.msra.mxu0 0
    %2671 = vmatprep.subr.bf16.mxu0 0
    %2672 = vmatpush2.bf16.msra.mxu0 0
    %2673 = vmatprep.subr.bf16.mxu0 0
    %2674 = vmatpush2.bf16.msra.mxu0 0
    %2675 = vmatprep.subr.bf16.mxu0 0
    %2676 = vmatpush2.bf16.msra.mxu0 0
    %2677 = vmatprep.subr.bf16.mxu0 0
    %2678 = vmatpush2.bf16.msra.mxu0 0
    %2679 = vmatprep.mubr.bf16.mxu0 0
    %2680 = vmatmul.mubr.bf16.gmra.mxu0 %v2646
    %v2681 = vpop.f32.mrf.mxu0
    %v2682 = vadd.f32 0.0, %v2681
    %v2683 = vpop.f32.mrf.mxu0
    %v2684 = vadd.f32 0.0, %v2683
    %v2685 = vpop.f32.mrf.mxu0
    %v2686 = vpop.f32.mrf.mxu0
    %2687 = vdwg.mxu0
    %2688 = vmatprep.subr.bf16.mxu0 %v2064
    %2689 = vmatpush1.bf16.msra.mxu0 %v2063
    %2690 = vmatprep.subr.bf16.mxu0 %v2060
    %2691 = vmatpush1.bf16.msra.mxu0 %v2059
    %2692 = vmatprep.subr.bf16.mxu0 %v2056
    %2693 = vmatpush1.bf16.msra.mxu0 %v2055
    %2694 = vmatprep.subr.bf16.mxu0 %v2052
    %2695 = vmatpush1.bf16.msra.mxu0 %v2051
    %2696 = vmatprep.subr.bf16.mxu0 %v2048
    %2697 = vmatpush1.bf16.msra.mxu0 %v2047
    %2698 = vmatprep.subr.bf16.mxu0 %v2044
    %2699 = vmatpush1.bf16.msra.mxu0 %v2043
    %2700 = vmatprep.subr.bf16.mxu0 %v2040
    %2701 = vmatpush1.bf16.msra.mxu0 %v2039
    %2702 = vmatprep.subr.bf16.mxu0 %v2036
    %2703 = vmatpush1.bf16.msra.mxu0 %v2035
    %2704 = vmatprep.subr.bf16.mxu0 0
    %2705 = vmatpush2.bf16.msra.mxu0 0
    %2706 = vmatprep.subr.bf16.mxu0 0
    %2707 = vmatpush2.bf16.msra.mxu0 0
    %2708 = vmatprep.subr.bf16.mxu0 0
    %2709 = vmatpush2.bf16.msra.mxu0 0
    %2710 = vmatprep.subr.bf16.mxu0 0
    %2711 = vmatpush2.bf16.msra.mxu0 0
    %2712 = vmatprep.subr.bf16.mxu0 0
    %2713 = vmatpush2.bf16.msra.mxu0 0
    %2714 = vmatprep.subr.bf16.mxu0 0
    %2715 = vmatpush2.bf16.msra.mxu0 0
    %2716 = vmatprep.subr.bf16.mxu0 0
    %2717 = vmatpush2.bf16.msra.mxu0 0
    %2718 = vmatprep.subr.bf16.mxu0 0
    %2719 = vmatpush2.bf16.msra.mxu0 0
    %2720 = vmatprep.mubr.bf16.mxu0 0
    %2721 = vmatmul.mubr.bf16.gmra.mxu0 %v2646
    %v2722 = vpop.f32.mrf.mxu0
    %v2723 = vadd.f32 0.0, %v2722
    %v2724 = vpop.f32.mrf.mxu0
    %v2725 = vadd.f32 0.0, %v2724
    %v2726 = vpop.f32.mrf.mxu0
    %v2727 = vpop.f32.mrf.mxu0
    %2728 = vdwg.mxu0
    %v2729 = vadd.f32 %v2642, %v2682
    %v2730 = vadd.f32 %v2643, %v2684
    %v2731 = vadd.f32 %v2644, %v2723
    %v2732 = vadd.f32 %v2645, %v2725
    %v2733 = vmul.f32 %v2729, 0.5
    %v2734 = vtanh.pop %v2733
    %v2735 = vmul.f32 %v2734, 0.5
    %v2736 = vadd.f32 %v2735, 0.5
    %v2737 = vmul.f32 %v2730, 0.5
    %v2738 = vtanh.pop %v2737
    %v2739 = vmul.f32 %v2738, 0.5
    %v2740 = vadd.f32 %v2739, 0.5
    %v2741 = vtanh.pop %v2731
    %v2742 = vmul.f32 %v2732, 0.5
    %v2743 = vtanh.pop %v2742
    %v2744 = vmul.f32 %v2743, 0.5
    %v2745 = vadd.f32 %v2744, 0.5
    %v2746 = vmul.f32 %v2740, %v2638
    %v2747 = vmul.f32 %v2736, %v2741
    %v2748 = vadd.f32 %v2746, %v2747
    %v2749 = vtanh.pop %v2748
    %v2750 = vmul.f32 %v2745, %v2749
    %2751 = vst [vmem:[%s1267] sm:$0xff] %v2750
    %v2752 = vld [vmem:[%s1271] sm:$0xff]
    %v2753 = vld [vmem:[%s1271 + $0x8] sm:$0xff]
    %v2754 = vld [vmem:[%s1271 + $0x10] sm:$0xff]
    %v2755 = vld [vmem:[%s1271 + $0x18] sm:$0xff]
    %v2756 = vpack.c.bf16 %v2750, %v2750
    %2757 = vmatprep.subr.bf16.mxu0 %v2062
    %2758 = vmatpush1.bf16.msra.mxu0 %v2061
    %2759 = vmatprep.subr.bf16.mxu0 %v2058
    %2760 = vmatpush1.bf16.msra.mxu0 %v2057
    %2761 = vmatprep.subr.bf16.mxu0 %v2054
    %2762 = vmatpush1.bf16.msra.mxu0 %v2053
    %2763 = vmatprep.subr.bf16.mxu0 %v2050
    %2764 = vmatpush1.bf16.msra.mxu0 %v2049
    %2765 = vmatprep.subr.bf16.mxu0 %v2046
    %2766 = vmatpush1.bf16.msra.mxu0 %v2045
    %2767 = vmatprep.subr.bf16.mxu0 %v2042
    %2768 = vmatpush1.bf16.msra.mxu0 %v2041
    %2769 = vmatprep.subr.bf16.mxu0 %v2038
    %2770 = vmatpush1.bf16.msra.mxu0 %v2037
    %2771 = vmatprep.subr.bf16.mxu0 %v2034
    %2772 = vmatpush1.bf16.msra.mxu0 %v2033
    %2773 = vmatprep.subr.bf16.mxu0 0
    %2774 = vmatpush2.bf16.msra.mxu0 0
    %2775 = vmatprep.subr.bf16.mxu0 0
    %2776 = vmatpush2.bf16.msra.mxu0 0
    %2777 = vmatprep.subr.bf16.mxu0 0
    %2778 = vmatpush2.bf16.msra.mxu0 0
    %2779 = vmatprep.subr.bf16.mxu0 0
    %2780 = vmatpush2.bf16.msra.mxu0 0
    %2781 = vmatprep.subr.bf16.mxu0 0
    %2782 = vmatpush2.bf16.msra.mxu0 0
    %2783 = vmatprep.subr.bf16.mxu0 0
    %2784 = vmatpush2.bf16.msra.mxu0 0
    %2785 = vmatprep.subr.bf16.mxu0 0
    %2786 = vmatpush2.bf16.msra.mxu0 0
    %2787 = vmatprep.subr.bf16.mxu0 0
    %2788 = vmatpush2.bf16.msra.mxu0 0
    %2789 = vmatprep.mubr.bf16.mxu0 0
    %2790 = vmatmul.mubr.bf16.gmra.mxu0 %v2756
    %v2791 = vpop.f32.mrf.mxu0
    %v2792 = vadd.f32 0.0, %v2791
    %v2793 = vpop.f32.mrf.mxu0
    %v2794 = vadd.f32 0.0, %v2793
    %v2795 = vpop.f32.mrf.mxu0
    %v2796 = vpop.f32.mrf.mxu0
    %2797 = vdwg.mxu0
    %2798 = vmatprep.subr.bf16.mxu0 %v2064
    %2799 = vmatpush1.bf16.msra.mxu0 %v2063
    %2800 = vmatprep.subr.bf16.mxu0 %v2060
    %2801 = vmatpush1.bf16.msra.mxu0 %v2059
    %2802 = vmatprep.subr.bf16.mxu0 %v2056
    %2803 = vmatpush1.bf16.msra.mxu0 %v2055
    %2804 = vmatprep.subr.bf16.mxu0 %v2052
    %2805 = vmatpush1.bf16.msra.mxu0 %v2051
    %2806 = vmatprep.subr.bf16.mxu0 %v2048
    %2807 = vmatpush1.bf16.msra.mxu0 %v2047
    %2808 = vmatprep.subr.bf16.mxu0 %v2044
    %2809 = vmatpush1.bf16.msra.mxu0 %v2043
    %2810 = vmatprep.subr.bf16.mxu0 %v2040
    %2811 = vmatpush1.bf16.msra.mxu0 %v2039
    %2812 = vmatprep.subr.bf16.mxu0 %v2036
    %2813 = vmatpush1.bf16.msra.mxu0 %v2035
    %2814 = vmatprep.subr.bf16.mxu0 0
    %2815 = vmatpush2.bf16.msra.mxu0 0
    %2816 = vmatprep.subr.bf16.mxu0 0
    %2817 = vmatpush2.bf16.msra.mxu0 0
    %2818 = vmatprep.subr.bf16.mxu0 0
    %2819 = vmatpush2.bf16.msra.mxu0 0
    %2820 = vmatprep.subr.bf16.mxu0 0
    %2821 = vmatpush2.bf16.msra.mxu0 0
    %2822 = vmatprep.subr.bf16.mxu0 0
    %2823 = vmatpush2.bf16.msra.mxu0 0
    %2824 = vmatprep.subr.bf16.mxu0 0
    %2825 = vmatpush2.bf16.msra.mxu0 0
    %2826 = vmatprep.subr.bf16.mxu0 0
    %2827 = vmatpush2.bf16.msra.mxu0 0
    %2828 = vmatprep.subr.bf16.mxu0 0
    %2829 = vmatpush2.bf16.msra.mxu0 0
    %2830 = vmatprep.mubr.bf16.mxu0 0
    %2831 = vmatmul.mubr.bf16.gmra.mxu0 %v2756
    %v2832 = vpop.f32.mrf.mxu0
    %v2833 = vadd.f32 0.0, %v2832
    %v2834 = vpop.f32.mrf.mxu0
    %v2835 = vadd.f32 0.0, %v2834
    %v2836 = vpop.f32.mrf.mxu0
    %v2837 = vpop.f32.mrf.mxu0
    %2838 = vdwg.mxu0
    %v2839 = vadd.f32 %v2752, %v2792
    %v2840 = vadd.f32 %v2753, %v2794
    %v2841 = vadd.f32 %v2754, %v2833
    %v2842 = vadd.f32 %v2755, %v2835
    %v2843 = vmul.f32 %v2839, 0.5
    %v2844 = vtanh.pop %v2843
    %v2845 = vmul.f32 %v2844, 0.5
    %v2846 = vadd.f32 %v2845, 0.5
    %v2847 = vmul.f32 %v2840, 0.5
    %v2848 = vtanh.pop %v2847
    %v2849 = vmul.f32 %v2848, 0.5
    %v2850 = vadd.f32 %v2849, 0.5
    %v2851 = vtanh.pop %v2841
    %v2852 = vmul.f32 %v2842, 0.5
    %v2853 = vtanh.pop %v2852
    %v2854 = vmul.f32 %v2853, 0.5
    %v2855 = vadd.f32 %v2854, 0.5
    %v2856 = vmul.f32 %v2850, %v2748
    %v2857 = vmul.f32 %v2846, %v2851
    %v2858 = vadd.f32 %v2856, %v2857
    %v2859 = vtanh.pop %v2858
    %v2860 = vmul.f32 %v2855, %v2859
    %2861 = vst [vmem:[%s1381] sm:$0xff] %v2860
    %v2862 = vld [vmem:[%s1385] sm:$0xff]
    %v2863 = vld [vmem:[%s1385 + $0x8] sm:$0xff]
    %v2864 = vld [vmem:[%s1385 + $0x10] sm:$0xff]
    %v2865 = vld [vmem:[%s1385 + $0x18] sm:$0xff]
    %v2866 = vpack.c.bf16 %v2860, %v2860
    %2867 = vmatprep.subr.bf16.mxu0 %v2062
    %2868 = vmatpush1.bf16.msra.mxu0 %v2061
    %2869 = vmatprep.subr.bf16.mxu0 %v2058
    %2870 = vmatpush1.bf16.msra.mxu0 %v2057
    %2871 = vmatprep.subr.bf16.mxu0 %v2054
    %2872 = vmatpush1.bf16.msra.mxu0 %v2053
    %2873 = vmatprep.subr.bf16.mxu0 %v2050
    %2874 = vmatpush1.bf16.msra.mxu0 %v2049
    %2875 = vmatprep.subr.bf16.mxu0 %v2046
    %2876 = vmatpush1.bf16.msra.mxu0 %v2045
    %2877 = vmatprep.subr.bf16.mxu0 %v2042
    %2878 = vmatpush1.bf16.msra.mxu0 %v2041
    %2879 = vmatprep.subr.bf16.mxu0 %v2038
    %2880 = vmatpush1.bf16.msra.mxu0 %v2037
    %2881 = vmatprep.subr.bf16.mxu0 %v2034
    %2882 = vmatpush1.bf16.msra.mxu0 %v2033
    %2883 = vmatprep.subr.bf16.mxu0 0
    %2884 = vmatpush2.bf16.msra.mxu0 0
    %2885 = vmatprep.subr.bf16.mxu0 0
    %2886 = vmatpush2.bf16.msra.mxu0 0
    %2887 = vmatprep.subr.bf16.mxu0 0
    %2888 = vmatpush2.bf16.msra.mxu0 0
    %2889 = vmatprep.subr.bf16.mxu0 0
    %2890 = vmatpush2.bf16.msra.mxu0 0
    %2891 = vmatprep.subr.bf16.mxu0 0
    %2892 = vmatpush2.bf16.msra.mxu0 0
    %2893 = vmatprep.subr.bf16.mxu0 0
    %2894 = vmatpush2.bf16.msra.mxu0 0
    %2895 = vmatprep.subr.bf16.mxu0 0
    %2896 = vmatpush2.bf16.msra.mxu0 0
    %2897 = vmatprep.subr.bf16.mxu0 0
    %2898 = vmatpush2.bf16.msra.mxu0 0
    %2899 = vmatprep.mubr.bf16.mxu0 0
    %2900 = vmatmul.mubr.bf16.gmra.mxu0 %v2866
    %v2901 = vpop.f32.mrf.mxu0
    %v2902 = vadd.f32 0.0, %v2901
    %v2903 = vpop.f32.mrf.mxu0
    %v2904 = vadd.f32 0.0, %v2903
    %v2905 = vpop.f32.mrf.mxu0
    %v2906 = vpop.f32.mrf.mxu0
    %2907 = vdwg.mxu0
    %2908 = vmatprep.subr.bf16.mxu0 %v2064
    %2909 = vmatpush1.bf16.msra.mxu0 %v2063
    %2910 = vmatprep.subr.bf16.mxu0 %v2060
    %2911 = vmatpush1.bf16.msra.mxu0 %v2059
    %2912 = vmatprep.subr.bf16.mxu0 %v2056
    %2913 = vmatpush1.bf16.msra.mxu0 %v2055
    %2914 = vmatprep.subr.bf16.mxu0 %v2052
    %2915 = vmatpush1.bf16.msra.mxu0 %v2051
    %2916 = vmatprep.subr.bf16.mxu0 %v2048
    %2917 = vmatpush1.bf16.msra.mxu0 %v2047
    %2918 = vmatprep.subr.bf16.mxu0 %v2044
    %2919 = vmatpush1.bf16.msra.mxu0 %v2043
    %2920 = vmatprep.subr.bf16.mxu0 %v2040
    %2921 = vmatpush1.bf16.msra.mxu0 %v2039
    %2922 = vmatprep.subr.bf16.mxu0 %v2036
    %2923 = vmatpush1.bf16.msra.mxu0 %v2035
    %2924 = vmatprep.subr.bf16.mxu0 0
    %2925 = vmatpush2.bf16.msra.mxu0 0
    %2926 = vmatprep.subr.bf16.mxu0 0
    %2927 = vmatpush2.bf16.msra.mxu0 0
    %2928 = vmatprep.subr.bf16.mxu0 0
    %2929 = vmatpush2.bf16.msra.mxu0 0
    %2930 = vmatprep.subr.bf16.mxu0 0
    %2931 = vmatpush2.bf16.msra.mxu0 0
    %2932 = vmatprep.subr.bf16.mxu0 0
    %2933 = vmatpush2.bf16.msra.mxu0 0
    %2934 = vmatprep.subr.bf16.mxu0 0
    %2935 = vmatpush2.bf16.msra.mxu0 0
    %2936 = vmatprep.subr.bf16.mxu0 0
    %2937 = vmatpush2.bf16.msra.mxu0 0
    %2938 = vmatprep.subr.bf16.mxu0 0
    %2939 = vmatpush2.bf16.msra.mxu0 0
    %2940 = vmatprep.mubr.bf16.mxu0 0
    %2941 = vmatmul.mubr.bf16.gmra.mxu0 %v2866
    %v2942 = vpop.f32.mrf.mxu0
    %v2943 = vadd.f32 0.0, %v2942
    %v2944 = vpop.f32.mrf.mxu0
    %v2945 = vadd.f32 0.0, %v2944
    %v2946 = vpop.f32.mrf.mxu0
    %v2947 = vpop.f32.mrf.mxu0
    %2948 = vdwg.mxu0
    %v2949 = vadd.f32 %v2862, %v2902
    %v2950 = vadd.f32 %v2863, %v2904
    %v2951 = vadd.f32 %v2864, %v2943
    %v2952 = vadd.f32 %v2865, %v2945
    %v2953 = vmul.f32 %v2949, 0.5
    %v2954 = vtanh.pop %v2953
    %v2955 = vmul.f32 %v2954, 0.5
    %v2956 = vadd.f32 %v2955, 0.5
    %v2957 = vmul.f32 %v2950, 0.5
    %v2958 = vtanh.pop %v2957
    %v2959 = vmul.f32 %v2958, 0.5
    %v2960 = vadd.f32 %v2959, 0.5
    %v2961 = vtanh.pop %v2951
    %v2962 = vmul.f32 %v2952, 0.5
    %v2963 = vtanh.pop %v2962
    %v2964 = vmul.f32 %v2963, 0.5
    %v2965 = vadd.f32 %v2964, 0.5
    %v2966 = vmul.f32 %v2960, %v2858
    %v2967 = vmul.f32 %v2956, %v2961
    %v2968 = vadd.f32 %v2966, %v2967
    %v2969 = vtanh.pop %v2968
    %v2970 = vmul.f32 %v2965, %v2969
    %2971 = vst [vmem:[%s1495] sm:$0xff] %v2970
    %v2972 = vld [vmem:[#allocation2] sm:$0xff]
    %v2973 = vld [vmem:[#allocation2 + $0x8] sm:$0xff]
    %v2974 = vld [vmem:[#allocation2 + $0x10] sm:$0xff]
    %v2975 = vld [vmem:[#allocation2 + $0x18] sm:$0xff]
    %v2976 = vld [vmem:[#allocation2 + $0x20] sm:$0xff]
    %v2977 = vld [vmem:[#allocation2 + $0x28] sm:$0xff]
    %v2978 = vld [vmem:[#allocation2 + $0x30] sm:$0xff]
    %v2979 = vld [vmem:[#allocation2 + $0x38] sm:$0xff]
    %v2980 = vpack.c.bf16 %v2973, %v2972
    %v2981 = vpack.c.bf16 %v2975, %v2974
    %v2982 = vpack.c.bf16 %v2977, %v2976
    %v2983 = vpack.c.bf16 %v2979, %v2978
    %v2984 = vld [vmem:[#allocation13] sm:$0xff]
    %v2985 = vld [vmem:[#allocation13 + $0x8] sm:$0xff]
    %v2986 = vld [vmem:[#allocation13 + $0x10] sm:$0xff]
    %v2987 = vld [vmem:[#allocation13 + $0x18] sm:$0xff]
    %v2988 = vld [vmem:[#allocation13 + $0x20] sm:$0xff]
    %v2989 = vld [vmem:[#allocation13 + $0x28] sm:$0xff]
    %v2990 = vld [vmem:[#allocation13 + $0x30] sm:$0xff]
    %v2991 = vld [vmem:[#allocation13 + $0x38] sm:$0xff]
    %v2992 = vld [vmem:[#allocation13 + $0x40] sm:$0xff]
    %v2993 = vld [vmem:[#allocation13 + $0x48] sm:$0xff]
    %v2994 = vld [vmem:[#allocation13 + $0x50] sm:$0xff]
    %v2995 = vld [vmem:[#allocation13 + $0x58] sm:$0xff]
    %v2996 = vld [vmem:[#allocation13 + $0x60] sm:$0xff]
    %v2997 = vld [vmem:[#allocation13 + $0x68] sm:$0xff]
    %v2998 = vld [vmem:[#allocation13 + $0x70] sm:$0xff]
    %v2999 = vld [vmem:[#allocation13 + $0x78] sm:$0xff]
    %v3000 = vld [vmem:[#allocation13 + $0x80] sm:$0xff]
    %v3001 = vld [vmem:[#allocation13 + $0x88] sm:$0xff]
    %v3002 = vld [vmem:[#allocation13 + $0x90] sm:$0xff]
    %v3003 = vld [vmem:[#allocation13 + $0x98] sm:$0xff]
    %v3004 = vld [vmem:[#allocation13 + $0xa0] sm:$0xff]
    %v3005 = vld [vmem:[#allocation13 + $0xa8] sm:$0xff]
    %v3006 = vld [vmem:[#allocation13 + $0xb0] sm:$0xff]
    %v3007 = vld [vmem:[#allocation13 + $0xb8] sm:$0xff]
    %v3008 = vld [vmem:[#allocation13 + $0xc0] sm:$0xff]
    %v3009 = vld [vmem:[#allocation13 + $0xc8] sm:$0xff]
    %v3010 = vld [vmem:[#allocation13 + $0xd0] sm:$0xff]
    %v3011 = vld [vmem:[#allocation13 + $0xd8] sm:$0xff]
    %v3012 = vld [vmem:[#allocation13 + $0xe0] sm:$0xff]
    %v3013 = vld [vmem:[#allocation13 + $0xe8] sm:$0xff]
    %v3014 = vld [vmem:[#allocation13 + $0xf0] sm:$0xff]
    %v3015 = vld [vmem:[#allocation13 + $0xf8] sm:$0xff]
    %v3016 = vld [vmem:[#allocation16] sm:$0xf]
    %v3018 = vlaneseq
    %v3019 = vshrl.u32 %v3018, 7
    %v3020 = vsub.s32 0, %v3019
    %v3021 = vrot.slane %v3016, %v3020
    %v3022 = vlaneseq
    %v3023 = vshrl.u32 %v3022, 7
    %v3024 = vsub.s32 1, %v3023
    %v3025 = vrot.slane %v3016, %v3024
    %v3026 = vlaneseq
    %v3027 = vshrl.u32 %v3026, 7
    %v3028 = vsub.s32 2, %v3027
    %v3029 = vrot.slane %v3016, %v3028
    %v3030 = vlaneseq
    %v3031 = vshrl.u32 %v3030, 7
    %v3032 = vsub.s32 3, %v3031
    %v3033 = vrot.slane %v3016, %v3032
    %v3070 = vunpack.c.l.b16 %v2984
    %v3071 = vunpack.c.h.b16 %v2984
    %v3072 = vunpack.c.l.b16 %v2985
    %v3073 = vunpack.c.h.b16 %v2985
    %v3074 = vunpack.c.l.b16 %v2986
    %v3075 = vunpack.c.h.b16 %v2986
    %v3076 = vunpack.c.l.b16 %v2987
    %v3077 = vunpack.c.h.b16 %v2987
    %v3078 = vunpack.c.l.b16 %v2988
    %v3079 = vunpack.c.h.b16 %v2988
    %v3080 = vunpack.c.l.b16 %v2989
    %v3081 = vunpack.c.h.b16 %v2989
    %v3082 = vunpack.c.l.b16 %v2990
    %v3083 = vunpack.c.h.b16 %v2990
    %v3084 = vunpack.c.l.b16 %v2991
    %v3085 = vunpack.c.h.b16 %v2991
    %v3086 = vunpack.c.l.b16 %v2992
    %v3087 = vunpack.c.h.b16 %v2992
    %v3088 = vunpack.c.l.b16 %v2993
    %v3089 = vunpack.c.h.b16 %v2993
    %v3090 = vunpack.c.l.b16 %v2994
    %v3091 = vunpack.c.h.b16 %v2994
    %v3092 = vunpack.c.l.b16 %v2995
    %v3093 = vunpack.c.h.b16 %v2995
    %v3094 = vunpack.c.l.b16 %v2996
    %v3095 = vunpack.c.h.b16 %v2996
    %v3096 = vunpack.c.l.b16 %v2997
    %v3097 = vunpack.c.h.b16 %v2997
    %v3098 = vunpack.c.l.b16 %v2998
    %v3099 = vunpack.c.h.b16 %v2998
    %v3100 = vunpack.c.l.b16 %v2999
    %v3101 = vunpack.c.h.b16 %v2999
    %v3102 = vunpack.c.l.b16 %v3000
    %v3103 = vunpack.c.h.b16 %v3000
    %v3104 = vunpack.c.l.b16 %v3001
    %v3105 = vunpack.c.h.b16 %v3001
    %v3106 = vunpack.c.l.b16 %v3002
    %v3107 = vunpack.c.h.b16 %v3002
    %v3108 = vunpack.c.l.b16 %v3003
    %v3109 = vunpack.c.h.b16 %v3003
    %v3110 = vunpack.c.l.b16 %v3004
    %v3111 = vunpack.c.h.b16 %v3004
    %v3112 = vunpack.c.l.b16 %v3005
    %v3113 = vunpack.c.h.b16 %v3005
    %v3114 = vunpack.c.l.b16 %v3006
    %v3115 = vunpack.c.h.b16 %v3006
    %v3116 = vunpack.c.l.b16 %v3007
    %v3117 = vunpack.c.h.b16 %v3007
    %v3118 = vunpack.c.l.b16 %v3008
    %v3119 = vunpack.c.h.b16 %v3008
    %v3120 = vunpack.c.l.b16 %v3009
    %v3121 = vunpack.c.h.b16 %v3009
    %v3122 = vunpack.c.l.b16 %v3010
    %v3123 = vunpack.c.h.b16 %v3010
    %v3124 = vunpack.c.l.b16 %v3011
    %v3125 = vunpack.c.h.b16 %v3011
    %v3126 = vunpack.c.l.b16 %v3012
    %v3127 = vunpack.c.h.b16 %v3012
    %v3128 = vunpack.c.l.b16 %v3013
    %v3129 = vunpack.c.h.b16 %v3013
    %v3130 = vunpack.c.l.b16 %v3014
    %v3131 = vunpack.c.h.b16 %v3014
    %v3132 = vunpack.c.l.b16 %v3015
    %v3133 = vunpack.c.h.b16 %v3015
    %v3134 = vpack.c.b16 %v3074, %v3070
    %v3135 = vpack.c.b16 %v3075, %v3071
    %v3136 = vpack.c.b16 %v3076, %v3072
    %v3137 = vpack.c.b16 %v3077, %v3073
    %v3138 = vpack.c.b16 %v3082, %v3078
    %v3139 = vpack.c.b16 %v3083, %v3079
    %v3140 = vpack.c.b16 %v3084, %v3080
    %v3141 = vpack.c.b16 %v3085, %v3081
    %v3142 = vpack.c.b16 %v3090, %v3086
    %v3143 = vpack.c.b16 %v3091, %v3087
    %v3144 = vpack.c.b16 %v3092, %v3088
    %v3145 = vpack.c.b16 %v3093, %v3089
    %v3146 = vpack.c.b16 %v3098, %v3094
    %v3147 = vpack.c.b16 %v3099, %v3095
    %v3148 = vpack.c.b16 %v3100, %v3096
    %v3149 = vpack.c.b16 %v3101, %v3097
    %v3150 = vpack.c.b16 %v3106, %v3102
    %v3151 = vpack.c.b16 %v3107, %v3103
    %v3152 = vpack.c.b16 %v3108, %v3104
    %v3153 = vpack.c.b16 %v3109, %v3105
    %v3154 = vpack.c.b16 %v3114, %v3110
    %v3155 = vpack.c.b16 %v3115, %v3111
    %v3156 = vpack.c.b16 %v3116, %v3112
    %v3157 = vpack.c.b16 %v3117, %v3113
    %v3158 = vpack.c.b16 %v3122, %v3118
    %v3159 = vpack.c.b16 %v3123, %v3119
    %v3160 = vpack.c.b16 %v3124, %v3120
    %v3161 = vpack.c.b16 %v3125, %v3121
    %v3162 = vpack.c.b16 %v3130, %v3126
    %v3163 = vpack.c.b16 %v3131, %v3127
    %v3164 = vpack.c.b16 %v3132, %v3128
    %v3165 = vpack.c.b16 %v3133, %v3129
    %3198 = vmatprep.subr.bf16.mxu0 %v3163
    %3199 = vmatpush1.bf16.msra.mxu0 %v3162
    %3200 = vmatprep.subr.bf16.mxu0 %v3159
    %3201 = vmatpush1.bf16.msra.mxu0 %v3158
    %3202 = vmatprep.subr.bf16.mxu0 %v3155
    %3203 = vmatpush1.bf16.msra.mxu0 %v3154
    %3204 = vmatprep.subr.bf16.mxu0 %v3151
    %3205 = vmatpush1.bf16.msra.mxu0 %v3150
    %3206 = vmatprep.subr.bf16.mxu0 %v3147
    %3207 = vmatpush1.bf16.msra.mxu0 %v3146
    %3208 = vmatprep.subr.bf16.mxu0 %v3143
    %3209 = vmatpush1.bf16.msra.mxu0 %v3142
    %3210 = vmatprep.subr.bf16.mxu0 %v3139
    %3211 = vmatpush1.bf16.msra.mxu0 %v3138
    %3212 = vmatprep.subr.bf16.mxu0 %v3135
    %3213 = vmatpush1.bf16.msra.mxu0 %v3134
    %3214 = vmatprep.subr.bf16.mxu0 0
    %3215 = vmatpush2.bf16.msra.mxu0 0
    %3216 = vmatprep.subr.bf16.mxu0 0
    %3217 = vmatpush2.bf16.msra.mxu0 0
    %3218 = vmatprep.subr.bf16.mxu0 0
    %3219 = vmatpush2.bf16.msra.mxu0 0
    %3220 = vmatprep.subr.bf16.mxu0 0
    %3221 = vmatpush2.bf16.msra.mxu0 0
    %3222 = vmatprep.subr.bf16.mxu0 0
    %3223 = vmatpush2.bf16.msra.mxu0 0
    %3224 = vmatprep.subr.bf16.mxu0 0
    %3225 = vmatpush2.bf16.msra.mxu0 0
    %3226 = vmatprep.subr.bf16.mxu0 0
    %3227 = vmatpush2.bf16.msra.mxu0 0
    %3228 = vmatprep.subr.bf16.mxu0 0
    %3229 = vmatpush2.bf16.msra.mxu0 0
    %3230 = vmatprep.mubr.bf16.mxu0 0
    %3231 = vmatmul.mubr.bf16.gmra.mxu0 %v2980
    %v3232 = vpop.f32.mrf.mxu0
    %v3233 = vadd.f32 %v3021, %v3232
    %v3234 = vpop.f32.mrf.mxu0
    %v3235 = vadd.f32 %v3025, %v3234
    %v3236 = vpop.f32.mrf.mxu0
    %v3237 = vadd.f32 %v3021, %v3236
    %v3238 = vpop.f32.mrf.mxu0
    %v3239 = vadd.f32 %v3025, %v3238
    %3240 = vmatprep.mubr.bf16.mxu0 0
    %3241 = vmatmul.mubr.bf16.gmra.mxu0 %v2981
    %v3242 = vpop.f32.mrf.mxu0
    %v3243 = vadd.f32 %v3021, %v3242
    %v3244 = vpop.f32.mrf.mxu0
    %v3245 = vadd.f32 %v3025, %v3244
    %v3246 = vpop.f32.mrf.mxu0
    %v3247 = vadd.f32 %v3021, %v3246
    %v3248 = vpop.f32.mrf.mxu0
    %v3249 = vadd.f32 %v3025, %v3248
    %3250 = vmatprep.mubr.bf16.mxu0 0
    %3251 = vmatmul.mubr.bf16.gmra.mxu0 %v2982
    %v3252 = vpop.f32.mrf.mxu0
    %v3253 = vadd.f32 %v3021, %v3252
    %v3254 = vpop.f32.mrf.mxu0
    %v3255 = vadd.f32 %v3025, %v3254
    %v3256 = vpop.f32.mrf.mxu0
    %v3257 = vadd.f32 %v3021, %v3256
    %v3258 = vpop.f32.mrf.mxu0
    %v3259 = vadd.f32 %v3025, %v3258
    %3260 = vmatprep.mubr.bf16.mxu0 0
    %3261 = vmatmul.mubr.bf16.gmra.mxu0 %v2983
    %v3262 = vpop.f32.mrf.mxu0
    %v3263 = vadd.f32 %v3021, %v3262
    %v3264 = vpop.f32.mrf.mxu0
    %v3265 = vadd.f32 %v3025, %v3264
    %v3266 = vpop.f32.mrf.mxu0
    %v3267 = vadd.f32 %v3021, %v3266
    %v3268 = vpop.f32.mrf.mxu0
    %v3269 = vadd.f32 %v3025, %v3268
    %3270 = vdwg.mxu0
    %3271 = vmatprep.subr.bf16.mxu0 %v3165
    %3272 = vmatpush1.bf16.msra.mxu0 %v3164
    %3273 = vmatprep.subr.bf16.mxu0 %v3161
    %3274 = vmatpush1.bf16.msra.mxu0 %v3160
    %3275 = vmatprep.subr.bf16.mxu0 %v3157
    %3276 = vmatpush1.bf16.msra.mxu0 %v3156
    %3277 = vmatprep.subr.bf16.mxu0 %v3153
    %3278 = vmatpush1.bf16.msra.mxu0 %v3152
    %3279 = vmatprep.subr.bf16.mxu0 %v3149
    %3280 = vmatpush1.bf16.msra.mxu0 %v3148
    %3281 = vmatprep.subr.bf16.mxu0 %v3145
    %3282 = vmatpush1.bf16.msra.mxu0 %v3144
    %3283 = vmatprep.subr.bf16.mxu0 %v3141
    %3284 = vmatpush1.bf16.msra.mxu0 %v3140
    %3285 = vmatprep.subr.bf16.mxu0 %v3137
    %3286 = vmatpush1.bf16.msra.mxu0 %v3136
    %3287 = vmatprep.subr.bf16.mxu0 0
    %3288 = vmatpush2.bf16.msra.mxu0 0
    %3289 = vmatprep.subr.bf16.mxu0 0
    %3290 = vmatpush2.bf16.msra.mxu0 0
    %3291 = vmatprep.subr.bf16.mxu0 0
    %3292 = vmatpush2.bf16.msra.mxu0 0
    %3293 = vmatprep.subr.bf16.mxu0 0
    %3294 = vmatpush2.bf16.msra.mxu0 0
    %3295 = vmatprep.subr.bf16.mxu0 0
    %3296 = vmatpush2.bf16.msra.mxu0 0
    %3297 = vmatprep.subr.bf16.mxu0 0
    %3298 = vmatpush2.bf16.msra.mxu0 0
    %3299 = vmatprep.subr.bf16.mxu0 0
    %3300 = vmatpush2.bf16.msra.mxu0 0
    %3301 = vmatprep.subr.bf16.mxu0 0
    %3302 = vmatpush2.bf16.msra.mxu0 0
    %3303 = vmatprep.mubr.bf16.mxu0 0
    %3304 = vmatmul.mubr.bf16.gmra.mxu0 %v2980
    %v3305 = vpop.f32.mrf.mxu0
    %v3306 = vadd.f32 %v3029, %v3305
    %v3307 = vpop.f32.mrf.mxu0
    %v3308 = vadd.f32 %v3033, %v3307
    %v3309 = vpop.f32.mrf.mxu0
    %v3310 = vadd.f32 %v3029, %v3309
    %v3311 = vpop.f32.mrf.mxu0
    %v3312 = vadd.f32 %v3033, %v3311
    %3313 = vmatprep.mubr.bf16.mxu0 0
    %3314 = vmatmul.mubr.bf16.gmra.mxu0 %v2981
    %v3315 = vpop.f32.mrf.mxu0
    %v3316 = vadd.f32 %v3029, %v3315
    %v3317 = vpop.f32.mrf.mxu0
    %v3318 = vadd.f32 %v3033, %v3317
    %v3319 = vpop.f32.mrf.mxu0
    %v3320 = vadd.f32 %v3029, %v3319
    %v3321 = vpop.f32.mrf.mxu0
    %v3322 = vadd.f32 %v3033, %v3321
    %3323 = vmatprep.mubr.bf16.mxu0 0
    %3324 = vmatmul.mubr.bf16.gmra.mxu0 %v2982
    %v3325 = vpop.f32.mrf.mxu0
    %v3326 = vadd.f32 %v3029, %v3325
    %v3327 = vpop.f32.mrf.mxu0
    %v3328 = vadd.f32 %v3033, %v3327
    %v3329 = vpop.f32.mrf.mxu0
    %v3330 = vadd.f32 %v3029, %v3329
    %v3331 = vpop.f32.mrf.mxu0
    %v3332 = vadd.f32 %v3033, %v3331
    %3333 = vmatprep.mubr.bf16.mxu0 0
    %3334 = vmatmul.mubr.bf16.gmra.mxu0 %v2983
    %v3335 = vpop.f32.mrf.mxu0
    %v3336 = vadd.f32 %v3029, %v3335
    %v3337 = vpop.f32.mrf.mxu0
    %v3338 = vadd.f32 %v3033, %v3337
    %v3339 = vpop.f32.mrf.mxu0
    %v3340 = vadd.f32 %v3029, %v3339
    %v3341 = vpop.f32.mrf.mxu0
    %v3342 = vadd.f32 %v3033, %v3341
    %3343 = vdwg.mxu0
    %3344 = vst [vmem:[#allocation3] sm:$0xff] %v3233
    %3345 = vst [vmem:[#allocation3 + $0x8] sm:$0xff] %v3235
    %3346 = vst [vmem:[#allocation3 + $0x10] sm:$0xff] %v3306
    %3347 = vst [vmem:[#allocation3 + $0x18] sm:$0xff] %v3308
    %3348 = vst [vmem:[#allocation3 + $0x20] sm:$0xff] %v3237
    %3349 = vst [vmem:[#allocation3 + $0x28] sm:$0xff] %v3239
    %3350 = vst [vmem:[#allocation3 + $0x30] sm:$0xff] %v3310
    %3351 = vst [vmem:[#allocation3 + $0x38] sm:$0xff] %v3312
    %3352 = vst [vmem:[#allocation3 + $0x40] sm:$0xff] %v3243
    %3353 = vst [vmem:[#allocation3 + $0x48] sm:$0xff] %v3245
    %3354 = vst [vmem:[#allocation3 + $0x50] sm:$0xff] %v3316
    %3355 = vst [vmem:[#allocation3 + $0x58] sm:$0xff] %v3318
    %3356 = vst [vmem:[#allocation3 + $0x60] sm:$0xff] %v3247
    %3357 = vst [vmem:[#allocation3 + $0x68] sm:$0xff] %v3249
    %3358 = vst [vmem:[#allocation3 + $0x70] sm:$0xff] %v3320
    %3359 = vst [vmem:[#allocation3 + $0x78] sm:$0xff] %v3322
    %3360 = vst [vmem:[#allocation3 + $0x80] sm:$0xff] %v3253
    %3361 = vst [vmem:[#allocation3 + $0x88] sm:$0xff] %v3255
    %3362 = vst [vmem:[#allocation3 + $0x90] sm:$0xff] %v3326
    %3363 = vst [vmem:[#allocation3 + $0x98] sm:$0xff] %v3328
    %3364 = vst [vmem:[#allocation3 + $0xa0] sm:$0xff] %v3257
    %3365 = vst [vmem:[#allocation3 + $0xa8] sm:$0xff] %v3259
    %3366 = vst [vmem:[#allocation3 + $0xb0] sm:$0xff] %v3330
    %3367 = vst [vmem:[#allocation3 + $0xb8] sm:$0xff] %v3332
    %3368 = vst [vmem:[#allocation3 + $0xc0] sm:$0xff] %v3263
    %3369 = vst [vmem:[#allocation3 + $0xc8] sm:$0xff] %v3265
    %3370 = vst [vmem:[#allocation3 + $0xd0] sm:$0xff] %v3336
    %3371 = vst [vmem:[#allocation3 + $0xd8] sm:$0xff] %v3338
    %3372 = vst [vmem:[#allocation3 + $0xe0] sm:$0xff] %v3267
    %3373 = vst [vmem:[#allocation3 + $0xe8] sm:$0xff] %v3269
    %3374 = vst [vmem:[#allocation3 + $0xf0] sm:$0xff] %v3340
    %3375 = vst [vmem:[#allocation3 + $0xf8] sm:$0xff] %v3342
    %v3376 = vld [vmem:[#allocation15] sm:$0xff]
    %v3377 = vld [vmem:[#allocation15 + $0x8] sm:$0xff]
    %v3378 = vld [vmem:[#allocation15 + $0x10] sm:$0xff]
    %v3379 = vld [vmem:[#allocation15 + $0x18] sm:$0xff]
    %v3380 = vld [vmem:[#allocation15 + $0x20] sm:$0xff]
    %v3381 = vld [vmem:[#allocation15 + $0x28] sm:$0xff]
    %v3382 = vld [vmem:[#allocation15 + $0x30] sm:$0xff]
    %v3383 = vld [vmem:[#allocation15 + $0x38] sm:$0xff]
    %v3384 = vld [vmem:[#allocation15 + $0x40] sm:$0xff]
    %v3385 = vld [vmem:[#allocation15 + $0x48] sm:$0xff]
    %v3386 = vld [vmem:[#allocation15 + $0x50] sm:$0xff]
    %v3387 = vld [vmem:[#allocation15 + $0x58] sm:$0xff]
    %v3388 = vld [vmem:[#allocation15 + $0x60] sm:$0xff]
    %v3389 = vld [vmem:[#allocation15 + $0x68] sm:$0xff]
    %v3390 = vld [vmem:[#allocation15 + $0x70] sm:$0xff]
    %v3391 = vld [vmem:[#allocation15 + $0x78] sm:$0xff]
    %v3392 = vld [vmem:[#allocation15 + $0x80] sm:$0xff]
    %v3393 = vld [vmem:[#allocation15 + $0x88] sm:$0xff]
    %v3394 = vld [vmem:[#allocation15 + $0x90] sm:$0xff]
    %v3395 = vld [vmem:[#allocation15 + $0x98] sm:$0xff]
    %v3396 = vld [vmem:[#allocation15 + $0xa0] sm:$0xff]
    %v3397 = vld [vmem:[#allocation15 + $0xa8] sm:$0xff]
    %v3398 = vld [vmem:[#allocation15 + $0xb0] sm:$0xff]
    %v3399 = vld [vmem:[#allocation15 + $0xb8] sm:$0xff]
    %v3400 = vld [vmem:[#allocation15 + $0xc0] sm:$0xff]
    %v3401 = vld [vmem:[#allocation15 + $0xc8] sm:$0xff]
    %v3402 = vld [vmem:[#allocation15 + $0xd0] sm:$0xff]
    %v3403 = vld [vmem:[#allocation15 + $0xd8] sm:$0xff]
    %v3404 = vld [vmem:[#allocation15 + $0xe0] sm:$0xff]
    %v3405 = vld [vmem:[#allocation15 + $0xe8] sm:$0xff]
    %v3406 = vld [vmem:[#allocation15 + $0xf0] sm:$0xff]
    %v3407 = vld [vmem:[#allocation15 + $0xf8] sm:$0xff]
    %v3408 = vld [vmem:[%s429] sm:$0xff]
    %v3409 = vld [vmem:[%s429 + $0x8] sm:$0xff]
    %v3410 = vld [vmem:[%s429 + $0x10] sm:$0xff]
    %v3411 = vld [vmem:[%s429 + $0x18] sm:$0xff]
    %v3444 = vunpack.c.l.b16 %v3376
    %v3445 = vunpack.c.h.b16 %v3376
    %v3446 = vunpack.c.l.b16 %v3377
    %v3447 = vunpack.c.h.b16 %v3377
    %v3448 = vunpack.c.l.b16 %v3378
    %v3449 = vunpack.c.h.b16 %v3378
    %v3450 = vunpack.c.l.b16 %v3379
    %v3451 = vunpack.c.h.b16 %v3379
    %v3452 = vunpack.c.l.b16 %v3380
    %v3453 = vunpack.c.h.b16 %v3380
    %v3454 = vunpack.c.l.b16 %v3381
    %v3455 = vunpack.c.h.b16 %v3381
    %v3456 = vunpack.c.l.b16 %v3382
    %v3457 = vunpack.c.h.b16 %v3382
    %v3458 = vunpack.c.l.b16 %v3383
    %v3459 = vunpack.c.h.b16 %v3383
    %v3460 = vunpack.c.l.b16 %v3384
    %v3461 = vunpack.c.h.b16 %v3384
    %v3462 = vunpack.c.l.b16 %v3385
    %v3463 = vunpack.c.h.b16 %v3385
    %v3464 = vunpack.c.l.b16 %v3386
    %v3465 = vunpack.c.h.b16 %v3386
    %v3466 = vunpack.c.l.b16 %v3387
    %v3467 = vunpack.c.h.b16 %v3387
    %v3468 = vunpack.c.l.b16 %v3388
    %v3469 = vunpack.c.h.b16 %v3388
    %v3470 = vunpack.c.l.b16 %v3389
    %v3471 = vunpack.c.h.b16 %v3389
    %v3472 = vunpack.c.l.b16 %v3390
    %v3473 = vunpack.c.h.b16 %v3390
    %v3474 = vunpack.c.l.b16 %v3391
    %v3475 = vunpack.c.h.b16 %v3391
    %v3476 = vunpack.c.l.b16 %v3392
    %v3477 = vunpack.c.h.b16 %v3392
    %v3478 = vunpack.c.l.b16 %v3393
    %v3479 = vunpack.c.h.b16 %v3393
    %v3480 = vunpack.c.l.b16 %v3394
    %v3481 = vunpack.c.h.b16 %v3394
    %v3482 = vunpack.c.l.b16 %v3395
    %v3483 = vunpack.c.h.b16 %v3395
    %v3484 = vunpack.c.l.b16 %v3396
    %v3485 = vunpack.c.h.b16 %v3396
    %v3486 = vunpack.c.l.b16 %v3397
    %v3487 = vunpack.c.h.b16 %v3397
    %v3488 = vunpack.c.l.b16 %v3398
    %v3489 = vunpack.c.h.b16 %v3398
    %v3490 = vunpack.c.l.b16 %v3399
    %v3491 = vunpack.c.h.b16 %v3399
    %v3492 = vunpack.c.l.b16 %v3400
    %v3493 = vunpack.c.h.b16 %v3400
    %v3494 = vunpack.c.l.b16 %v3401
    %v3495 = vunpack.c.h.b16 %v3401
    %v3496 = vunpack.c.l.b16 %v3402
    %v3497 = vunpack.c.h.b16 %v3402
    %v3498 = vunpack.c.l.b16 %v3403
    %v3499 = vunpack.c.h.b16 %v3403
    %v3500 = vunpack.c.l.b16 %v3404
    %v3501 = vunpack.c.h.b16 %v3404
    %v3502 = vunpack.c.l.b16 %v3405
    %v3503 = vunpack.c.h.b16 %v3405
    %v3504 = vunpack.c.l.b16 %v3406
    %v3505 = vunpack.c.h.b16 %v3406
    %v3506 = vunpack.c.l.b16 %v3407
    %v3507 = vunpack.c.h.b16 %v3407
    %v3508 = vpack.c.b16 %v3448, %v3444
    %v3509 = vpack.c.b16 %v3449, %v3445
    %v3510 = vpack.c.b16 %v3450, %v3446
    %v3511 = vpack.c.b16 %v3451, %v3447
    %v3512 = vpack.c.b16 %v3456, %v3452
    %v3513 = vpack.c.b16 %v3457, %v3453
    %v3514 = vpack.c.b16 %v3458, %v3454
    %v3515 = vpack.c.b16 %v3459, %v3455
    %v3516 = vpack.c.b16 %v3464, %v3460
    %v3517 = vpack.c.b16 %v3465, %v3461
    %v3518 = vpack.c.b16 %v3466, %v3462
    %v3519 = vpack.c.b16 %v3467, %v3463
    %v3520 = vpack.c.b16 %v3472, %v3468
    %v3521 = vpack.c.b16 %v3473, %v3469
    %v3522 = vpack.c.b16 %v3474, %v3470
    %v3523 = vpack.c.b16 %v3475, %v3471
    %v3524 = vpack.c.b16 %v3480, %v3476
    %v3525 = vpack.c.b16 %v3481, %v3477
    %v3526 = vpack.c.b16 %v3482, %v3478
    %v3527 = vpack.c.b16 %v3483, %v3479
    %v3528 = vpack.c.b16 %v3488, %v3484
    %v3529 = vpack.c.b16 %v3489, %v3485
    %v3530 = vpack.c.b16 %v3490, %v3486
    %v3531 = vpack.c.b16 %v3491, %v3487
    %v3532 = vpack.c.b16 %v3496, %v3492
    %v3533 = vpack.c.b16 %v3497, %v3493
    %v3534 = vpack.c.b16 %v3498, %v3494
    %v3535 = vpack.c.b16 %v3499, %v3495
    %v3536 = vpack.c.b16 %v3504, %v3500
    %v3537 = vpack.c.b16 %v3505, %v3501
    %v3538 = vpack.c.b16 %v3506, %v3502
    %v3539 = vpack.c.b16 %v3507, %v3503
    %3572 = vmatprep.subr.bf16.mxu0 %v3537
    %3573 = vmatpush1.bf16.msra.mxu0 %v3536
    %3574 = vmatprep.subr.bf16.mxu0 %v3533
    %3575 = vmatpush1.bf16.msra.mxu0 %v3532
    %3576 = vmatprep.subr.bf16.mxu0 %v3529
    %3577 = vmatpush1.bf16.msra.mxu0 %v3528
    %3578 = vmatprep.subr.bf16.mxu0 %v3525
    %3579 = vmatpush1.bf16.msra.mxu0 %v3524
    %3580 = vmatprep.subr.bf16.mxu0 %v3521
    %3581 = vmatpush1.bf16.msra.mxu0 %v3520
    %3582 = vmatprep.subr.bf16.mxu0 %v3517
    %3583 = vmatpush1.bf16.msra.mxu0 %v3516
    %3584 = vmatprep.subr.bf16.mxu0 %v3513
    %3585 = vmatpush1.bf16.msra.mxu0 %v3512
    %3586 = vmatprep.subr.bf16.mxu0 %v3509
    %3587 = vmatpush1.bf16.msra.mxu0 %v3508
    %3588 = vmatprep.subr.bf16.mxu0 0
    %3589 = vmatpush2.bf16.msra.mxu0 0
    %3590 = vmatprep.subr.bf16.mxu0 0
    %3591 = vmatpush2.bf16.msra.mxu0 0
    %3592 = vmatprep.subr.bf16.mxu0 0
    %3593 = vmatpush2.bf16.msra.mxu0 0
    %3594 = vmatprep.subr.bf16.mxu0 0
    %3595 = vmatpush2.bf16.msra.mxu0 0
    %3596 = vmatprep.subr.bf16.mxu0 0
    %3597 = vmatpush2.bf16.msra.mxu0 0
    %3598 = vmatprep.subr.bf16.mxu0 0
    %3599 = vmatpush2.bf16.msra.mxu0 0
    %3600 = vmatprep.subr.bf16.mxu0 0
    %3601 = vmatpush2.bf16.msra.mxu0 0
    %3602 = vmatprep.subr.bf16.mxu0 0
    %3603 = vmatpush2.bf16.msra.mxu0 0
    %3604 = vmatprep.mubr.bf16.mxu0 0
    %3605 = vmatmul.mubr.bf16.gmra.mxu0 0
    %v3606 = vpop.f32.mrf.mxu0
    %v3607 = vadd.f32 0.0, %v3606
    %v3608 = vpop.f32.mrf.mxu0
    %v3609 = vadd.f32 0.0, %v3608
    %v3610 = vpop.f32.mrf.mxu0
    %v3611 = vpop.f32.mrf.mxu0
    %3612 = vdwg.mxu0
    %3613 = vmatprep.subr.bf16.mxu0 %v3539
    %3614 = vmatpush1.bf16.msra.mxu0 %v3538
    %3615 = vmatprep.subr.bf16.mxu0 %v3535
    %3616 = vmatpush1.bf16.msra.mxu0 %v3534
    %3617 = vmatprep.subr.bf16.mxu0 %v3531
    %3618 = vmatpush1.bf16.msra.mxu0 %v3530
    %3619 = vmatprep.subr.bf16.mxu0 %v3527
    %3620 = vmatpush1.bf16.msra.mxu0 %v3526
    %3621 = vmatprep.subr.bf16.mxu0 %v3523
    %3622 = vmatpush1.bf16.msra.mxu0 %v3522
    %3623 = vmatprep.subr.bf16.mxu0 %v3519
    %3624 = vmatpush1.bf16.msra.mxu0 %v3518
    %3625 = vmatprep.subr.bf16.mxu0 %v3515
    %3626 = vmatpush1.bf16.msra.mxu0 %v3514
    %3627 = vmatprep.subr.bf16.mxu0 %v3511
    %3628 = vmatpush1.bf16.msra.mxu0 %v3510
    %3629 = vmatprep.subr.bf16.mxu0 0
    %3630 = vmatpush2.bf16.msra.mxu0 0
    %3631 = vmatprep.subr.bf16.mxu0 0
    %3632 = vmatpush2.bf16.msra.mxu0 0
    %3633 = vmatprep.subr.bf16.mxu0 0
    %3634 = vmatpush2.bf16.msra.mxu0 0
    %3635 = vmatprep.subr.bf16.mxu0 0
    %3636 = vmatpush2.bf16.msra.mxu0 0
    %3637 = vmatprep.subr.bf16.mxu0 0
    %3638 = vmatpush2.bf16.msra.mxu0 0
    %3639 = vmatprep.subr.bf16.mxu0 0
    %3640 = vmatpush2.bf16.msra.mxu0 0
    %3641 = vmatprep.subr.bf16.mxu0 0
    %3642 = vmatpush2.bf16.msra.mxu0 0
    %3643 = vmatprep.subr.bf16.mxu0 0
    %3644 = vmatpush2.bf16.msra.mxu0 0
    %3645 = vmatprep.mubr.bf16.mxu0 0
    %3646 = vmatmul.mubr.bf16.gmra.mxu0 0
    %v3647 = vpop.f32.mrf.mxu0
    %v3648 = vadd.f32 0.0, %v3647
    %v3649 = vpop.f32.mrf.mxu0
    %v3650 = vadd.f32 0.0, %v3649
    %v3651 = vpop.f32.mrf.mxu0
    %v3652 = vpop.f32.mrf.mxu0
    %3653 = vdwg.mxu0
    %v3654 = vadd.f32 %v3408, %v3607
    %v3655 = vadd.f32 %v3409, %v3609
    %v3656 = vadd.f32 %v3410, %v3648
    %v3657 = vadd.f32 %v3411, %v3650
    %v3658 = vmul.f32 %v3654, 0.5
    %v3659 = vtanh.pop %v3658
    %v3660 = vmul.f32 %v3659, 0.5
    %v3661 = vadd.f32 %v3660, 0.5
    %v3662 = vmul.f32 %v3655, 0.5
    %v3663 = vtanh.pop %v3662
    %v3664 = vmul.f32 %v3663, 0.5
    %v3665 = vadd.f32 %v3664, 0.5
    %v3666 = vtanh.pop %v3656
    %v3667 = vmul.f32 %v3657, 0.5
    %v3668 = vtanh.pop %v3667
    %v3669 = vmul.f32 %v3668, 0.5
    %v3670 = vadd.f32 %v3669, 0.5
    %v3671 = vmul.f32 %v3665, 0.0
    %v3672 = vmul.f32 %v3661, %v3666
    %v3673 = vadd.f32 %v3671, %v3672
    %v3674 = vtanh.pop %v3673
    %v3675 = vmul.f32 %v3670, %v3674
    %v3676 = vld [vmem:[%s701] sm:$0xff]
    %v3677 = vld [vmem:[%s701 + $0x8] sm:$0xff]
    %v3678 = vld [vmem:[%s701 + $0x10] sm:$0xff]
    %v3679 = vld [vmem:[%s701 + $0x18] sm:$0xff]
    %v3680 = vpack.c.bf16 %v3675, %v3675
    %3681 = vmatprep.subr.bf16.mxu0 %v3537
    %3682 = vmatpush1.bf16.msra.mxu0 %v3536
    %3683 = vmatprep.subr.bf16.mxu0 %v3533
    %3684 = vmatpush1.bf16.msra.mxu0 %v3532
    %3685 = vmatprep.subr.bf16.mxu0 %v3529
    %3686 = vmatpush1.bf16.msra.mxu0 %v3528
    %3687 = vmatprep.subr.bf16.mxu0 %v3525
    %3688 = vmatpush1.bf16.msra.mxu0 %v3524
    %3689 = vmatprep.subr.bf16.mxu0 %v3521
    %3690 = vmatpush1.bf16.msra.mxu0 %v3520
    %3691 = vmatprep.subr.bf16.mxu0 %v3517
    %3692 = vmatpush1.bf16.msra.mxu0 %v3516
    %3693 = vmatprep.subr.bf16.mxu0 %v3513
    %3694 = vmatpush1.bf16.msra.mxu0 %v3512
    %3695 = vmatprep.subr.bf16.mxu0 %v3509
    %3696 = vmatpush1.bf16.msra.mxu0 %v3508
    %3697 = vmatprep.subr.bf16.mxu0 0
    %3698 = vmatpush2.bf16.msra.mxu0 0
    %3699 = vmatprep.subr.bf16.mxu0 0
    %3700 = vmatpush2.bf16.msra.mxu0 0
    %3701 = vmatprep.subr.bf16.mxu0 0
    %3702 = vmatpush2.bf16.msra.mxu0 0
    %3703 = vmatprep.subr.bf16.mxu0 0
    %3704 = vmatpush2.bf16.msra.mxu0 0
    %3705 = vmatprep.subr.bf16.mxu0 0
    %3706 = vmatpush2.bf16.msra.mxu0 0
    %3707 = vmatprep.subr.bf16.mxu0 0
    %3708 = vmatpush2.bf16.msra.mxu0 0
    %3709 = vmatprep.subr.bf16.mxu0 0
    %3710 = vmatpush2.bf16.msra.mxu0 0
    %3711 = vmatprep.subr.bf16.mxu0 0
    %3712 = vmatpush2.bf16.msra.mxu0 0
    %3713 = vmatprep.mubr.bf16.mxu0 0
    %3714 = vmatmul.mubr.bf16.gmra.mxu0 %v3680
    %v3715 = vpop.f32.mrf.mxu0
    %v3716 = vadd.f32 0.0, %v3715
    %v3717 = vpop.f32.mrf.mxu0
    %v3718 = vadd.f32 0.0, %v3717
    %v3719 = vpop.f32.mrf.mxu0
    %v3720 = vpop.f32.mrf.mxu0
    %3721 = vdwg.mxu0
    %3722 = vmatprep.subr.bf16.mxu0 %v3539
    %3723 = vmatpush1.bf16.msra.mxu0 %v3538
    %3724 = vmatprep.subr.bf16.mxu0 %v3535
    %3725 = vmatpush1.bf16.msra.mxu0 %v3534
    %3726 = vmatprep.subr.bf16.mxu0 %v3531
    %3727 = vmatpush1.bf16.msra.mxu0 %v3530
    %3728 = vmatprep.subr.bf16.mxu0 %v3527
    %3729 = vmatpush1.bf16.msra.mxu0 %v3526
    %3730 = vmatprep.subr.bf16.mxu0 %v3523
    %3731 = vmatpush1.bf16.msra.mxu0 %v3522
    %3732 = vmatprep.subr.bf16.mxu0 %v3519
    %3733 = vmatpush1.bf16.msra.mxu0 %v3518
    %3734 = vmatprep.subr.bf16.mxu0 %v3515
    %3735 = vmatpush1.bf16.msra.mxu0 %v3514
    %3736 = vmatprep.subr.bf16.mxu0 %v3511
    %3737 = vmatpush1.bf16.msra.mxu0 %v3510
    %3738 = vmatprep.subr.bf16.mxu0 0
    %3739 = vmatpush2.bf16.msra.mxu0 0
    %3740 = vmatprep.subr.bf16.mxu0 0
    %3741 = vmatpush2.bf16.msra.mxu0 0
    %3742 = vmatprep.subr.bf16.mxu0 0
    %3743 = vmatpush2.bf16.msra.mxu0 0
    %3744 = vmatprep.subr.bf16.mxu0 0
    %3745 = vmatpush2.bf16.msra.mxu0 0
    %3746 = vmatprep.subr.bf16.mxu0 0
    %3747 = vmatpush2.bf16.msra.mxu0 0
    %3748 = vmatprep.subr.bf16.mxu0 0
    %3749 = vmatpush2.bf16.msra.mxu0 0
    %3750 = vmatprep.subr.bf16.mxu0 0
    %3751 = vmatpush2.bf16.msra.mxu0 0
    %3752 = vmatprep.subr.bf16.mxu0 0
    %3753 = vmatpush2.bf16.msra.mxu0 0
    %3754 = vmatprep.mubr.bf16.mxu0 0
    %3755 = vmatmul.mubr.bf16.gmra.mxu0 %v3680
    %v3756 = vpop.f32.mrf.mxu0
    %v3757 = vadd.f32 0.0, %v3756
    %v3758 = vpop.f32.mrf.mxu0
    %v3759 = vadd.f32 0.0, %v3758
    %v3760 = vpop.f32.mrf.mxu0
    %v3761 = vpop.f32.mrf.mxu0
    %3762 = vdwg.mxu0
    %v3763 = vadd.f32 %v3676, %v3716
    %v3764 = vadd.f32 %v3677, %v3718
    %v3765 = vadd.f32 %v3678, %v3757
    %v3766 = vadd.f32 %v3679, %v3759
    %v3767 = vmul.f32 %v3763, 0.5
    %v3768 = vtanh.pop %v3767
    %v3769 = vmul.f32 %v3768, 0.5
    %v3770 = vadd.f32 %v3769, 0.5
    %v3771 = vmul.f32 %v3764, 0.5
    %v3772 = vtanh.pop %v3771
    %v3773 = vmul.f32 %v3772, 0.5
    %v3774 = vadd.f32 %v3773, 0.5
    %v3775 = vtanh.pop %v3765
    %v3776 = vmul.f32 %v3766, 0.5
    %v3777 = vtanh.pop %v3776
    %v3778 = vmul.f32 %v3777, 0.5
    %v3779 = vadd.f32 %v3778, 0.5
    %v3780 = vmul.f32 %v3774, %v3673
    %v3781 = vmul.f32 %v3770, %v3775
    %v3782 = vadd.f32 %v3780, %v3781
    %v3783 = vtanh.pop %v3782
    %v3784 = vmul.f32 %v3779, %v3783
    %v3785 = vld [vmem:[%s815] sm:$0xff]
    %v3786 = vld [vmem:[%s815 + $0x8] sm:$0xff]
    %v3787 = vld [vmem:[%s815 + $0x10] sm:$0xff]
    %v3788 = vld [vmem:[%s815 + $0x18] sm:$0xff]
    %v3789 = vpack.c.bf16 %v3784, %v3784
    %3790 = vmatprep.subr.bf16.mxu0 %v3537
    %3791 = vmatpush1.bf16.msra.mxu0 %v3536
    %3792 = vmatprep.subr.bf16.mxu0 %v3533
    %3793 = vmatpush1.bf16.msra.mxu0 %v3532
    %3794 = vmatprep.subr.bf16.mxu0 %v3529
    %3795 = vmatpush1.bf16.msra.mxu0 %v3528
    %3796 = vmatprep.subr.bf16.mxu0 %v3525
    %3797 = vmatpush1.bf16.msra.mxu0 %v3524
    %3798 = vmatprep.subr.bf16.mxu0 %v3521
    %3799 = vmatpush1.bf16.msra.mxu0 %v3520
    %3800 = vmatprep.subr.bf16.mxu0 %v3517
    %3801 = vmatpush1.bf16.msra.mxu0 %v3516
    %3802 = vmatprep.subr.bf16.mxu0 %v3513
    %3803 = vmatpush1.bf16.msra.mxu0 %v3512
    %3804 = vmatprep.subr.bf16.mxu0 %v3509
    %3805 = vmatpush1.bf16.msra.mxu0 %v3508
    %3806 = vmatprep.subr.bf16.mxu0 0
    %3807 = vmatpush2.bf16.msra.mxu0 0
    %3808 = vmatprep.subr.bf16.mxu0 0
    %3809 = vmatpush2.bf16.msra.mxu0 0
    %3810 = vmatprep.subr.bf16.mxu0 0
    %3811 = vmatpush2.bf16.msra.mxu0 0
    %3812 = vmatprep.subr.bf16.mxu0 0
    %3813 = vmatpush2.bf16.msra.mxu0 0
    %3814 = vmatprep.subr.bf16.mxu0 0
    %3815 = vmatpush2.bf16.msra.mxu0 0
    %3816 = vmatprep.subr.bf16.mxu0 0
    %3817 = vmatpush2.bf16.msra.mxu0 0
    %3818 = vmatprep.subr.bf16.mxu0 0
    %3819 = vmatpush2.bf16.msra.mxu0 0
    %3820 = vmatprep.subr.bf16.mxu0 0
    %3821 = vmatpush2.bf16.msra.mxu0 0
    %3822 = vmatprep.mubr.bf16.mxu0 0
    %3823 = vmatmul.mubr.bf16.gmra.mxu0 %v3789
    %v3824 = vpop.f32.mrf.mxu0
    %v3825 = vadd.f32 0.0, %v3824
    %v3826 = vpop.f32.mrf.mxu0
    %v3827 = vadd.f32 0.0, %v3826
    %v3828 = vpop.f32.mrf.mxu0
    %v3829 = vpop.f32.mrf.mxu0
    %3830 = vdwg.mxu0
    %3831 = vmatprep.subr.bf16.mxu0 %v3539
    %3832 = vmatpush1.bf16.msra.mxu0 %v3538
    %3833 = vmatprep.subr.bf16.mxu0 %v3535
    %3834 = vmatpush1.bf16.msra.mxu0 %v3534
    %3835 = vmatprep.subr.bf16.mxu0 %v3531
    %3836 = vmatpush1.bf16.msra.mxu0 %v3530
    %3837 = vmatprep.subr.bf16.mxu0 %v3527
    %3838 = vmatpush1.bf16.msra.mxu0 %v3526
    %3839 = vmatprep.subr.bf16.mxu0 %v3523
    %3840 = vmatpush1.bf16.msra.mxu0 %v3522
    %3841 = vmatprep.subr.bf16.mxu0 %v3519
    %3842 = vmatpush1.bf16.msra.mxu0 %v3518
    %3843 = vmatprep.subr.bf16.mxu0 %v3515
    %3844 = vmatpush1.bf16.msra.mxu0 %v3514
    %3845 = vmatprep.subr.bf16.mxu0 %v3511
    %3846 = vmatpush1.bf16.msra.mxu0 %v3510
    %3847 = vmatprep.subr.bf16.mxu0 0
    %3848 = vmatpush2.bf16.msra.mxu0 0
    %3849 = vmatprep.subr.bf16.mxu0 0
    %3850 = vmatpush2.bf16.msra.mxu0 0
    %3851 = vmatprep.subr.bf16.mxu0 0
    %3852 = vmatpush2.bf16.msra.mxu0 0
    %3853 = vmatprep.subr.bf16.mxu0 0
    %3854 = vmatpush2.bf16.msra.mxu0 0
    %3855 = vmatprep.subr.bf16.mxu0 0
    %3856 = vmatpush2.bf16.msra.mxu0 0
    %3857 = vmatprep.subr.bf16.mxu0 0
    %3858 = vmatpush2.bf16.msra.mxu0 0
    %3859 = vmatprep.subr.bf16.mxu0 0
    %3860 = vmatpush2.bf16.msra.mxu0 0
    %3861 = vmatprep.subr.bf16.mxu0 0
    %3862 = vmatpush2.bf16.msra.mxu0 0
    %3863 = vmatprep.mubr.bf16.mxu0 0
    %3864 = vmatmul.mubr.bf16.gmra.mxu0 %v3789
    %v3865 = vpop.f32.mrf.mxu0
    %v3866 = vadd.f32 0.0, %v3865
    %v3867 = vpop.f32.mrf.mxu0
    %v3868 = vadd.f32 0.0, %v3867
    %v3869 = vpop.f32.mrf.mxu0
    %v3870 = vpop.f32.mrf.mxu0
    %3871 = vdwg.mxu0
    %v3872 = vadd.f32 %v3785, %v3825
    %v3873 = vadd.f32 %v3786, %v3827
    %v3874 = vadd.f32 %v3787, %v3866
    %v3875 = vadd.f32 %v3788, %v3868
    %v3876 = vmul.f32 %v3872, 0.5
    %v3877 = vtanh.pop %v3876
    %v3878 = vmul.f32 %v3877, 0.5
    %v3879 = vadd.f32 %v3878, 0.5
    %v3880 = vmul.f32 %v3873, 0.5
    %v3881 = vtanh.pop %v3880
    %v3882 = vmul.f32 %v3881, 0.5
    %v3883 = vadd.f32 %v3882, 0.5
    %v3884 = vtanh.pop %v3874
    %v3885 = vmul.f32 %v3875, 0.5
    %v3886 = vtanh.pop %v3885
    %v3887 = vmul.f32 %v3886, 0.5
    %v3888 = vadd.f32 %v3887, 0.5
    %v3889 = vmul.f32 %v3883, %v3782
    %v3890 = vmul.f32 %v3879, %v3884
    %v3891 = vadd.f32 %v3889, %v3890
    %v3892 = vtanh.pop %v3891
    %v3893 = vmul.f32 %v3888, %v3892
    %v3894 = vld [vmem:[%s929] sm:$0xff]
    %v3895 = vld [vmem:[%s929 + $0x8] sm:$0xff]
    %v3896 = vld [vmem:[%s929 + $0x10] sm:$0xff]
    %v3897 = vld [vmem:[%s929 + $0x18] sm:$0xff]
    %v3898 = vpack.c.bf16 %v3893, %v3893
    %3899 = vmatprep.subr.bf16.mxu0 %v3537
    %3900 = vmatpush1.bf16.msra.mxu0 %v3536
    %3901 = vmatprep.subr.bf16.mxu0 %v3533
    %3902 = vmatpush1.bf16.msra.mxu0 %v3532
    %3903 = vmatprep.subr.bf16.mxu0 %v3529
    %3904 = vmatpush1.bf16.msra.mxu0 %v3528
    %3905 = vmatprep.subr.bf16.mxu0 %v3525
    %3906 = vmatpush1.bf16.msra.mxu0 %v3524
    %3907 = vmatprep.subr.bf16.mxu0 %v3521
    %3908 = vmatpush1.bf16.msra.mxu0 %v3520
    %3909 = vmatprep.subr.bf16.mxu0 %v3517
    %3910 = vmatpush1.bf16.msra.mxu0 %v3516
    %3911 = vmatprep.subr.bf16.mxu0 %v3513
    %3912 = vmatpush1.bf16.msra.mxu0 %v3512
    %3913 = vmatprep.subr.bf16.mxu0 %v3509
    %3914 = vmatpush1.bf16.msra.mxu0 %v3508
    %3915 = vmatprep.subr.bf16.mxu0 0
    %3916 = vmatpush2.bf16.msra.mxu0 0
    %3917 = vmatprep.subr.bf16.mxu0 0
    %3918 = vmatpush2.bf16.msra.mxu0 0
    %3919 = vmatprep.subr.bf16.mxu0 0
    %3920 = vmatpush2.bf16.msra.mxu0 0
    %3921 = vmatprep.subr.bf16.mxu0 0
    %3922 = vmatpush2.bf16.msra.mxu0 0
    %3923 = vmatprep.subr.bf16.mxu0 0
    %3924 = vmatpush2.bf16.msra.mxu0 0
    %3925 = vmatprep.subr.bf16.mxu0 0
    %3926 = vmatpush2.bf16.msra.mxu0 0
    %3927 = vmatprep.subr.bf16.mxu0 0
    %3928 = vmatpush2.bf16.msra.mxu0 0
    %3929 = vmatprep.subr.bf16.mxu0 0
    %3930 = vmatpush2.bf16.msra.mxu0 0
    %3931 = vmatprep.mubr.bf16.mxu0 0
    %3932 = vmatmul.mubr.bf16.gmra.mxu0 %v3898
    %v3933 = vpop.f32.mrf.mxu0
    %v3934 = vadd.f32 0.0, %v3933
    %v3935 = vpop.f32.mrf.mxu0
    %v3936 = vadd.f32 0.0, %v3935
    %v3937 = vpop.f32.mrf.mxu0
    %v3938 = vpop.f32.mrf.mxu0
    %3939 = vdwg.mxu0
    %3940 = vmatprep.subr.bf16.mxu0 %v3539
    %3941 = vmatpush1.bf16.msra.mxu0 %v3538
    %3942 = vmatprep.subr.bf16.mxu0 %v3535
    %3943 = vmatpush1.bf16.msra.mxu0 %v3534
    %3944 = vmatprep.subr.bf16.mxu0 %v3531
    %3945 = vmatpush1.bf16.msra.mxu0 %v3530
    %3946 = vmatprep.subr.bf16.mxu0 %v3527
    %3947 = vmatpush1.bf16.msra.mxu0 %v3526
    %3948 = vmatprep.subr.bf16.mxu0 %v3523
    %3949 = vmatpush1.bf16.msra.mxu0 %v3522
    %3950 = vmatprep.subr.bf16.mxu0 %v3519
    %3951 = vmatpush1.bf16.msra.mxu0 %v3518
    %3952 = vmatprep.subr.bf16.mxu0 %v3515
    %3953 = vmatpush1.bf16.msra.mxu0 %v3514
    %3954 = vmatprep.subr.bf16.mxu0 %v3511
    %3955 = vmatpush1.bf16.msra.mxu0 %v3510
    %3956 = vmatprep.subr.bf16.mxu0 0
    %3957 = vmatpush2.bf16.msra.mxu0 0
    %3958 = vmatprep.subr.bf16.mxu0 0
    %3959 = vmatpush2.bf16.msra.mxu0 0
    %3960 = vmatprep.subr.bf16.mxu0 0
    %3961 = vmatpush2.bf16.msra.mxu0 0
    %3962 = vmatprep.subr.bf16.mxu0 0
    %3963 = vmatpush2.bf16.msra.mxu0 0
    %3964 = vmatprep.subr.bf16.mxu0 0
    %3965 = vmatpush2.bf16.msra.mxu0 0
    %3966 = vmatprep.subr.bf16.mxu0 0
    %3967 = vmatpush2.bf16.msra.mxu0 0
    %3968 = vmatprep.subr.bf16.mxu0 0
    %3969 = vmatpush2.bf16.msra.mxu0 0
    %3970 = vmatprep.subr.bf16.mxu0 0
    %3971 = vmatpush2.bf16.msra.mxu0 0
    %3972 = vmatprep.mubr.bf16.mxu0 0
    %3973 = vmatmul.mubr.bf16.gmra.mxu0 %v3898
    %v3974 = vpop.f32.mrf.mxu0
    %v3975 = vadd.f32 0.0, %v3974
    %v3976 = vpop.f32.mrf.mxu0
    %v3977 = vadd.f32 0.0, %v3976
    %v3978 = vpop.f32.mrf.mxu0
    %v3979 = vpop.f32.mrf.mxu0
    %3980 = vdwg.mxu0
    %v3981 = vadd.f32 %v3894, %v3934
    %v3982 = vadd.f32 %v3895, %v3936
    %v3983 = vadd.f32 %v3896, %v3975
    %v3984 = vadd.f32 %v3897, %v3977
    %v3985 = vmul.f32 %v3981, 0.5
    %v3986 = vtanh.pop %v3985
    %v3987 = vmul.f32 %v3986, 0.5
    %v3988 = vadd.f32 %v3987, 0.5
    %v3989 = vmul.f32 %v3982, 0.5
    %v3990 = vtanh.pop %v3989
    %v3991 = vmul.f32 %v3990, 0.5
    %v3992 = vadd.f32 %v3991, 0.5
    %v3993 = vtanh.pop %v3983
    %v3994 = vmul.f32 %v3984, 0.5
    %v3995 = vtanh.pop %v3994
    %v3996 = vmul.f32 %v3995, 0.5
    %v3997 = vadd.f32 %v3996, 0.5
    %v3998 = vmul.f32 %v3992, %v3891
    %v3999 = vmul.f32 %v3988, %v3993
    %v4000 = vadd.f32 %v3998, %v3999
    %v4001 = vtanh.pop %v4000
    %v4002 = vmul.f32 %v3997, %v4001
    %v4003 = vld [vmem:[%s1043] sm:$0xff]
    %v4004 = vld [vmem:[%s1043 + $0x8] sm:$0xff]
    %v4005 = vld [vmem:[%s1043 + $0x10] sm:$0xff]
    %v4006 = vld [vmem:[%s1043 + $0x18] sm:$0xff]
    %v4007 = vpack.c.bf16 %v4002, %v4002
    %4008 = vmatprep.subr.bf16.mxu0 %v3537
    %4009 = vmatpush1.bf16.msra.mxu0 %v3536
    %4010 = vmatprep.subr.bf16.mxu0 %v3533
    %4011 = vmatpush1.bf16.msra.mxu0 %v3532
    %4012 = vmatprep.subr.bf16.mxu0 %v3529
    %4013 = vmatpush1.bf16.msra.mxu0 %v3528
    %4014 = vmatprep.subr.bf16.mxu0 %v3525
    %4015 = vmatpush1.bf16.msra.mxu0 %v3524
    %4016 = vmatprep.subr.bf16.mxu0 %v3521
    %4017 = vmatpush1.bf16.msra.mxu0 %v3520
    %4018 = vmatprep.subr.bf16.mxu0 %v3517
    %4019 = vmatpush1.bf16.msra.mxu0 %v3516
    %4020 = vmatprep.subr.bf16.mxu0 %v3513
    %4021 = vmatpush1.bf16.msra.mxu0 %v3512
    %4022 = vmatprep.subr.bf16.mxu0 %v3509
    %4023 = vmatpush1.bf16.msra.mxu0 %v3508
    %4024 = vmatprep.subr.bf16.mxu0 0
    %4025 = vmatpush2.bf16.msra.mxu0 0
    %4026 = vmatprep.subr.bf16.mxu0 0
    %4027 = vmatpush2.bf16.msra.mxu0 0
    %4028 = vmatprep.subr.bf16.mxu0 0
    %4029 = vmatpush2.bf16.msra.mxu0 0
    %4030 = vmatprep.subr.bf16.mxu0 0
    %4031 = vmatpush2.bf16.msra.mxu0 0
    %4032 = vmatprep.subr.bf16.mxu0 0
    %4033 = vmatpush2.bf16.msra.mxu0 0
    %4034 = vmatprep.subr.bf16.mxu0 0
    %4035 = vmatpush2.bf16.msra.mxu0 0
    %4036 = vmatprep.subr.bf16.mxu0 0
    %4037 = vmatpush2.bf16.msra.mxu0 0
    %4038 = vmatprep.subr.bf16.mxu0 0
    %4039 = vmatpush2.bf16.msra.mxu0 0
    %4040 = vmatprep.mubr.bf16.mxu0 0
    %4041 = vmatmul.mubr.bf16.gmra.mxu0 %v4007
    %v4042 = vpop.f32.mrf.mxu0
    %v4043 = vadd.f32 0.0, %v4042
    %v4044 = vpop.f32.mrf.mxu0
    %v4045 = vadd.f32 0.0, %v4044
    %v4046 = vpop.f32.mrf.mxu0
    %v4047 = vpop.f32.mrf.mxu0
    %4048 = vdwg.mxu0
    %4049 = vmatprep.subr.bf16.mxu0 %v3539
    %4050 = vmatpush1.bf16.msra.mxu0 %v3538
    %4051 = vmatprep.subr.bf16.mxu0 %v3535
    %4052 = vmatpush1.bf16.msra.mxu0 %v3534
    %4053 = vmatprep.subr.bf16.mxu0 %v3531
    %4054 = vmatpush1.bf16.msra.mxu0 %v3530
    %4055 = vmatprep.subr.bf16.mxu0 %v3527
    %4056 = vmatpush1.bf16.msra.mxu0 %v3526
    %4057 = vmatprep.subr.bf16.mxu0 %v3523
    %4058 = vmatpush1.bf16.msra.mxu0 %v3522
    %4059 = vmatprep.subr.bf16.mxu0 %v3519
    %4060 = vmatpush1.bf16.msra.mxu0 %v3518
    %4061 = vmatprep.subr.bf16.mxu0 %v3515
    %4062 = vmatpush1.bf16.msra.mxu0 %v3514
    %4063 = vmatprep.subr.bf16.mxu0 %v3511
    %4064 = vmatpush1.bf16.msra.mxu0 %v3510
    %4065 = vmatprep.subr.bf16.mxu0 0
    %4066 = vmatpush2.bf16.msra.mxu0 0
    %4067 = vmatprep.subr.bf16.mxu0 0
    %4068 = vmatpush2.bf16.msra.mxu0 0
    %4069 = vmatprep.subr.bf16.mxu0 0
    %4070 = vmatpush2.bf16.msra.mxu0 0
    %4071 = vmatprep.subr.bf16.mxu0 0
    %4072 = vmatpush2.bf16.msra.mxu0 0
    %4073 = vmatprep.subr.bf16.mxu0 0
    %4074 = vmatpush2.bf16.msra.mxu0 0
    %4075 = vmatprep.subr.bf16.mxu0 0
    %4076 = vmatpush2.bf16.msra.mxu0 0
    %4077 = vmatprep.subr.bf16.mxu0 0
    %4078 = vmatpush2.bf16.msra.mxu0 0
    %4079 = vmatprep.subr.bf16.mxu0 0
    %4080 = vmatpush2.bf16.msra.mxu0 0
    %4081 = vmatprep.mubr.bf16.mxu0 0
    %4082 = vmatmul.mubr.bf16.gmra.mxu0 %v4007
    %v4083 = vpop.f32.mrf.mxu0
    %v4084 = vadd.f32 0.0, %v4083
    %v4085 = vpop.f32.mrf.mxu0
    %v4086 = vadd.f32 0.0, %v4085
    %v4087 = vpop.f32.mrf.mxu0
    %v4088 = vpop.f32.mrf.mxu0
    %4089 = vdwg.mxu0
    %v4090 = vadd.f32 %v4003, %v4043
    %v4091 = vadd.f32 %v4004, %v4045
    %v4092 = vadd.f32 %v4005, %v4084
    %v4093 = vadd.f32 %v4006, %v4086
    %v4094 = vmul.f32 %v4090, 0.5
    %v4095 = vtanh.pop %v4094
    %v4096 = vmul.f32 %v4095, 0.5
    %v4097 = vadd.f32 %v4096, 0.5
    %v4098 = vmul.f32 %v4091, 0.5
    %v4099 = vtanh.pop %v4098
    %v4100 = vmul.f32 %v4099, 0.5
    %v4101 = vadd.f32 %v4100, 0.5
    %v4102 = vtanh.pop %v4092
    %v4103 = vmul.f32 %v4093, 0.5
    %v4104 = vtanh.pop %v4103
    %v4105 = vmul.f32 %v4104, 0.5
    %v4106 = vadd.f32 %v4105, 0.5
    %v4107 = vmul.f32 %v4101, %v4000
    %v4108 = vmul.f32 %v4097, %v4102
    %v4109 = vadd.f32 %v4107, %v4108
    %v4110 = vtanh.pop %v4109
    %v4111 = vmul.f32 %v4106, %v4110
    %v4112 = vld [vmem:[%s1157] sm:$0xff]
    %v4113 = vld [vmem:[%s1157 + $0x8] sm:$0xff]
    %v4114 = vld [vmem:[%s1157 + $0x10] sm:$0xff]
    %v4115 = vld [vmem:[%s1157 + $0x18] sm:$0xff]
    %v4116 = vpack.c.bf16 %v4111, %v4111
    %4117 = vmatprep.subr.bf16.mxu0 %v3537
    %4118 = vmatpush1.bf16.msra.mxu0 %v3536
    %4119 = vmatprep.subr.bf16.mxu0 %v3533
    %4120 = vmatpush1.bf16.msra.mxu0 %v3532
    %4121 = vmatprep.subr.bf16.mxu0 %v3529
    %4122 = vmatpush1.bf16.msra.mxu0 %v3528
    %4123 = vmatprep.subr.bf16.mxu0 %v3525
    %4124 = vmatpush1.bf16.msra.mxu0 %v3524
    %4125 = vmatprep.subr.bf16.mxu0 %v3521
    %4126 = vmatpush1.bf16.msra.mxu0 %v3520
    %4127 = vmatprep.subr.bf16.mxu0 %v3517
    %4128 = vmatpush1.bf16.msra.mxu0 %v3516
    %4129 = vmatprep.subr.bf16.mxu0 %v3513
    %4130 = vmatpush1.bf16.msra.mxu0 %v3512
    %4131 = vmatprep.subr.bf16.mxu0 %v3509
    %4132 = vmatpush1.bf16.msra.mxu0 %v3508
    %4133 = vmatprep.subr.bf16.mxu0 0
    %4134 = vmatpush2.bf16.msra.mxu0 0
    %4135 = vmatprep.subr.bf16.mxu0 0
    %4136 = vmatpush2.bf16.msra.mxu0 0
    %4137 = vmatprep.subr.bf16.mxu0 0
    %4138 = vmatpush2.bf16.msra.mxu0 0
    %4139 = vmatprep.subr.bf16.mxu0 0
    %4140 = vmatpush2.bf16.msra.mxu0 0
    %4141 = vmatprep.subr.bf16.mxu0 0
    %4142 = vmatpush2.bf16.msra.mxu0 0
    %4143 = vmatprep.subr.bf16.mxu0 0
    %4144 = vmatpush2.bf16.msra.mxu0 0
    %4145 = vmatprep.subr.bf16.mxu0 0
    %4146 = vmatpush2.bf16.msra.mxu0 0
    %4147 = vmatprep.subr.bf16.mxu0 0
    %4148 = vmatpush2.bf16.msra.mxu0 0
    %4149 = vmatprep.mubr.bf16.mxu0 0
    %4150 = vmatmul.mubr.bf16.gmra.mxu0 %v4116
    %v4151 = vpop.f32.mrf.mxu0
    %v4152 = vadd.f32 0.0, %v4151
    %v4153 = vpop.f32.mrf.mxu0
    %v4154 = vadd.f32 0.0, %v4153
    %v4155 = vpop.f32.mrf.mxu0
    %v4156 = vpop.f32.mrf.mxu0
    %4157 = vdwg.mxu0
    %4158 = vmatprep.subr.bf16.mxu0 %v3539
    %4159 = vmatpush1.bf16.msra.mxu0 %v3538
    %4160 = vmatprep.subr.bf16.mxu0 %v3535
    %4161 = vmatpush1.bf16.msra.mxu0 %v3534
    %4162 = vmatprep.subr.bf16.mxu0 %v3531
    %4163 = vmatpush1.bf16.msra.mxu0 %v3530
    %4164 = vmatprep.subr.bf16.mxu0 %v3527
    %4165 = vmatpush1.bf16.msra.mxu0 %v3526
    %4166 = vmatprep.subr.bf16.mxu0 %v3523
    %4167 = vmatpush1.bf16.msra.mxu0 %v3522
    %4168 = vmatprep.subr.bf16.mxu0 %v3519
    %4169 = vmatpush1.bf16.msra.mxu0 %v3518
    %4170 = vmatprep.subr.bf16.mxu0 %v3515
    %4171 = vmatpush1.bf16.msra.mxu0 %v3514
    %4172 = vmatprep.subr.bf16.mxu0 %v3511
    %4173 = vmatpush1.bf16.msra.mxu0 %v3510
    %4174 = vmatprep.subr.bf16.mxu0 0
    %4175 = vmatpush2.bf16.msra.mxu0 0
    %4176 = vmatprep.subr.bf16.mxu0 0
    %4177 = vmatpush2.bf16.msra.mxu0 0
    %4178 = vmatprep.subr.bf16.mxu0 0
    %4179 = vmatpush2.bf16.msra.mxu0 0
    %4180 = vmatprep.subr.bf16.mxu0 0
    %4181 = vmatpush2.bf16.msra.mxu0 0
    %4182 = vmatprep.subr.bf16.mxu0 0
    %4183 = vmatpush2.bf16.msra.mxu0 0
    %4184 = vmatprep.subr.bf16.mxu0 0
    %4185 = vmatpush2.bf16.msra.mxu0 0
    %4186 = vmatprep.subr.bf16.mxu0 0
    %4187 = vmatpush2.bf16.msra.mxu0 0
    %4188 = vmatprep.subr.bf16.mxu0 0
    %4189 = vmatpush2.bf16.msra.mxu0 0
    %4190 = vmatprep.mubr.bf16.mxu0 0
    %4191 = vmatmul.mubr.bf16.gmra.mxu0 %v4116
    %v4192 = vpop.f32.mrf.mxu0
    %v4193 = vadd.f32 0.0, %v4192
    %v4194 = vpop.f32.mrf.mxu0
    %v4195 = vadd.f32 0.0, %v4194
    %v4196 = vpop.f32.mrf.mxu0
    %v4197 = vpop.f32.mrf.mxu0
    %4198 = vdwg.mxu0
    %v4199 = vadd.f32 %v4112, %v4152
    %v4200 = vadd.f32 %v4113, %v4154
    %v4201 = vadd.f32 %v4114, %v4193
    %v4202 = vadd.f32 %v4115, %v4195
    %v4203 = vmul.f32 %v4199, 0.5
    %v4204 = vtanh.pop %v4203
    %v4205 = vmul.f32 %v4204, 0.5
    %v4206 = vadd.f32 %v4205, 0.5
    %v4207 = vmul.f32 %v4200, 0.5
    %v4208 = vtanh.pop %v4207
    %v4209 = vmul.f32 %v4208, 0.5
    %v4210 = vadd.f32 %v4209, 0.5
    %v4211 = vtanh.pop %v4201
    %v4212 = vmul.f32 %v4202, 0.5
    %v4213 = vtanh.pop %v4212
    %v4214 = vmul.f32 %v4213, 0.5
    %v4215 = vadd.f32 %v4214, 0.5
    %v4216 = vmul.f32 %v4210, %v4109
    %v4217 = vmul.f32 %v4206, %v4211
    %v4218 = vadd.f32 %v4216, %v4217
    %v4219 = vtanh.pop %v4218
    %v4220 = vmul.f32 %v4215, %v4219
    %v4221 = vld [vmem:[%s1271] sm:$0xff]
    %v4222 = vld [vmem:[%s1271 + $0x8] sm:$0xff]
    %v4223 = vld [vmem:[%s1271 + $0x10] sm:$0xff]
    %v4224 = vld [vmem:[%s1271 + $0x18] sm:$0xff]
    %v4225 = vpack.c.bf16 %v4220, %v4220
    %4226 = vmatprep.subr.bf16.mxu0 %v3537
    %4227 = vmatpush1.bf16.msra.mxu0 %v3536
    %4228 = vmatprep.subr.bf16.mxu0 %v3533
    %4229 = vmatpush1.bf16.msra.mxu0 %v3532
    %4230 = vmatprep.subr.bf16.mxu0 %v3529
    %4231 = vmatpush1.bf16.msra.mxu0 %v3528
    %4232 = vmatprep.subr.bf16.mxu0 %v3525
    %4233 = vmatpush1.bf16.msra.mxu0 %v3524
    %4234 = vmatprep.subr.bf16.mxu0 %v3521
    %4235 = vmatpush1.bf16.msra.mxu0 %v3520
    %4236 = vmatprep.subr.bf16.mxu0 %v3517
    %4237 = vmatpush1.bf16.msra.mxu0 %v3516
    %4238 = vmatprep.subr.bf16.mxu0 %v3513
    %4239 = vmatpush1.bf16.msra.mxu0 %v3512
    %4240 = vmatprep.subr.bf16.mxu0 %v3509
    %4241 = vmatpush1.bf16.msra.mxu0 %v3508
    %4242 = vmatprep.subr.bf16.mxu0 0
    %4243 = vmatpush2.bf16.msra.mxu0 0
    %4244 = vmatprep.subr.bf16.mxu0 0
    %4245 = vmatpush2.bf16.msra.mxu0 0
    %4246 = vmatprep.subr.bf16.mxu0 0
    %4247 = vmatpush2.bf16.msra.mxu0 0
    %4248 = vmatprep.subr.bf16.mxu0 0
    %4249 = vmatpush2.bf16.msra.mxu0 0
    %4250 = vmatprep.subr.bf16.mxu0 0
    %4251 = vmatpush2.bf16.msra.mxu0 0
    %4252 = vmatprep.subr.bf16.mxu0 0
    %4253 = vmatpush2.bf16.msra.mxu0 0
    %4254 = vmatprep.subr.bf16.mxu0 0
    %4255 = vmatpush2.bf16.msra.mxu0 0
    %4256 = vmatprep.subr.bf16.mxu0 0
    %4257 = vmatpush2.bf16.msra.mxu0 0
    %4258 = vmatprep.mubr.bf16.mxu0 0
    %4259 = vmatmul.mubr.bf16.gmra.mxu0 %v4225
    %v4260 = vpop.f32.mrf.mxu0
    %v4261 = vadd.f32 0.0, %v4260
    %v4262 = vpop.f32.mrf.mxu0
    %v4263 = vadd.f32 0.0, %v4262
    %v4264 = vpop.f32.mrf.mxu0
    %v4265 = vpop.f32.mrf.mxu0
    %4266 = vdwg.mxu0
    %4267 = vmatprep.subr.bf16.mxu0 %v3539
    %4268 = vmatpush1.bf16.msra.mxu0 %v3538
    %4269 = vmatprep.subr.bf16.mxu0 %v3535
    %4270 = vmatpush1.bf16.msra.mxu0 %v3534
    %4271 = vmatprep.subr.bf16.mxu0 %v3531
    %4272 = vmatpush1.bf16.msra.mxu0 %v3530
    %4273 = vmatprep.subr.bf16.mxu0 %v3527
    %4274 = vmatpush1.bf16.msra.mxu0 %v3526
    %4275 = vmatprep.subr.bf16.mxu0 %v3523
    %4276 = vmatpush1.bf16.msra.mxu0 %v3522
    %4277 = vmatprep.subr.bf16.mxu0 %v3519
    %4278 = vmatpush1.bf16.msra.mxu0 %v3518
    %4279 = vmatprep.subr.bf16.mxu0 %v3515
    %4280 = vmatpush1.bf16.msra.mxu0 %v3514
    %4281 = vmatprep.subr.bf16.mxu0 %v3511
    %4282 = vmatpush1.bf16.msra.mxu0 %v3510
    %4283 = vmatprep.subr.bf16.mxu0 0
    %4284 = vmatpush2.bf16.msra.mxu0 0
    %4285 = vmatprep.subr.bf16.mxu0 0
    %4286 = vmatpush2.bf16.msra.mxu0 0
    %4287 = vmatprep.subr.bf16.mxu0 0
    %4288 = vmatpush2.bf16.msra.mxu0 0
    %4289 = vmatprep.subr.bf16.mxu0 0
    %4290 = vmatpush2.bf16.msra.mxu0 0
    %4291 = vmatprep.subr.bf16.mxu0 0
    %4292 = vmatpush2.bf16.msra.mxu0 0
    %4293 = vmatprep.subr.bf16.mxu0 0
    %4294 = vmatpush2.bf16.msra.mxu0 0
    %4295 = vmatprep.subr.bf16.mxu0 0
    %4296 = vmatpush2.bf16.msra.mxu0 0
    %4297 = vmatprep.subr.bf16.mxu0 0
    %4298 = vmatpush2.bf16.msra.mxu0 0
    %4299 = vmatprep.mubr.bf16.mxu0 0
    %4300 = vmatmul.mubr.bf16.gmra.mxu0 %v4225
    %v4301 = vpop.f32.mrf.mxu0
    %v4302 = vadd.f32 0.0, %v4301
    %v4303 = vpop.f32.mrf.mxu0
    %v4304 = vadd.f32 0.0, %v4303
    %v4305 = vpop.f32.mrf.mxu0
    %v4306 = vpop.f32.mrf.mxu0
    %4307 = vdwg.mxu0
    %v4308 = vadd.f32 %v4221, %v4261
    %v4309 = vadd.f32 %v4222, %v4263
    %v4310 = vadd.f32 %v4223, %v4302
    %v4311 = vadd.f32 %v4224, %v4304
    %v4312 = vmul.f32 %v4308, 0.5
    %v4313 = vtanh.pop %v4312
    %v4314 = vmul.f32 %v4313, 0.5
    %v4315 = vadd.f32 %v4314, 0.5
    %v4316 = vmul.f32 %v4309, 0.5
    %v4317 = vtanh.pop %v4316
    %v4318 = vmul.f32 %v4317, 0.5
    %v4319 = vadd.f32 %v4318, 0.5
    %v4320 = vtanh.pop %v4310
    %v4321 = vmul.f32 %v4311, 0.5
    %v4322 = vtanh.pop %v4321
    %v4323 = vmul.f32 %v4322, 0.5
    %v4324 = vadd.f32 %v4323, 0.5
    %v4325 = vmul.f32 %v4319, %v4218
    %v4326 = vmul.f32 %v4315, %v4320
    %v4327 = vadd.f32 %v4325, %v4326
    %v4328 = vtanh.pop %v4327
    %v4329 = vmul.f32 %v4324, %v4328
    %v4330 = vld [vmem:[%s1385] sm:$0xff]
    %v4331 = vld [vmem:[%s1385 + $0x8] sm:$0xff]
    %v4332 = vld [vmem:[%s1385 + $0x10] sm:$0xff]
    %v4333 = vld [vmem:[%s1385 + $0x18] sm:$0xff]
    %v4334 = vpack.c.bf16 %v4329, %v4329
    %4335 = vmatprep.subr.bf16.mxu0 %v3537
    %4336 = vmatpush1.bf16.msra.mxu0 %v3536
    %4337 = vmatprep.subr.bf16.mxu0 %v3533
    %4338 = vmatpush1.bf16.msra.mxu0 %v3532
    %4339 = vmatprep.subr.bf16.mxu0 %v3529
    %4340 = vmatpush1.bf16.msra.mxu0 %v3528
    %4341 = vmatprep.subr.bf16.mxu0 %v3525
    %4342 = vmatpush1.bf16.msra.mxu0 %v3524
    %4343 = vmatprep.subr.bf16.mxu0 %v3521
    %4344 = vmatpush1.bf16.msra.mxu0 %v3520
    %4345 = vmatprep.subr.bf16.mxu0 %v3517
    %4346 = vmatpush1.bf16.msra.mxu0 %v3516
    %4347 = vmatprep.subr.bf16.mxu0 %v3513
    %4348 = vmatpush1.bf16.msra.mxu0 %v3512
    %4349 = vmatprep.subr.bf16.mxu0 %v3509
    %4350 = vmatpush1.bf16.msra.mxu0 %v3508
    %4351 = vmatprep.subr.bf16.mxu0 0
    %4352 = vmatpush2.bf16.msra.mxu0 0
    %4353 = vmatprep.subr.bf16.mxu0 0
    %4354 = vmatpush2.bf16.msra.mxu0 0
    %4355 = vmatprep.subr.bf16.mxu0 0
    %4356 = vmatpush2.bf16.msra.mxu0 0
    %4357 = vmatprep.subr.bf16.mxu0 0
    %4358 = vmatpush2.bf16.msra.mxu0 0
    %4359 = vmatprep.subr.bf16.mxu0 0
    %4360 = vmatpush2.bf16.msra.mxu0 0
    %4361 = vmatprep.subr.bf16.mxu0 0
    %4362 = vmatpush2.bf16.msra.mxu0 0
    %4363 = vmatprep.subr.bf16.mxu0 0
    %4364 = vmatpush2.bf16.msra.mxu0 0
    %4365 = vmatprep.subr.bf16.mxu0 0
    %4366 = vmatpush2.bf16.msra.mxu0 0
    %4367 = vmatprep.mubr.bf16.mxu0 0
    %4368 = vmatmul.mubr.bf16.gmra.mxu0 %v4334
    %v4369 = vpop.f32.mrf.mxu0
    %v4370 = vadd.f32 0.0, %v4369
    %v4371 = vpop.f32.mrf.mxu0
    %v4372 = vadd.f32 0.0, %v4371
    %v4373 = vpop.f32.mrf.mxu0
    %v4374 = vpop.f32.mrf.mxu0
    %4375 = vdwg.mxu0
    %4376 = vmatprep.subr.bf16.mxu0 %v3539
    %4377 = vmatpush1.bf16.msra.mxu0 %v3538
    %4378 = vmatprep.subr.bf16.mxu0 %v3535
    %4379 = vmatpush1.bf16.msra.mxu0 %v3534
    %4380 = vmatprep.subr.bf16.mxu0 %v3531
    %4381 = vmatpush1.bf16.msra.mxu0 %v3530
    %4382 = vmatprep.subr.bf16.mxu0 %v3527
    %4383 = vmatpush1.bf16.msra.mxu0 %v3526
    %4384 = vmatprep.subr.bf16.mxu0 %v3523
    %4385 = vmatpush1.bf16.msra.mxu0 %v3522
    %4386 = vmatprep.subr.bf16.mxu0 %v3519
    %4387 = vmatpush1.bf16.msra.mxu0 %v3518
    %4388 = vmatprep.subr.bf16.mxu0 %v3515
    %4389 = vmatpush1.bf16.msra.mxu0 %v3514
    %4390 = vmatprep.subr.bf16.mxu0 %v3511
    %4391 = vmatpush1.bf16.msra.mxu0 %v3510
    %4392 = vmatprep.subr.bf16.mxu0 0
    %4393 = vmatpush2.bf16.msra.mxu0 0
    %4394 = vmatprep.subr.bf16.mxu0 0
    %4395 = vmatpush2.bf16.msra.mxu0 0
    %4396 = vmatprep.subr.bf16.mxu0 0
    %4397 = vmatpush2.bf16.msra.mxu0 0
    %4398 = vmatprep.subr.bf16.mxu0 0
    %4399 = vmatpush2.bf16.msra.mxu0 0
    %4400 = vmatprep.subr.bf16.mxu0 0
    %4401 = vmatpush2.bf16.msra.mxu0 0
    %4402 = vmatprep.subr.bf16.mxu0 0
    %4403 = vmatpush2.bf16.msra.mxu0 0
    %4404 = vmatprep.subr.bf16.mxu0 0
    %4405 = vmatpush2.bf16.msra.mxu0 0
    %4406 = vmatprep.subr.bf16.mxu0 0
    %4407 = vmatpush2.bf16.msra.mxu0 0
    %4408 = vmatprep.mubr.bf16.mxu0 0
    %4409 = vmatmul.mubr.bf16.gmra.mxu0 %v4334
    %v4410 = vpop.f32.mrf.mxu0
    %v4411 = vadd.f32 0.0, %v4410
    %v4412 = vpop.f32.mrf.mxu0
    %v4413 = vadd.f32 0.0, %v4412
    %v4414 = vpop.f32.mrf.mxu0
    %v4415 = vpop.f32.mrf.mxu0
    %4416 = vdwg.mxu0
    %v4417 = vadd.f32 %v4330, %v4370
    %v4418 = vadd.f32 %v4331, %v4372
    %v4419 = vadd.f32 %v4332, %v4411
    %v4420 = vadd.f32 %v4333, %v4413
    %v4421 = vmul.f32 %v4417, 0.5
    %v4422 = vtanh.pop %v4421
    %v4423 = vmul.f32 %v4422, 0.5
    %v4424 = vadd.f32 %v4423, 0.5
    %v4425 = vmul.f32 %v4418, 0.5
    %v4426 = vtanh.pop %v4425
    %v4427 = vmul.f32 %v4426, 0.5
    %v4428 = vadd.f32 %v4427, 0.5
    %v4429 = vtanh.pop %v4419
    %v4430 = vmul.f32 %v4420, 0.5
    %v4431 = vtanh.pop %v4430
    %v4432 = vmul.f32 %v4431, 0.5
    %v4433 = vadd.f32 %v4432, 0.5
    %v4434 = vmul.f32 %v4428, %v4327
    %v4435 = vmul.f32 %v4424, %v4429
    %v4436 = vadd.f32 %v4434, %v4435
    %v4437 = vtanh.pop %v4436
    %v4438 = vmul.f32 %v4433, %v4437
    %v4439 = vpack.c.bf16 %v4438, %v4438
    %v4440 = vld [vmem:[%s10] sm:$0xf]
    %v4441 = vld [vmem:[%s10 + $0x4] sm:$0xf]
    %v4442 = vld [vmem:[%s10 + $0x8] sm:$0xf]
    %v4443 = vld [vmem:[%s10 + $0xc] sm:$0xf]
    %v4444 = vld [vmem:[%s10 + $0x10] sm:$0xf]
    %v4445 = vld [vmem:[%s10 + $0x14] sm:$0xf]
    %v4446 = vld [vmem:[%s10 + $0x18] sm:$0xf]
    %v4447 = vld [vmem:[%s10 + $0x1c] sm:$0xf]
    %v4448 = vld [vmem:[%s10 + $0x20] sm:$0xf]
    %v4449 = vld [vmem:[%s10 + $0x24] sm:$0xf]
    %v4450 = vld [vmem:[%s10 + $0x28] sm:$0xf]
    %v4451 = vld [vmem:[%s10 + $0x2c] sm:$0xf]
    %v4452 = vld [vmem:[%s10 + $0x30] sm:$0xf]
    %v4453 = vld [vmem:[%s10 + $0x34] sm:$0xf]
    %v4454 = vld [vmem:[%s10 + $0x38] sm:$0xf]
    %v4455 = vld [vmem:[%s10 + $0x3c] sm:$0xf]
    %v4456 = vld [vmem:[%s11] sm:$0x1]
    %v4458 = vlaneseq
    %v4459 = vshrl.u32 %v4458, 7
    %v4460 = vsub.s32 0, %v4459
    %v4461 = vrot.slane %v4456, %v4460
    %v4479 = vunpack.c.l.b16 %v4440
    %v4480 = vunpack.c.l.b16 %v4441
    %v4481 = vunpack.c.l.b16 %v4442
    %v4482 = vunpack.c.l.b16 %v4443
    %v4483 = vunpack.c.l.b16 %v4444
    %v4484 = vunpack.c.l.b16 %v4445
    %v4485 = vunpack.c.l.b16 %v4446
    %v4486 = vunpack.c.l.b16 %v4447
    %v4487 = vunpack.c.l.b16 %v4448
    %v4488 = vunpack.c.l.b16 %v4449
    %v4489 = vunpack.c.l.b16 %v4450
    %v4490 = vunpack.c.l.b16 %v4451
    %v4491 = vunpack.c.l.b16 %v4452
    %v4492 = vunpack.c.l.b16 %v4453
    %v4493 = vunpack.c.l.b16 %v4454
    %v4494 = vunpack.c.l.b16 %v4455
    %v4495 = vpack.c.b16 %v4480, %v4479
    %v4496 = vpack.c.b16 %v4482, %v4481
    %v4497 = vpack.c.b16 %v4484, %v4483
    %v4498 = vpack.c.b16 %v4486, %v4485
    %v4499 = vpack.c.b16 %v4488, %v4487
    %v4500 = vpack.c.b16 %v4490, %v4489
    %v4501 = vpack.c.b16 %v4492, %v4491
    %v4502 = vpack.c.b16 %v4494, %v4493
    %4511 = vmatprep.subr.bf16.mxu0 0
    %4512 = vmatpush1.bf16.msra.mxu0 %v4502
    %4513 = vmatprep.subr.bf16.mxu0 0
    %4514 = vmatpush1.bf16.msra.mxu0 %v4501
    %4515 = vmatprep.subr.bf16.mxu0 0
    %4516 = vmatpush1.bf16.msra.mxu0 %v4500
    %4517 = vmatprep.subr.bf16.mxu0 0
    %4518 = vmatpush1.bf16.msra.mxu0 %v4499
    %4519 = vmatprep.subr.bf16.mxu0 0
    %4520 = vmatpush1.bf16.msra.mxu0 %v4498
    %4521 = vmatprep.subr.bf16.mxu0 0
    %4522 = vmatpush1.bf16.msra.mxu0 %v4497
    %4523 = vmatprep.subr.bf16.mxu0 0
    %4524 = vmatpush1.bf16.msra.mxu0 %v4496
    %4525 = vmatprep.subr.bf16.mxu0 0
    %4526 = vmatpush1.bf16.msra.mxu0 %v4495
    %4527 = vmatprep.subr.bf16.mxu0 0
    %4528 = vmatpush2.bf16.msra.mxu0 0
    %4529 = vmatprep.subr.bf16.mxu0 0
    %4530 = vmatpush2.bf16.msra.mxu0 0
    %4531 = vmatprep.subr.bf16.mxu0 0
    %4532 = vmatpush2.bf16.msra.mxu0 0
    %4533 = vmatprep.subr.bf16.mxu0 0
    %4534 = vmatpush2.bf16.msra.mxu0 0
    %4535 = vmatprep.subr.bf16.mxu0 0
    %4536 = vmatpush2.bf16.msra.mxu0 0
    %4537 = vmatprep.subr.bf16.mxu0 0
    %4538 = vmatpush2.bf16.msra.mxu0 0
    %4539 = vmatprep.subr.bf16.mxu0 0
    %4540 = vmatpush2.bf16.msra.mxu0 0
    %4541 = vmatprep.subr.bf16.mxu0 0
    %4542 = vmatpush2.bf16.msra.mxu0 0
    %4543 = vmatprep.mubr.bf16.mxu0 0
    %4544 = vmatmul.mubr.bf16.gmra.mxu0 %v4439
    %v4545 = vpop.f32.mrf.mxu0
    %v4546 = vadd.f32 %v4461, %v4545
    %v4547 = vpop.f32.mrf.mxu0
    %v4548 = vpop.f32.mrf.mxu0
    %v4549 = vpop.f32.mrf.mxu0
    %4550 = vdwg.mxu0
    %4551 = vst [vmem:[#allocation18] sm:$0xff] %v4546
    // Predicated region
    $region82: #{tpu_custom_call.1} parent=1 // pred_check
      _
    $region83: #{tpu_custom_call.1} parent=1 // pred_check_branch
      %4553 = sbr.rel (0) target = $region85
    $region84: #{tpu_custom_call.1} parent=1 // pred_region
      %s4555 = ssub.s32 128, 128
      %4556 = vsyncadd [#allocation6], %s4555
      %s4558 = sshll.u32 [#allocation18], 4
      %s4559 = int_to_ptr.vmem [resolvable:$true] %s4558
      %4561 = dma.vmem_to_hbm [thread:$0]  %s4559, 128, %s12, [#allocation6]
    $region85: #{tpu_custom_call.1} parent=1 // pred_fallthru
      _
    // Predicated region
    $region86: #{tpu_custom_call.1} parent=1 // pred_check
      _
    $region87: #{tpu_custom_call.1} parent=1 // pred_check_branch
      %4563 = sbr.rel (0) target = $region89
    $region88: #{tpu_custom_call.1} parent=1 // pred_region
      %4564 = dma.done [#allocation6], 128
    $region89: #{tpu_custom_call.1} parent=1 // pred_fallthru
      _
    %4565 = vsyncpa [#allocation5], 1
    %4566 = vsyncpa [#allocation8], 1
    %4567 = vsyncpa [#allocation11], 1
    %4568 = vsyncpa [#allocation14], 1
    %4569 = vsyncpa [#allocation17], 1
    %4570 = vsyncpa [#allocation6], 1

</llo_original>
